<compile_context>
chip_gen: v6e
topology: v6e:2x2x1
jax: 0.10.0
libtpu: 0.0.40
codegen_flags: <defaults>
</compile_context>

<pallas_src>
import jax
import jax.numpy as jnp
from jax import lax
from jax.experimental import pallas as pl
from jax.experimental.pallas import tpu as pltpu

HIDDEN_DIM = 32
INPUT_DIM = 6
NUM_LAYERS = 2
OUTPUT_DIM = 1
BATCH_BLOCK = 8          # f32 sublane width; batch is padded to a multiple of this


def _lstm_kernel(x_ref,                          # (T*BB, D) rows ordered t*BB + j
                 wih0_ref, whh0_ref, b0_ref,     # layer-0 weights (pre-transposed)
                 wih1_ref, whh1_ref, b1_ref,     # layer-1 weights (pre-transposed)
                 fcw_ref, fcb_ref,               # final linear (pre-transposed)
                 out_ref,                        # (BB, OUTPUT_DIM)
                 xg_ref):                        # VMEM scratch (T*BB, 4H)
    H = HIDDEN_DIM
    BB = out_ref.shape[0]
    T = x_ref.shape[0] // BB

    # ---- hoisted layer-0 input projection: one matmul for ALL timesteps ----
    xg_ref[...] = (jnp.dot(x_ref[...], wih0_ref[...],
                           preferred_element_type=jnp.float32)
                   + b0_ref[...])

    # Hoist weight loads / bias broadcast out of the time loop.
    whh0 = whh0_ref[...]
    wih1 = wih1_ref[...]
    whh1 = whh1_ref[...]
    b1 = jnp.broadcast_to(b1_ref[...], (BB, 4 * H))

    def split_gates(g):                          # PyTorch gate order: i, f, g, o
        i = jax.nn.sigmoid(g[:, 0 * H:1 * H])
        f = jax.nn.sigmoid(g[:, 1 * H:2 * H])
        c = jnp.tanh(g[:, 2 * H:3 * H])
        o = jax.nn.sigmoid(g[:, 3 * H:4 * H])
        return i, f, c, o

    def step(t, carry):
        h1, c1, h2, c2 = carry
        row = pl.multiple_of(t * BB, BB)
        # Both matmuls below depend only on PREVIOUS-step state, so they are
        # issued back-to-back and overlap on the MXU; only h1_new @ Wih1 stays
        # on the layer-0 -> layer-1 critical path.
        g0 = xg_ref[pl.ds(row, BB), :] + jnp.dot(
            h1, whh0, preferred_element_type=jnp.float32)
        gh2 = jnp.dot(h2, whh1, preferred_element_type=jnp.float32) + b1

        i0, f0, gg0, o0 = split_gates(g0)
        c1 = f0 * c1 + i0 * gg0
        h1 = o0 * jnp.tanh(c1)

        g1 = gh2 + jnp.dot(h1, wih1, preferred_element_type=jnp.float32)
        i1, f1, gg1, o1 = split_gates(g1)
        c2 = f1 * c2 + i1 * gg1
        h2 = o1 * jnp.tanh(c2)
        return (h1, c1, h2, c2)

    z = jnp.zeros((BB, H), jnp.float32)
    _, _, h2, _ = lax.fori_loop(0, T, step, (z, z, z, z), unroll=True)

    # Final linear layer: computed exactly once, after the recurrence.
    out_ref[...] = (jnp.dot(h2, fcw_ref[...],
                            preferred_element_type=jnp.float32)
                    + fcb_ref[...])


def lstm_forward(x, params):
    """x: (B, T, INPUT_DIM) float32 -> (B, OUTPUT_DIM) float32."""
    B, T, D = x.shape
    H = HIDDEN_DIM
    BB = BATCH_BLOCK

    (wih0, whh0, b0, wih1, whh1, b1, fcw, fcb) = params

    # ---- wrapper-side layout plumbing (one-time, outside the hot kernel) ----
    B_pad = ((B + BB - 1) // BB) * BB
    nb = B_pad // BB
    x_p = jnp.pad(x, ((0, B_pad - B), (0, 0), (0, 0)))        # (B_pad, T, D)
    x_p = x_p.reshape(nb, BB, T, D).transpose(0, 2, 1, 3)      # (nb, T, BB, D)
    x_flat = x_p.reshape(nb * T * BB, D)                       # row = (b*T+t)*BB + j

    # Pre-transpose weights once so the kernel does plain (M,K)x(K,N) matmuls.
    wih0_t = wih0.T      # (D, 4H)
    whh0_t = whh0.T      # (H, 4H)
    wih1_t = wih1.T      # (H, 4H)
    whh1_t = whh1.T      # (H, 4H)
    fcw_t = fcw.T        # (H, OUTPUT_DIM)

    grid_spec = pltpu.PrefetchScalarGridSpec(
        num_scalar_prefetch=0,
        grid=(nb,),                                        # parallel batch blocks
        in_specs=[
            pl.BlockSpec((T * BB, D), lambda b: (b, 0)),       # x rows for block b
            pl.BlockSpec((D, 4 * H), lambda b: (0, 0)),        # W_ih_l0^T
            pl.BlockSpec((H, 4 * H), lambda b: (0, 0)),        # W_hh_l0^T
            pl.BlockSpec((1, 4 * H), lambda b: (0, 0)),        # b_l0 (ih+hh)
            pl.BlockSpec((H, 4 * H), lambda b: (0, 0)),        # W_ih_l1^T
            pl.BlockSpec((H, 4 * H), lambda b: (0, 0)),        # W_hh_l1^T
            pl.BlockSpec((1, 4 * H), lambda b: (0, 0)),        # b_l1 (ih+hh)
            pl.BlockSpec((H, OUTPUT_DIM), lambda b: (0, 0)),   # fc weight^T
            pl.BlockSpec((1, OUTPUT_DIM), lambda b: (0, 0)),   # fc bias
        ],
        out_specs=pl.BlockSpec((BB, OUTPUT_DIM), lambda b: (b, 0)),
        scratch_shapes=[pltpu.VMEM((T * BB, 4 * H), jnp.float32)],
    )

    out_pad = pl.pallas_call(
        _lstm_kernel,
        out_shape=jax.ShapeDtypeStruct((B_pad, OUTPUT_DIM), jnp.float32),
        grid_spec=grid_spec,
        compiler_params=pltpu.CompilerParams(
            dimension_semantics=("parallel",)),
    )(x_flat, wih0_t, whh0_t, b0, wih1_t, whh1_t, b1, fcw_t, fcb)

    return out_pad[:B]


def init_params(key):
    """Deterministic PyTorch-style uniform(-1/sqrt(H), 1/sqrt(H)) init."""
    H, D = HIDDEN_DIM, INPUT_DIM
    k = 1.0 / jnp.sqrt(jnp.float32(H))
    ks = jax.random.split(key, 10)
    u = lambda kk, shape: jax.random.uniform(kk, shape, jnp.float32, -k, k)

    wih0 = u(ks[0], (4 * H, D))
    whh0 = u(ks[1], (4 * H, H))
    b0 = u(ks[2], (1, 4 * H)) + u(ks[3], (1, 4 * H))   # b_ih + b_hh folded
    wih1 = u(ks[4], (4 * H, H))
    whh1 = u(ks[5], (4 * H, H))
    b1 = u(ks[6], (1, 4 * H)) + u(ks[7], (1, 4 * H))
    fcw = u(ks[8], (OUTPUT_DIM, H))
    fcb = u(ks[9], (1, OUTPUT_DIM))
    return (wih0, whh0, b0, wih1, whh1, b1, fcw, fcb)


def lstm_reference(x, params):
    """Pure-JAX reference of the PyTorch forward (for correctness check)."""
    (wih0, whh0, b0, wih1, whh1, b1, fcw, fcb) = params
    B, T, D = x.shape
    H = HIDDEN_DIM

    def cell(xt, h, c, wih, whh, b):
        gates = xt @ wih.T + h @ whh.T + b
        i = jax.nn.sigmoid(gates[:, 0 * H:1 * H])
        f = jax.nn.sigmoid(gates[:, 1 * H:2 * H])
        g = jnp.tanh(gates[:, 2 * H:3 * H])
        o = jax.nn.sigmoid(gates[:, 3 * H:4 * H])
        c_new = f * c + i * g
        h_new = o * jnp.tanh(c_new)
        return h_new, c_new

    def step(carry, xt):
        h1, c1, h2, c2 = carry
        h1, c1 = cell(xt, h1, c1, wih0, whh0, b0)
        h2, c2 = cell(h1, h2, c2, wih1, whh1, b1)
        return (h1, c1, h2, c2), None

    z = jnp.zeros((B, H), jnp.float32)
    (h1, c1, h2, c2), _ = jax.lax.scan(step, (z, z, z, z),
                                       jnp.transpose(x, (1, 0, 2)))
    return h2 @ fcw.T + fcb


if __name__ == "__main__":
    key = jax.random.PRNGKey(0)
    k_x, k_p = jax.random.split(key)

    B, T = 2, 8
    x = jax.random.normal(k_x, (B, T, INPUT_DIM), jnp.float32)
    params = init_params(k_p)

    out = lstm_forward(x, params)
    out = jax.block_until_ready(out)

    ref = lstm_reference(x, params)
    assert out.shape == (B, OUTPUT_DIM)
    assert bool(jnp.all(jnp.isfinite(out)))
    assert bool(jnp.allclose(out, ref, atol=1e-2, rtol=1e-2)), (out, ref)

    print("KERNEL_OK")
</pallas_src>

<mosaic_0001>
module attributes {stable_mosaic.version = 11 : i64} {
  func.func @_lstm_kernel(%arg0: i32, %arg1: memref<64x6xf32, #tpu.memory_space<vmem>>, %arg2: memref<6x128xf32, #tpu.memory_space<vmem>>, %arg3: memref<32x128xf32, #tpu.memory_space<vmem>>, %arg4: memref<1x128xf32, #tpu.memory_space<vmem>>, %arg5: memref<32x128xf32, #tpu.memory_space<vmem>>, %arg6: memref<32x128xf32, #tpu.memory_space<vmem>>, %arg7: memref<1x128xf32, #tpu.memory_space<vmem>>, %arg8: memref<32x1xf32, #tpu.memory_space<vmem>>, %arg9: memref<1x1xf32, #tpu.memory_space<vmem>>, %arg10: memref<8x1xf32, #tpu.memory_space<vmem>>, %arg11: memref<64x128xf32, #tpu.memory_space<vmem>>) attributes {dimension_semantics = [#tpu.dimension_semantics<parallel>], iteration_bounds = array<i64: 1>, scalar_prefetch = 0 : i64, scratch_operands = 1 : i64, tpu.core_type = #tpu.core_type<tc>, window_params = [{transform_indices = @transform_0, window_bounds = array<i64: 64, 6>}, {pipeline_mode = #tpu.pipeline_mode<synchronous>, transform_indices = @transform_1, window_bounds = array<i64: 6, 128>}, {pipeline_mode = #tpu.pipeline_mode<synchronous>, transform_indices = @transform_2, window_bounds = array<i64: 32, 128>}, {pipeline_mode = #tpu.pipeline_mode<synchronous>, transform_indices = @transform_3, window_bounds = array<i64: 1, 128>}, {pipeline_mode = #tpu.pipeline_mode<synchronous>, transform_indices = @transform_4, window_bounds = array<i64: 32, 128>}, {pipeline_mode = #tpu.pipeline_mode<synchronous>, transform_indices = @transform_5, window_bounds = array<i64: 32, 128>}, {pipeline_mode = #tpu.pipeline_mode<synchronous>, transform_indices = @transform_6, window_bounds = array<i64: 1, 128>}, {pipeline_mode = #tpu.pipeline_mode<synchronous>, transform_indices = @transform_7, window_bounds = array<i64: 32, 1>}, {pipeline_mode = #tpu.pipeline_mode<synchronous>, transform_indices = @transform_8, window_bounds = array<i64: 1, 1>}, {transform_indices = @transform_9, window_bounds = array<i64: 8, 1>}]} {
    %c0 = arith.constant 0 : index
    %c0_0 = arith.constant 0 : index
    %0 = vector.load %arg1[%c0, %c0_0] : memref<64x6xf32, #tpu.memory_space<vmem>>, vector<64x6xf32>
    %c0_1 = arith.constant 0 : index
    %c0_2 = arith.constant 0 : index
    %1 = vector.load %arg2[%c0_1, %c0_2] : memref<6x128xf32, #tpu.memory_space<vmem>>, vector<6x128xf32>
    %cst = arith.constant dense<0.000000e+00> : vector<64x128xf32>
    %2 = tpu.matmul %0, %1, %cst {dimension_numbers = #tpu.dot_dimension_numbers<[1], [0], [0], [1], [0, 0, 1, 1], [], []>} : vector<64x6xf32>, vector<6x128xf32>, vector<64x128xf32> -> vector<64x128xf32>
    %c0_3 = arith.constant 0 : index
    %c0_4 = arith.constant 0 : index
    %3 = vector.load %arg4[%c0_3, %c0_4] : memref<1x128xf32, #tpu.memory_space<vmem>>, vector<1x128xf32>
    %4 = vector.broadcast %3 : vector<1x128xf32> to vector<64x128xf32>
    %5 = arith.addf %2, %4 : vector<64x128xf32>
    %c0_5 = arith.constant 0 : index
    %c0_6 = arith.constant 0 : index
    %6 = vector.load %arg11[%c0_5, %c0_6] : memref<64x128xf32, #tpu.memory_space<vmem>>, vector<64x128xf32>
    tpu.vector_store %arg11[%c0_5, %c0_6], %5 {strides = array<i32>} : memref<64x128xf32, #tpu.memory_space<vmem>>, vector<64x128xf32>,
    %c0_7 = arith.constant 0 : index
    %c0_8 = arith.constant 0 : index
    %7 = vector.load %arg3[%c0_7, %c0_8] : memref<32x128xf32, #tpu.memory_space<vmem>>, vector<32x128xf32>
    %c0_9 = arith.constant 0 : index
    %c0_10 = arith.constant 0 : index
    %8 = vector.load %arg5[%c0_9, %c0_10] : memref<32x128xf32, #tpu.memory_space<vmem>>, vector<32x128xf32>
    %c0_11 = arith.constant 0 : index
    %c0_12 = arith.constant 0 : index
    %9 = vector.load %arg6[%c0_11, %c0_12] : memref<32x128xf32, #tpu.memory_space<vmem>>, vector<32x128xf32>
    %c0_13 = arith.constant 0 : index
    %c0_14 = arith.constant 0 : index
    %10 = vector.load %arg7[%c0_13, %c0_14] : memref<1x128xf32, #tpu.memory_space<vmem>>, vector<1x128xf32>
    %11 = vector.shape_cast %10 : vector<1x128xf32> to vector<1x128xf32>
    %12 = vector.broadcast %11 : vector<1x128xf32> to vector<8x128xf32>
    %cst_15 = arith.constant 0.000000e+00 : f32
    %13 = vector.broadcast %cst_15 : f32 to vector<8x32xf32>
    %c0_i32 = arith.constant 0 : i32
    %c8_i32 = arith.constant 8 : i32
    %14 = arith.muli %c0_i32, %c8_i32 : i32
    %15 = tpu.assume_multiple %14, 8 : i32
    %16 = arith.index_cast %15 : i32 to index
    %c0_16 = arith.constant 0 : index
    %17 = vector.load %arg11[%16, %c0_16] : memref<64x128xf32, #tpu.memory_space<vmem>>, vector<8x128xf32>
    %cst_17 = arith.constant dense<0.000000e+00> : vector<8x128xf32>
    %18 = tpu.matmul %13, %7, %cst_17 {dimension_numbers = #tpu.dot_dimension_numbers<[1], [0], [0], [1], [0, 0, 1, 1], [], []>} : vector<8x32xf32>, vector<32x128xf32>, vector<8x128xf32> -> vector<8x128xf32>
    %19 = arith.addf %17, %18 : vector<8x128xf32>
    %cst_18 = arith.constant dense<0.000000e+00> : vector<8x128xf32>
    %20 = tpu.matmul %13, %9, %cst_18 {dimension_numbers = #tpu.dot_dimension_numbers<[1], [0], [0], [1], [0, 0, 1, 1], [], []>} : vector<8x32xf32>, vector<32x128xf32>, vector<8x128xf32> -> vector<8x128xf32>
    %21 = arith.addf %20, %12 : vector<8x128xf32>
    %22 = vector.extract_strided_slice %19 {offsets = [0, 0], sizes = [8, 32], strides = [1, 1]} : vector<8x128xf32> to vector<8x32xf32>
    %23 = arith.negf %22 : vector<8x32xf32>
    %24 = math.exp %23 : vector<8x32xf32>
    %cst_19 = arith.constant 1.000000e+00 : f32
    %25 = vector.broadcast %cst_19 : f32 to vector<8x32xf32>
    %26 = arith.addf %25, %24 : vector<8x32xf32>
    %27 = arith.divf %25, %26 : vector<8x32xf32>
    %28 = vector.extract_strided_slice %19 {offsets = [0, 32], sizes = [8, 32], strides = [1, 1]} : vector<8x128xf32> to vector<8x32xf32>
    %29 = arith.negf %28 : vector<8x32xf32>
    %30 = math.exp %29 : vector<8x32xf32>
    %cst_20 = arith.constant 1.000000e+00 : f32
    %31 = vector.broadcast %cst_20 : f32 to vector<8x32xf32>
    %32 = arith.addf %31, %30 : vector<8x32xf32>
    %33 = arith.divf %31, %32 : vector<8x32xf32>
    %34 = vector.extract_strided_slice %19 {offsets = [0, 64], sizes = [8, 32], strides = [1, 1]} : vector<8x128xf32> to vector<8x32xf32>
    %35 = math.tanh %34 : vector<8x32xf32>
    %36 = vector.extract_strided_slice %19 {offsets = [0, 96], sizes = [8, 32], strides = [1, 1]} : vector<8x128xf32> to vector<8x32xf32>
    %37 = arith.negf %36 : vector<8x32xf32>
    %38 = math.exp %37 : vector<8x32xf32>
    %cst_21 = arith.constant 1.000000e+00 : f32
    %39 = vector.broadcast %cst_21 : f32 to vector<8x32xf32>
    %40 = arith.addf %39, %38 : vector<8x32xf32>
    %41 = arith.divf %39, %40 : vector<8x32xf32>
    %42 = arith.mulf %33, %13 : vector<8x32xf32>
    %43 = arith.mulf %27, %35 : vector<8x32xf32>
    %44 = arith.addf %42, %43 : vector<8x32xf32>
    %45 = math.tanh %44 : vector<8x32xf32>
    %46 = arith.mulf %41, %45 : vector<8x32xf32>
    %cst_22 = arith.constant dense<0.000000e+00> : vector<8x128xf32>
    %47 = tpu.matmul %46, %8, %cst_22 {dimension_numbers = #tpu.dot_dimension_numbers<[1], [0], [0], [1], [0, 0, 1, 1], [], []>} : vector<8x32xf32>, vector<32x128xf32>, vector<8x128xf32> -> vector<8x128xf32>
    %48 = arith.addf %21, %47 : vector<8x128xf32>
    %49 = vector.extract_strided_slice %48 {offsets = [0, 0], sizes = [8, 32], strides = [1, 1]} : vector<8x128xf32> to vector<8x32xf32>
    %50 = arith.negf %49 : vector<8x32xf32>
    %51 = math.exp %50 : vector<8x32xf32>
    %cst_23 = arith.constant 1.000000e+00 : f32
    %52 = vector.broadcast %cst_23 : f32 to vector<8x32xf32>
    %53 = arith.addf %52, %51 : vector<8x32xf32>
    %54 = arith.divf %52, %53 : vector<8x32xf32>
    %55 = vector.extract_strided_slice %48 {offsets = [0, 32], sizes = [8, 32], strides = [1, 1]} : vector<8x128xf32> to vector<8x32xf32>
    %56 = arith.negf %55 : vector<8x32xf32>
    %57 = math.exp %56 : vector<8x32xf32>
    %cst_24 = arith.constant 1.000000e+00 : f32
    %58 = vector.broadcast %cst_24 : f32 to vector<8x32xf32>
    %59 = arith.addf %58, %57 : vector<8x32xf32>
    %60 = arith.divf %58, %59 : vector<8x32xf32>
    %61 = vector.extract_strided_slice %48 {offsets = [0, 64], sizes = [8, 32], strides = [1, 1]} : vector<8x128xf32> to vector<8x32xf32>
    %62 = math.tanh %61 : vector<8x32xf32>
    %63 = vector.extract_strided_slice %48 {offsets = [0, 96], sizes = [8, 32], strides = [1, 1]} : vector<8x128xf32> to vector<8x32xf32>
    %64 = arith.negf %63 : vector<8x32xf32>
    %65 = math.exp %64 : vector<8x32xf32>
    %cst_25 = arith.constant 1.000000e+00 : f32
    %66 = vector.broadcast %cst_25 : f32 to vector<8x32xf32>
    %67 = arith.addf %66, %65 : vector<8x32xf32>
    %68 = arith.divf %66, %67 : vector<8x32xf32>
    %69 = arith.mulf %60, %13 : vector<8x32xf32>
    %70 = arith.mulf %54, %62 : vector<8x32xf32>
    %71 = arith.addf %69, %70 : vector<8x32xf32>
    %72 = math.tanh %71 : vector<8x32xf32>
    %73 = arith.mulf %68, %72 : vector<8x32xf32>
    %c1_i32 = arith.constant 1 : i32
    %c8_i32_26 = arith.constant 8 : i32
    %74 = arith.muli %c1_i32, %c8_i32_26 : i32
    %75 = tpu.assume_multiple %74, 8 : i32
    %76 = arith.index_cast %75 : i32 to index
    %c0_27 = arith.constant 0 : index
    %77 = vector.load %arg11[%76, %c0_27] : memref<64x128xf32, #tpu.memory_space<vmem>>, vector<8x128xf32>
    %cst_28 = arith.constant dense<0.000000e+00> : vector<8x128xf32>
    %78 = tpu.matmul %46, %7, %cst_28 {dimension_numbers = #tpu.dot_dimension_numbers<[1], [0], [0], [1], [0, 0, 1, 1], [], []>} : vector<8x32xf32>, vector<32x128xf32>, vector<8x128xf32> -> vector<8x128xf32>
    %79 = arith.addf %77, %78 : vector<8x128xf32>
    %cst_29 = arith.constant dense<0.000000e+00> : vector<8x128xf32>
    %80 = tpu.matmul %73, %9, %cst_29 {dimension_numbers = #tpu.dot_dimension_numbers<[1], [0], [0], [1], [0, 0, 1, 1], [], []>} : vector<8x32xf32>, vector<32x128xf32>, vector<8x128xf32> -> vector<8x128xf32>
    %81 = arith.addf %80, %12 : vector<8x128xf32>
    %82 = vector.extract_strided_slice %79 {offsets = [0, 0], sizes = [8, 32], strides = [1, 1]} : vector<8x128xf32> to vector<8x32xf32>
    %83 = arith.negf %82 : vector<8x32xf32>
    %84 = math.exp %83 : vector<8x32xf32>
    %cst_30 = arith.constant 1.000000e+00 : f32
    %85 = vector.broadcast %cst_30 : f32 to vector<8x32xf32>
    %86 = arith.addf %85, %84 : vector<8x32xf32>
    %87 = arith.divf %85, %86 : vector<8x32xf32>
    %88 = vector.extract_strided_slice %79 {offsets = [0, 32], sizes = [8, 32], strides = [1, 1]} : vector<8x128xf32> to vector<8x32xf32>
    %89 = arith.negf %88 : vector<8x32xf32>
    %90 = math.exp %89 : vector<8x32xf32>
    %cst_31 = arith.constant 1.000000e+00 : f32
    %91 = vector.broadcast %cst_31 : f32 to vector<8x32xf32>
    %92 = arith.addf %91, %90 : vector<8x32xf32>
    %93 = arith.divf %91, %92 : vector<8x32xf32>
    %94 = vector.extract_strided_slice %79 {offsets = [0, 64], sizes = [8, 32], strides = [1, 1]} : vector<8x128xf32> to vector<8x32xf32>
    %95 = math.tanh %94 : vector<8x32xf32>
    %96 = vector.extract_strided_slice %79 {offsets = [0, 96], sizes = [8, 32], strides = [1, 1]} : vector<8x128xf32> to vector<8x32xf32>
    %97 = arith.negf %96 : vector<8x32xf32>
    %98 = math.exp %97 : vector<8x32xf32>
    %cst_32 = arith.constant 1.000000e+00 : f32
    %99 = vector.broadcast %cst_32 : f32 to vector<8x32xf32>
    %100 = arith.addf %99, %98 : vector<8x32xf32>
    %101 = arith.divf %99, %100 : vector<8x32xf32>
    %102 = arith.mulf %93, %44 : vector<8x32xf32>
    %103 = arith.mulf %87, %95 : vector<8x32xf32>
    %104 = arith.addf %102, %103 : vector<8x32xf32>
    %105 = math.tanh %104 : vector<8x32xf32>
    %106 = arith.mulf %101, %105 : vector<8x32xf32>
    %cst_33 = arith.constant dense<0.000000e+00> : vector<8x128xf32>
    %107 = tpu.matmul %106, %8, %cst_33 {dimension_numbers = #tpu.dot_dimension_numbers<[1], [0], [0], [1], [0, 0, 1, 1], [], []>} : vector<8x32xf32>, vector<32x128xf32>, vector<8x128xf32> -> vector<8x128xf32>
    %108 = arith.addf %81, %107 : vector<8x128xf32>
    %109 = vector.extract_strided_slice %108 {offsets = [0, 0], sizes = [8, 32], strides = [1, 1]} : vector<8x128xf32> to vector<8x32xf32>
    %110 = arith.negf %109 : vector<8x32xf32>
    %111 = math.exp %110 : vector<8x32xf32>
    %cst_34 = arith.constant 1.000000e+00 : f32
    %112 = vector.broadcast %cst_34 : f32 to vector<8x32xf32>
    %113 = arith.addf %112, %111 : vector<8x32xf32>
    %114 = arith.divf %112, %113 : vector<8x32xf32>
    %115 = vector.extract_strided_slice %108 {offsets = [0, 32], sizes = [8, 32], strides = [1, 1]} : vector<8x128xf32> to vector<8x32xf32>
    %116 = arith.negf %115 : vector<8x32xf32>
    %117 = math.exp %116 : vector<8x32xf32>
    %cst_35 = arith.constant 1.000000e+00 : f32
    %118 = vector.broadcast %cst_35 : f32 to vector<8x32xf32>
    %119 = arith.addf %118, %117 : vector<8x32xf32>
    %120 = arith.divf %118, %119 : vector<8x32xf32>
    %121 = vector.extract_strided_slice %108 {offsets = [0, 64], sizes = [8, 32], strides = [1, 1]} : vector<8x128xf32> to vector<8x32xf32>
    %122 = math.tanh %121 : vector<8x32xf32>
    %123 = vector.extract_strided_slice %108 {offsets = [0, 96], sizes = [8, 32], strides = [1, 1]} : vector<8x128xf32> to vector<8x32xf32>
    %124 = arith.negf %123 : vector<8x32xf32>
    %125 = math.exp %124 : vector<8x32xf32>
    %cst_36 = arith.constant 1.000000e+00 : f32
    %126 = vector.broadcast %cst_36 : f32 to vector<8x32xf32>
    %127 = arith.addf %126, %125 : vector<8x32xf32>
    %128 = arith.divf %126, %127 : vector<8x32xf32>
    %129 = arith.mulf %120, %71 : vector<8x32xf32>
    %130 = arith.mulf %114, %122 : vector<8x32xf32>
    %131 = arith.addf %129, %130 : vector<8x32xf32>
    %132 = math.tanh %131 : vector<8x32xf32>
    %133 = arith.mulf %128, %132 : vector<8x32xf32>
    %c2_i32 = arith.constant 2 : i32
    %c8_i32_37 = arith.constant 8 : i32
    %134 = arith.muli %c2_i32, %c8_i32_37 : i32
    %135 = tpu.assume_multiple %134, 8 : i32
    %136 = arith.index_cast %135 : i32 to index
    %c0_38 = arith.constant 0 : index
    %137 = vector.load %arg11[%136, %c0_38] : memref<64x128xf32, #tpu.memory_space<vmem>>, vector<8x128xf32>
    %cst_39 = arith.constant dense<0.000000e+00> : vector<8x128xf32>
    %138 = tpu.matmul %106, %7, %cst_39 {dimension_numbers = #tpu.dot_dimension_numbers<[1], [0], [0], [1], [0, 0, 1, 1], [], []>} : vector<8x32xf32>, vector<32x128xf32>, vector<8x128xf32> -> vector<8x128xf32>
    %139 = arith.addf %137, %138 : vector<8x128xf32>
    %cst_40 = arith.constant dense<0.000000e+00> : vector<8x128xf32>
    %140 = tpu.matmul %133, %9, %cst_40 {dimension_numbers = #tpu.dot_dimension_numbers<[1], [0], [0], [1], [0, 0, 1, 1], [], []>} : vector<8x32xf32>, vector<32x128xf32>, vector<8x128xf32> -> vector<8x128xf32>
    %141 = arith.addf %140, %12 : vector<8x128xf32>
    %142 = vector.extract_strided_slice %139 {offsets = [0, 0], sizes = [8, 32], strides = [1, 1]} : vector<8x128xf32> to vector<8x32xf32>
    %143 = arith.negf %142 : vector<8x32xf32>
    %144 = math.exp %143 : vector<8x32xf32>
    %cst_41 = arith.constant 1.000000e+00 : f32
    %145 = vector.broadcast %cst_41 : f32 to vector<8x32xf32>
    %146 = arith.addf %145, %144 : vector<8x32xf32>
    %147 = arith.divf %145, %146 : vector<8x32xf32>
    %148 = vector.extract_strided_slice %139 {offsets = [0, 32], sizes = [8, 32], strides = [1, 1]} : vector<8x128xf32> to vector<8x32xf32>
    %149 = arith.negf %148 : vector<8x32xf32>
    %150 = math.exp %149 : vector<8x32xf32>
    %cst_42 = arith.constant 1.000000e+00 : f32
    %151 = vector.broadcast %cst_42 : f32 to vector<8x32xf32>
    %152 = arith.addf %151, %150 : vector<8x32xf32>
    %153 = arith.divf %151, %152 : vector<8x32xf32>
    %154 = vector.extract_strided_slice %139 {offsets = [0, 64], sizes = [8, 32], strides = [1, 1]} : vector<8x128xf32> to vector<8x32xf32>
    %155 = math.tanh %154 : vector<8x32xf32>
    %156 = vector.extract_strided_slice %139 {offsets = [0, 96], sizes = [8, 32], strides = [1, 1]} : vector<8x128xf32> to vector<8x32xf32>
    %157 = arith.negf %156 : vector<8x32xf32>
    %158 = math.exp %157 : vector<8x32xf32>
    %cst_43 = arith.constant 1.000000e+00 : f32
    %159 = vector.broadcast %cst_43 : f32 to vector<8x32xf32>
    %160 = arith.addf %159, %158 : vector<8x32xf32>
    %161 = arith.divf %159, %160 : vector<8x32xf32>
    %162 = arith.mulf %153, %104 : vector<8x32xf32>
    %163 = arith.mulf %147, %155 : vector<8x32xf32>
    %164 = arith.addf %162, %163 : vector<8x32xf32>
    %165 = math.tanh %164 : vector<8x32xf32>
    %166 = arith.mulf %161, %165 : vector<8x32xf32>
    %cst_44 = arith.constant dense<0.000000e+00> : vector<8x128xf32>
    %167 = tpu.matmul %166, %8, %cst_44 {dimension_numbers = #tpu.dot_dimension_numbers<[1], [0], [0], [1], [0, 0, 1, 1], [], []>} : vector<8x32xf32>, vector<32x128xf32>, vector<8x128xf32> -> vector<8x128xf32>
    %168 = arith.addf %141, %167 : vector<8x128xf32>
    %169 = vector.extract_strided_slice %168 {offsets = [0, 0], sizes = [8, 32], strides = [1, 1]} : vector<8x128xf32> to vector<8x32xf32>
    %170 = arith.negf %169 : vector<8x32xf32>
    %171 = math.exp %170 : vector<8x32xf32>
    %cst_45 = arith.constant 1.000000e+00 : f32
    %172 = vector.broadcast %cst_45 : f32 to vector<8x32xf32>
    %173 = arith.addf %172, %171 : vector<8x32xf32>
    %174 = arith.divf %172, %173 : vector<8x32xf32>
    %175 = vector.extract_strided_slice %168 {offsets = [0, 32], sizes = [8, 32], strides = [1, 1]} : vector<8x128xf32> to vector<8x32xf32>
    %176 = arith.negf %175 : vector<8x32xf32>
    %177 = math.exp %176 : vector<8x32xf32>
    %cst_46 = arith.constant 1.000000e+00 : f32
    %178 = vector.broadcast %cst_46 : f32 to vector<8x32xf32>
    %179 = arith.addf %178, %177 : vector<8x32xf32>
    %180 = arith.divf %178, %179 : vector<8x32xf32>
    %181 = vector.extract_strided_slice %168 {offsets = [0, 64], sizes = [8, 32], strides = [1, 1]} : vector<8x128xf32> to vector<8x32xf32>
    %182 = math.tanh %181 : vector<8x32xf32>
    %183 = vector.extract_strided_slice %168 {offsets = [0, 96], sizes = [8, 32], strides = [1, 1]} : vector<8x128xf32> to vector<8x32xf32>
    %184 = arith.negf %183 : vector<8x32xf32>
    %185 = math.exp %184 : vector<8x32xf32>
    %cst_47 = arith.constant 1.000000e+00 : f32
    %186 = vector.broadcast %cst_47 : f32 to vector<8x32xf32>
    %187 = arith.addf %186, %185 : vector<8x32xf32>
    %188 = arith.divf %186, %187 : vector<8x32xf32>
    %189 = arith.mulf %180, %131 : vector<8x32xf32>
    %190 = arith.mulf %174, %182 : vector<8x32xf32>
    %191 = arith.addf %189, %190 : vector<8x32xf32>
    %192 = math.tanh %191 : vector<8x32xf32>
    %193 = arith.mulf %188, %192 : vector<8x32xf32>
    %c3_i32 = arith.constant 3 : i32
    %c8_i32_48 = arith.constant 8 : i32
    %194 = arith.muli %c3_i32, %c8_i32_48 : i32
    %195 = tpu.assume_multiple %194, 8 : i32
    %196 = arith.index_cast %195 : i32 to index
    %c0_49 = arith.constant 0 : index
    %197 = vector.load %arg11[%196, %c0_49] : memref<64x128xf32, #tpu.memory_space<vmem>>, vector<8x128xf32>
    %cst_50 = arith.constant dense<0.000000e+00> : vector<8x128xf32>
    %198 = tpu.matmul %166, %7, %cst_50 {dimension_numbers = #tpu.dot_dimension_numbers<[1], [0], [0], [1], [0, 0, 1, 1], [], []>} : vector<8x32xf32>, vector<32x128xf32>, vector<8x128xf32> -> vector<8x128xf32>
    %199 = arith.addf %197, %198 : vector<8x128xf32>
    %cst_51 = arith.constant dense<0.000000e+00> : vector<8x128xf32>
    %200 = tpu.matmul %193, %9, %cst_51 {dimension_numbers = #tpu.dot_dimension_numbers<[1], [0], [0], [1], [0, 0, 1, 1], [], []>} : vector<8x32xf32>, vector<32x128xf32>, vector<8x128xf32> -> vector<8x128xf32>
    %201 = arith.addf %200, %12 : vector<8x128xf32>
    %202 = vector.extract_strided_slice %199 {offsets = [0, 0], sizes = [8, 32], strides = [1, 1]} : vector<8x128xf32> to vector<8x32xf32>
    %203 = arith.negf %202 : vector<8x32xf32>
    %204 = math.exp %203 : vector<8x32xf32>
    %cst_52 = arith.constant 1.000000e+00 : f32
    %205 = vector.broadcast %cst_52 : f32 to vector<8x32xf32>
    %206 = arith.addf %205, %204 : vector<8x32xf32>
    %207 = arith.divf %205, %206 : vector<8x32xf32>
    %208 = vector.extract_strided_slice %199 {offsets = [0, 32], sizes = [8, 32], strides = [1, 1]} : vector<8x128xf32> to vector<8x32xf32>
    %209 = arith.negf %208 : vector<8x32xf32>
    %210 = math.exp %209 : vector<8x32xf32>
    %cst_53 = arith.constant 1.000000e+00 : f32
    %211 = vector.broadcast %cst_53 : f32 to vector<8x32xf32>
    %212 = arith.addf %211, %210 : vector<8x32xf32>
    %213 = arith.divf %211, %212 : vector<8x32xf32>
    %214 = vector.extract_strided_slice %199 {offsets = [0, 64], sizes = [8, 32], strides = [1, 1]} : vector<8x128xf32> to vector<8x32xf32>
    %215 = math.tanh %214 : vector<8x32xf32>
    %216 = vector.extract_strided_slice %199 {offsets = [0, 96], sizes = [8, 32], strides = [1, 1]} : vector<8x128xf32> to vector<8x32xf32>
    %217 = arith.negf %216 : vector<8x32xf32>
    %218 = math.exp %217 : vector<8x32xf32>
    %cst_54 = arith.constant 1.000000e+00 : f32
    %219 = vector.broadcast %cst_54 : f32 to vector<8x32xf32>
    %220 = arith.addf %219, %218 : vector<8x32xf32>
    %221 = arith.divf %219, %220 : vector<8x32xf32>
    %222 = arith.mulf %213, %164 : vector<8x32xf32>
    %223 = arith.mulf %207, %215 : vector<8x32xf32>
    %224 = arith.addf %222, %223 : vector<8x32xf32>
    %225 = math.tanh %224 : vector<8x32xf32>
    %226 = arith.mulf %221, %225 : vector<8x32xf32>
    %cst_55 = arith.constant dense<0.000000e+00> : vector<8x128xf32>
    %227 = tpu.matmul %226, %8, %cst_55 {dimension_numbers = #tpu.dot_dimension_numbers<[1], [0], [0], [1], [0, 0, 1, 1], [], []>} : vector<8x32xf32>, vector<32x128xf32>, vector<8x128xf32> -> vector<8x128xf32>
    %228 = arith.addf %201, %227 : vector<8x128xf32>
    %229 = vector.extract_strided_slice %228 {offsets = [0, 0], sizes = [8, 32], strides = [1, 1]} : vector<8x128xf32> to vector<8x32xf32>
    %230 = arith.negf %229 : vector<8x32xf32>
    %231 = math.exp %230 : vector<8x32xf32>
    %cst_56 = arith.constant 1.000000e+00 : f32
    %232 = vector.broadcast %cst_56 : f32 to vector<8x32xf32>
    %233 = arith.addf %232, %231 : vector<8x32xf32>
    %234 = arith.divf %232, %233 : vector<8x32xf32>
    %235 = vector.extract_strided_slice %228 {offsets = [0, 32], sizes = [8, 32], strides = [1, 1]} : vector<8x128xf32> to vector<8x32xf32>
    %236 = arith.negf %235 : vector<8x32xf32>
    %237 = math.exp %236 : vector<8x32xf32>
    %cst_57 = arith.constant 1.000000e+00 : f32
    %238 = vector.broadcast %cst_57 : f32 to vector<8x32xf32>
    %239 = arith.addf %238, %237 : vector<8x32xf32>
    %240 = arith.divf %238, %239 : vector<8x32xf32>
    %241 = vector.extract_strided_slice %228 {offsets = [0, 64], sizes = [8, 32], strides = [1, 1]} : vector<8x128xf32> to vector<8x32xf32>
    %242 = math.tanh %241 : vector<8x32xf32>
    %243 = vector.extract_strided_slice %228 {offsets = [0, 96], sizes = [8, 32], strides = [1, 1]} : vector<8x128xf32> to vector<8x32xf32>
    %244 = arith.negf %243 : vector<8x32xf32>
    %245 = math.exp %244 : vector<8x32xf32>
    %cst_58 = arith.constant 1.000000e+00 : f32
    %246 = vector.broadcast %cst_58 : f32 to vector<8x32xf32>
    %247 = arith.addf %246, %245 : vector<8x32xf32>
    %248 = arith.divf %246, %247 : vector<8x32xf32>
    %249 = arith.mulf %240, %191 : vector<8x32xf32>
    %250 = arith.mulf %234, %242 : vector<8x32xf32>
    %251 = arith.addf %249, %250 : vector<8x32xf32>
    %252 = math.tanh %251 : vector<8x32xf32>
    %253 = arith.mulf %248, %252 : vector<8x32xf32>
    %c4_i32 = arith.constant 4 : i32
    %c8_i32_59 = arith.constant 8 : i32
    %254 = arith.muli %c4_i32, %c8_i32_59 : i32
    %255 = tpu.assume_multiple %254, 8 : i32
    %256 = arith.index_cast %255 : i32 to index
    %c0_60 = arith.constant 0 : index
    %257 = vector.load %arg11[%256, %c0_60] : memref<64x128xf32, #tpu.memory_space<vmem>>, vector<8x128xf32>
    %cst_61 = arith.constant dense<0.000000e+00> : vector<8x128xf32>
    %258 = tpu.matmul %226, %7, %cst_61 {dimension_numbers = #tpu.dot_dimension_numbers<[1], [0], [0], [1], [0, 0, 1, 1], [], []>} : vector<8x32xf32>, vector<32x128xf32>, vector<8x128xf32> -> vector<8x128xf32>
    %259 = arith.addf %257, %258 : vector<8x128xf32>
    %cst_62 = arith.constant dense<0.000000e+00> : vector<8x128xf32>
    %260 = tpu.matmul %253, %9, %cst_62 {dimension_numbers = #tpu.dot_dimension_numbers<[1], [0], [0], [1], [0, 0, 1, 1], [], []>} : vector<8x32xf32>, vector<32x128xf32>, vector<8x128xf32> -> vector<8x128xf32>
    %261 = arith.addf %260, %12 : vector<8x128xf32>
    %262 = vector.extract_strided_slice %259 {offsets = [0, 0], sizes = [8, 32], strides = [1, 1]} : vector<8x128xf32> to vector<8x32xf32>
    %263 = arith.negf %262 : vector<8x32xf32>
    %264 = math.exp %263 : vector<8x32xf32>
    %cst_63 = arith.constant 1.000000e+00 : f32
    %265 = vector.broadcast %cst_63 : f32 to vector<8x32xf32>
    %266 = arith.addf %265, %264 : vector<8x32xf32>
    %267 = arith.divf %265, %266 : vector<8x32xf32>
    %268 = vector.extract_strided_slice %259 {offsets = [0, 32], sizes = [8, 32], strides = [1, 1]} : vector<8x128xf32> to vector<8x32xf32>
    %269 = arith.negf %268 : vector<8x32xf32>
    %270 = math.exp %269 : vector<8x32xf32>
    %cst_64 = arith.constant 1.000000e+00 : f32
    %271 = vector.broadcast %cst_64 : f32 to vector<8x32xf32>
    %272 = arith.addf %271, %270 : vector<8x32xf32>
    %273 = arith.divf %271, %272 : vector<8x32xf32>
    %274 = vector.extract_strided_slice %259 {offsets = [0, 64], sizes = [8, 32], strides = [1, 1]} : vector<8x128xf32> to vector<8x32xf32>
    %275 = math.tanh %274 : vector<8x32xf32>
    %276 = vector.extract_strided_slice %259 {offsets = [0, 96], sizes = [8, 32], strides = [1, 1]} : vector<8x128xf32> to vector<8x32xf32>
    %277 = arith.negf %276 : vector<8x32xf32>
    %278 = math.exp %277 : vector<8x32xf32>
    %cst_65 = arith.constant 1.000000e+00 : f32
    %279 = vector.broadcast %cst_65 : f32 to vector<8x32xf32>
    %280 = arith.addf %279, %278 : vector<8x32xf32>
    %281 = arith.divf %279, %280 : vector<8x32xf32>
    %282 = arith.mulf %273, %224 : vector<8x32xf32>
    %283 = arith.mulf %267, %275 : vector<8x32xf32>
    %284 = arith.addf %282, %283 : vector<8x32xf32>
    %285 = math.tanh %284 : vector<8x32xf32>
    %286 = arith.mulf %281, %285 : vector<8x32xf32>
    %cst_66 = arith.constant dense<0.000000e+00> : vector<8x128xf32>
    %287 = tpu.matmul %286, %8, %cst_66 {dimension_numbers = #tpu.dot_dimension_numbers<[1], [0], [0], [1], [0, 0, 1, 1], [], []>} : vector<8x32xf32>, vector<32x128xf32>, vector<8x128xf32> -> vector<8x128xf32>
    %288 = arith.addf %261, %287 : vector<8x128xf32>
    %289 = vector.extract_strided_slice %288 {offsets = [0, 0], sizes = [8, 32], strides = [1, 1]} : vector<8x128xf32> to vector<8x32xf32>
    %290 = arith.negf %289 : vector<8x32xf32>
    %291 = math.exp %290 : vector<8x32xf32>
    %cst_67 = arith.constant 1.000000e+00 : f32
    %292 = vector.broadcast %cst_67 : f32 to vector<8x32xf32>
    %293 = arith.addf %292, %291 : vector<8x32xf32>
    %294 = arith.divf %292, %293 : vector<8x32xf32>
    %295 = vector.extract_strided_slice %288 {offsets = [0, 32], sizes = [8, 32], strides = [1, 1]} : vector<8x128xf32> to vector<8x32xf32>
    %296 = arith.negf %295 : vector<8x32xf32>
    %297 = math.exp %296 : vector<8x32xf32>
    %cst_68 = arith.constant 1.000000e+00 : f32
    %298 = vector.broadcast %cst_68 : f32 to vector<8x32xf32>
    %299 = arith.addf %298, %297 : vector<8x32xf32>
    %300 = arith.divf %298, %299 : vector<8x32xf32>
    %301 = vector.extract_strided_slice %288 {offsets = [0, 64], sizes = [8, 32], strides = [1, 1]} : vector<8x128xf32> to vector<8x32xf32>
    %302 = math.tanh %301 : vector<8x32xf32>
    %303 = vector.extract_strided_slice %288 {offsets = [0, 96], sizes = [8, 32], strides = [1, 1]} : vector<8x128xf32> to vector<8x32xf32>
    %304 = arith.negf %303 : vector<8x32xf32>
    %305 = math.exp %304 : vector<8x32xf32>
    %cst_69 = arith.constant 1.000000e+00 : f32
    %306 = vector.broadcast %cst_69 : f32 to vector<8x32xf32>
    %307 = arith.addf %306, %305 : vector<8x32xf32>
    %308 = arith.divf %306, %307 : vector<8x32xf32>
    %309 = arith.mulf %300, %251 : vector<8x32xf32>
    %310 = arith.mulf %294, %302 : vector<8x32xf32>
    %311 = arith.addf %309, %310 : vector<8x32xf32>
    %312 = math.tanh %311 : vector<8x32xf32>
    %313 = arith.mulf %308, %312 : vector<8x32xf32>
    %c5_i32 = arith.constant 5 : i32
    %c8_i32_70 = arith.constant 8 : i32
    %314 = arith.muli %c5_i32, %c8_i32_70 : i32
    %315 = tpu.assume_multiple %314, 8 : i32
    %316 = arith.index_cast %315 : i32 to index
    %c0_71 = arith.constant 0 : index
    %317 = vector.load %arg11[%316, %c0_71] : memref<64x128xf32, #tpu.memory_space<vmem>>, vector<8x128xf32>
    %cst_72 = arith.constant dense<0.000000e+00> : vector<8x128xf32>
    %318 = tpu.matmul %286, %7, %cst_72 {dimension_numbers = #tpu.dot_dimension_numbers<[1], [0], [0], [1], [0, 0, 1, 1], [], []>} : vector<8x32xf32>, vector<32x128xf32>, vector<8x128xf32> -> vector<8x128xf32>
    %319 = arith.addf %317, %318 : vector<8x128xf32>
    %cst_73 = arith.constant dense<0.000000e+00> : vector<8x128xf32>
    %320 = tpu.matmul %313, %9, %cst_73 {dimension_numbers = #tpu.dot_dimension_numbers<[1], [0], [0], [1], [0, 0, 1, 1], [], []>} : vector<8x32xf32>, vector<32x128xf32>, vector<8x128xf32> -> vector<8x128xf32>
    %321 = arith.addf %320, %12 : vector<8x128xf32>
    %322 = vector.extract_strided_slice %319 {offsets = [0, 0], sizes = [8, 32], strides = [1, 1]} : vector<8x128xf32> to vector<8x32xf32>
    %323 = arith.negf %322 : vector<8x32xf32>
    %324 = math.exp %323 : vector<8x32xf32>
    %cst_74 = arith.constant 1.000000e+00 : f32
    %325 = vector.broadcast %cst_74 : f32 to vector<8x32xf32>
    %326 = arith.addf %325, %324 : vector<8x32xf32>
    %327 = arith.divf %325, %326 : vector<8x32xf32>
    %328 = vector.extract_strided_slice %319 {offsets = [0, 32], sizes = [8, 32], strides = [1, 1]} : vector<8x128xf32> to vector<8x32xf32>
    %329 = arith.negf %328 : vector<8x32xf32>
    %330 = math.exp %329 : vector<8x32xf32>
    %cst_75 = arith.constant 1.000000e+00 : f32
    %331 = vector.broadcast %cst_75 : f32 to vector<8x32xf32>
    %332 = arith.addf %331, %330 : vector<8x32xf32>
    %333 = arith.divf %331, %332 : vector<8x32xf32>
    %334 = vector.extract_strided_slice %319 {offsets = [0, 64], sizes = [8, 32], strides = [1, 1]} : vector<8x128xf32> to vector<8x32xf32>
    %335 = math.tanh %334 : vector<8x32xf32>
    %336 = vector.extract_strided_slice %319 {offsets = [0, 96], sizes = [8, 32], strides = [1, 1]} : vector<8x128xf32> to vector<8x32xf32>
    %337 = arith.negf %336 : vector<8x32xf32>
    %338 = math.exp %337 : vector<8x32xf32>
    %cst_76 = arith.constant 1.000000e+00 : f32
    %339 = vector.broadcast %cst_76 : f32 to vector<8x32xf32>
    %340 = arith.addf %339, %338 : vector<8x32xf32>
    %341 = arith.divf %339, %340 : vector<8x32xf32>
    %342 = arith.mulf %333, %284 : vector<8x32xf32>
    %343 = arith.mulf %327, %335 : vector<8x32xf32>
    %344 = arith.addf %342, %343 : vector<8x32xf32>
    %345 = math.tanh %344 : vector<8x32xf32>
    %346 = arith.mulf %341, %345 : vector<8x32xf32>
    %cst_77 = arith.constant dense<0.000000e+00> : vector<8x128xf32>
    %347 = tpu.matmul %346, %8, %cst_77 {dimension_numbers = #tpu.dot_dimension_numbers<[1], [0], [0], [1], [0, 0, 1, 1], [], []>} : vector<8x32xf32>, vector<32x128xf32>, vector<8x128xf32> -> vector<8x128xf32>
    %348 = arith.addf %321, %347 : vector<8x128xf32>
    %349 = vector.extract_strided_slice %348 {offsets = [0, 0], sizes = [8, 32], strides = [1, 1]} : vector<8x128xf32> to vector<8x32xf32>
    %350 = arith.negf %349 : vector<8x32xf32>
    %351 = math.exp %350 : vector<8x32xf32>
    %cst_78 = arith.constant 1.000000e+00 : f32
    %352 = vector.broadcast %cst_78 : f32 to vector<8x32xf32>
    %353 = arith.addf %352, %351 : vector<8x32xf32>
    %354 = arith.divf %352, %353 : vector<8x32xf32>
    %355 = vector.extract_strided_slice %348 {offsets = [0, 32], sizes = [8, 32], strides = [1, 1]} : vector<8x128xf32> to vector<8x32xf32>
    %356 = arith.negf %355 : vector<8x32xf32>
    %357 = math.exp %356 : vector<8x32xf32>
    %cst_79 = arith.constant 1.000000e+00 : f32
    %358 = vector.broadcast %cst_79 : f32 to vector<8x32xf32>
    %359 = arith.addf %358, %357 : vector<8x32xf32>
    %360 = arith.divf %358, %359 : vector<8x32xf32>
    %361 = vector.extract_strided_slice %348 {offsets = [0, 64], sizes = [8, 32], strides = [1, 1]} : vector<8x128xf32> to vector<8x32xf32>
    %362 = math.tanh %361 : vector<8x32xf32>
    %363 = vector.extract_strided_slice %348 {offsets = [0, 96], sizes = [8, 32], strides = [1, 1]} : vector<8x128xf32> to vector<8x32xf32>
    %364 = arith.negf %363 : vector<8x32xf32>
    %365 = math.exp %364 : vector<8x32xf32>
    %cst_80 = arith.constant 1.000000e+00 : f32
    %366 = vector.broadcast %cst_80 : f32 to vector<8x32xf32>
    %367 = arith.addf %366, %365 : vector<8x32xf32>
    %368 = arith.divf %366, %367 : vector<8x32xf32>
    %369 = arith.mulf %360, %311 : vector<8x32xf32>
    %370 = arith.mulf %354, %362 : vector<8x32xf32>
    %371 = arith.addf %369, %370 : vector<8x32xf32>
    %372 = math.tanh %371 : vector<8x32xf32>
    %373 = arith.mulf %368, %372 : vector<8x32xf32>
    %c6_i32 = arith.constant 6 : i32
    %c8_i32_81 = arith.constant 8 : i32
    %374 = arith.muli %c6_i32, %c8_i32_81 : i32
    %375 = tpu.assume_multiple %374, 8 : i32
    %376 = arith.index_cast %375 : i32 to index
    %c0_82 = arith.constant 0 : index
    %377 = vector.load %arg11[%376, %c0_82] : memref<64x128xf32, #tpu.memory_space<vmem>>, vector<8x128xf32>
    %cst_83 = arith.constant dense<0.000000e+00> : vector<8x128xf32>
    %378 = tpu.matmul %346, %7, %cst_83 {dimension_numbers = #tpu.dot_dimension_numbers<[1], [0], [0], [1], [0, 0, 1, 1], [], []>} : vector<8x32xf32>, vector<32x128xf32>, vector<8x128xf32> -> vector<8x128xf32>
    %379 = arith.addf %377, %378 : vector<8x128xf32>
    %cst_84 = arith.constant dense<0.000000e+00> : vector<8x128xf32>
    %380 = tpu.matmul %373, %9, %cst_84 {dimension_numbers = #tpu.dot_dimension_numbers<[1], [0], [0], [1], [0, 0, 1, 1], [], []>} : vector<8x32xf32>, vector<32x128xf32>, vector<8x128xf32> -> vector<8x128xf32>
    %381 = arith.addf %380, %12 : vector<8x128xf32>
    %382 = vector.extract_strided_slice %379 {offsets = [0, 0], sizes = [8, 32], strides = [1, 1]} : vector<8x128xf32> to vector<8x32xf32>
    %383 = arith.negf %382 : vector<8x32xf32>
    %384 = math.exp %383 : vector<8x32xf32>
    %cst_85 = arith.constant 1.000000e+00 : f32
    %385 = vector.broadcast %cst_85 : f32 to vector<8x32xf32>
    %386 = arith.addf %385, %384 : vector<8x32xf32>
    %387 = arith.divf %385, %386 : vector<8x32xf32>
    %388 = vector.extract_strided_slice %379 {offsets = [0, 32], sizes = [8, 32], strides = [1, 1]} : vector<8x128xf32> to vector<8x32xf32>
    %389 = arith.negf %388 : vector<8x32xf32>
    %390 = math.exp %389 : vector<8x32xf32>
    %cst_86 = arith.constant 1.000000e+00 : f32
    %391 = vector.broadcast %cst_86 : f32 to vector<8x32xf32>
    %392 = arith.addf %391, %390 : vector<8x32xf32>
    %393 = arith.divf %391, %392 : vector<8x32xf32>
    %394 = vector.extract_strided_slice %379 {offsets = [0, 64], sizes = [8, 32], strides = [1, 1]} : vector<8x128xf32> to vector<8x32xf32>
    %395 = math.tanh %394 : vector<8x32xf32>
    %396 = vector.extract_strided_slice %379 {offsets = [0, 96], sizes = [8, 32], strides = [1, 1]} : vector<8x128xf32> to vector<8x32xf32>
    %397 = arith.negf %396 : vector<8x32xf32>
    %398 = math.exp %397 : vector<8x32xf32>
    %cst_87 = arith.constant 1.000000e+00 : f32
    %399 = vector.broadcast %cst_87 : f32 to vector<8x32xf32>
    %400 = arith.addf %399, %398 : vector<8x32xf32>
    %401 = arith.divf %399, %400 : vector<8x32xf32>
    %402 = arith.mulf %393, %344 : vector<8x32xf32>
    %403 = arith.mulf %387, %395 : vector<8x32xf32>
    %404 = arith.addf %402, %403 : vector<8x32xf32>
    %405 = math.tanh %404 : vector<8x32xf32>
    %406 = arith.mulf %401, %405 : vector<8x32xf32>
    %cst_88 = arith.constant dense<0.000000e+00> : vector<8x128xf32>
    %407 = tpu.matmul %406, %8, %cst_88 {dimension_numbers = #tpu.dot_dimension_numbers<[1], [0], [0], [1], [0, 0, 1, 1], [], []>} : vector<8x32xf32>, vector<32x128xf32>, vector<8x128xf32> -> vector<8x128xf32>
    %408 = arith.addf %381, %407 : vector<8x128xf32>
    %409 = vector.extract_strided_slice %408 {offsets = [0, 0], sizes = [8, 32], strides = [1, 1]} : vector<8x128xf32> to vector<8x32xf32>
    %410 = arith.negf %409 : vector<8x32xf32>
    %411 = math.exp %410 : vector<8x32xf32>
    %cst_89 = arith.constant 1.000000e+00 : f32
    %412 = vector.broadcast %cst_89 : f32 to vector<8x32xf32>
    %413 = arith.addf %412, %411 : vector<8x32xf32>
    %414 = arith.divf %412, %413 : vector<8x32xf32>
    %415 = vector.extract_strided_slice %408 {offsets = [0, 32], sizes = [8, 32], strides = [1, 1]} : vector<8x128xf32> to vector<8x32xf32>
    %416 = arith.negf %415 : vector<8x32xf32>
    %417 = math.exp %416 : vector<8x32xf32>
    %cst_90 = arith.constant 1.000000e+00 : f32
    %418 = vector.broadcast %cst_90 : f32 to vector<8x32xf32>
    %419 = arith.addf %418, %417 : vector<8x32xf32>
    %420 = arith.divf %418, %419 : vector<8x32xf32>
    %421 = vector.extract_strided_slice %408 {offsets = [0, 64], sizes = [8, 32], strides = [1, 1]} : vector<8x128xf32> to vector<8x32xf32>
    %422 = math.tanh %421 : vector<8x32xf32>
    %423 = vector.extract_strided_slice %408 {offsets = [0, 96], sizes = [8, 32], strides = [1, 1]} : vector<8x128xf32> to vector<8x32xf32>
    %424 = arith.negf %423 : vector<8x32xf32>
    %425 = math.exp %424 : vector<8x32xf32>
    %cst_91 = arith.constant 1.000000e+00 : f32
    %426 = vector.broadcast %cst_91 : f32 to vector<8x32xf32>
    %427 = arith.addf %426, %425 : vector<8x32xf32>
    %428 = arith.divf %426, %427 : vector<8x32xf32>
    %429 = arith.mulf %420, %371 : vector<8x32xf32>
    %430 = arith.mulf %414, %422 : vector<8x32xf32>
    %431 = arith.addf %429, %430 : vector<8x32xf32>
    %432 = math.tanh %431 : vector<8x32xf32>
    %433 = arith.mulf %428, %432 : vector<8x32xf32>
    %c7_i32 = arith.constant 7 : i32
    %c8_i32_92 = arith.constant 8 : i32
    %434 = arith.muli %c7_i32, %c8_i32_92 : i32
    %435 = tpu.assume_multiple %434, 8 : i32
    %436 = arith.index_cast %435 : i32 to index
    %c0_93 = arith.constant 0 : index
    %437 = vector.load %arg11[%436, %c0_93] : memref<64x128xf32, #tpu.memory_space<vmem>>, vector<8x128xf32>
    %cst_94 = arith.constant dense<0.000000e+00> : vector<8x128xf32>
    %438 = tpu.matmul %406, %7, %cst_94 {dimension_numbers = #tpu.dot_dimension_numbers<[1], [0], [0], [1], [0, 0, 1, 1], [], []>} : vector<8x32xf32>, vector<32x128xf32>, vector<8x128xf32> -> vector<8x128xf32>
    %439 = arith.addf %437, %438 : vector<8x128xf32>
    %cst_95 = arith.constant dense<0.000000e+00> : vector<8x128xf32>
    %440 = tpu.matmul %433, %9, %cst_95 {dimension_numbers = #tpu.dot_dimension_numbers<[1], [0], [0], [1], [0, 0, 1, 1], [], []>} : vector<8x32xf32>, vector<32x128xf32>, vector<8x128xf32> -> vector<8x128xf32>
    %441 = arith.addf %440, %12 : vector<8x128xf32>
    %442 = vector.extract_strided_slice %439 {offsets = [0, 0], sizes = [8, 32], strides = [1, 1]} : vector<8x128xf32> to vector<8x32xf32>
    %443 = arith.negf %442 : vector<8x32xf32>
    %444 = math.exp %443 : vector<8x32xf32>
    %cst_96 = arith.constant 1.000000e+00 : f32
    %445 = vector.broadcast %cst_96 : f32 to vector<8x32xf32>
    %446 = arith.addf %445, %444 : vector<8x32xf32>
    %447 = arith.divf %445, %446 : vector<8x32xf32>
    %448 = vector.extract_strided_slice %439 {offsets = [0, 32], sizes = [8, 32], strides = [1, 1]} : vector<8x128xf32> to vector<8x32xf32>
    %449 = arith.negf %448 : vector<8x32xf32>
    %450 = math.exp %449 : vector<8x32xf32>
    %cst_97 = arith.constant 1.000000e+00 : f32
    %451 = vector.broadcast %cst_97 : f32 to vector<8x32xf32>
    %452 = arith.addf %451, %450 : vector<8x32xf32>
    %453 = arith.divf %451, %452 : vector<8x32xf32>
    %454 = vector.extract_strided_slice %439 {offsets = [0, 64], sizes = [8, 32], strides = [1, 1]} : vector<8x128xf32> to vector<8x32xf32>
    %455 = math.tanh %454 : vector<8x32xf32>
    %456 = vector.extract_strided_slice %439 {offsets = [0, 96], sizes = [8, 32], strides = [1, 1]} : vector<8x128xf32> to vector<8x32xf32>
    %457 = arith.negf %456 : vector<8x32xf32>
    %458 = math.exp %457 : vector<8x32xf32>
    %cst_98 = arith.constant 1.000000e+00 : f32
    %459 = vector.broadcast %cst_98 : f32 to vector<8x32xf32>
    %460 = arith.addf %459, %458 : vector<8x32xf32>
    %461 = arith.divf %459, %460 : vector<8x32xf32>
    %462 = arith.mulf %453, %404 : vector<8x32xf32>
    %463 = arith.mulf %447, %455 : vector<8x32xf32>
    %464 = arith.addf %462, %463 : vector<8x32xf32>
    %465 = math.tanh %464 : vector<8x32xf32>
    %466 = arith.mulf %461, %465 : vector<8x32xf32>
    %cst_99 = arith.constant dense<0.000000e+00> : vector<8x128xf32>
    %467 = tpu.matmul %466, %8, %cst_99 {dimension_numbers = #tpu.dot_dimension_numbers<[1], [0], [0], [1], [0, 0, 1, 1], [], []>} : vector<8x32xf32>, vector<32x128xf32>, vector<8x128xf32> -> vector<8x128xf32>
    %468 = arith.addf %441, %467 : vector<8x128xf32>
    %469 = vector.extract_strided_slice %468 {offsets = [0, 0], sizes = [8, 32], strides = [1, 1]} : vector<8x128xf32> to vector<8x32xf32>
    %470 = arith.negf %469 : vector<8x32xf32>
    %471 = math.exp %470 : vector<8x32xf32>
    %cst_100 = arith.constant 1.000000e+00 : f32
    %472 = vector.broadcast %cst_100 : f32 to vector<8x32xf32>
    %473 = arith.addf %472, %471 : vector<8x32xf32>
    %474 = arith.divf %472, %473 : vector<8x32xf32>
    %475 = vector.extract_strided_slice %468 {offsets = [0, 32], sizes = [8, 32], strides = [1, 1]} : vector<8x128xf32> to vector<8x32xf32>
    %476 = arith.negf %475 : vector<8x32xf32>
    %477 = math.exp %476 : vector<8x32xf32>
    %cst_101 = arith.constant 1.000000e+00 : f32
    %478 = vector.broadcast %cst_101 : f32 to vector<8x32xf32>
    %479 = arith.addf %478, %477 : vector<8x32xf32>
    %480 = arith.divf %478, %479 : vector<8x32xf32>
    %481 = vector.extract_strided_slice %468 {offsets = [0, 64], sizes = [8, 32], strides = [1, 1]} : vector<8x128xf32> to vector<8x32xf32>
    %482 = math.tanh %481 : vector<8x32xf32>
    %483 = vector.extract_strided_slice %468 {offsets = [0, 96], sizes = [8, 32], strides = [1, 1]} : vector<8x128xf32> to vector<8x32xf32>
    %484 = arith.negf %483 : vector<8x32xf32>
    %485 = math.exp %484 : vector<8x32xf32>
    %cst_102 = arith.constant 1.000000e+00 : f32
    %486 = vector.broadcast %cst_102 : f32 to vector<8x32xf32>
    %487 = arith.addf %486, %485 : vector<8x32xf32>
    %488 = arith.divf %486, %487 : vector<8x32xf32>
    %489 = arith.mulf %480, %431 : vector<8x32xf32>
    %490 = arith.mulf %474, %482 : vector<8x32xf32>
    %491 = arith.addf %489, %490 : vector<8x32xf32>
    %492 = math.tanh %491 : vector<8x32xf32>
    %493 = arith.mulf %488, %492 : vector<8x32xf32>
    %c8_i32_103 = arith.constant 8 : i32
    %c0_104 = arith.constant 0 : index
    %c0_105 = arith.constant 0 : index
    %494 = vector.load %arg8[%c0_104, %c0_105] : memref<32x1xf32, #tpu.memory_space<vmem>>, vector<32x1xf32>
    %cst_106 = arith.constant dense<0.000000e+00> : vector<8x1xf32>
    %495 = tpu.matmul %493, %494, %cst_106 {dimension_numbers = #tpu.dot_dimension_numbers<[1], [0], [0], [1], [0, 0, 1, 1], [], []>} : vector<8x32xf32>, vector<32x1xf32>, vector<8x1xf32> -> vector<8x1xf32>
    %c0_107 = arith.constant 0 : index
    %c0_108 = arith.constant 0 : index
    %496 = vector.load %arg9[%c0_107, %c0_108] : memref<1x1xf32, #tpu.memory_space<vmem>>, vector<1x1xf32>
    %497 = vector.broadcast %496 : vector<1x1xf32> to vector<8x1xf32>
    %498 = arith.addf %495, %497 : vector<8x1xf32>
    %c0_109 = arith.constant 0 : index
    %c0_110 = arith.constant 0 : index
    %499 = vector.load %arg10[%c0_109, %c0_110] : memref<8x1xf32, #tpu.memory_space<vmem>>, vector<8x1xf32>
    tpu.vector_store %arg10[%c0_109, %c0_110], %498 {strides = array<i32>} : memref<8x1xf32, #tpu.memory_space<vmem>>, vector<8x1xf32>,
    return
  }
  func.func @transform_0(%arg0: i32) -> (i32, i32) {
    %c0_i32 = arith.constant 0 : i32
    %c0_i32_0 = arith.constant 0 : i32
    return %arg0, %c0_i32 : i32, i32
  }
  func.func @transform_1(%arg0: i32) -> (i32, i32) {
    %c0_i32 = arith.constant 0 : i32
    %c0_i32_0 = arith.constant 0 : i32
    %c0_i32_1 = arith.constant 0 : i32
    return %c0_i32, %c0_i32_0 : i32, i32
  }
  func.func @transform_2(%arg0: i32) -> (i32, i32) {
    %c0_i32 = arith.constant 0 : i32
    %c0_i32_0 = arith.constant 0 : i32
    %c0_i32_1 = arith.constant 0 : i32
    return %c0_i32, %c0_i32_0 : i32, i32
  }
  func.func @transform_3(%arg0: i32) -> (i32, i32) {
    %c0_i32 = arith.constant 0 : i32
    %c0_i32_0 = arith.constant 0 : i32
    %c0_i32_1 = arith.constant 0 : i32
    return %c0_i32, %c0_i32_0 : i32, i32
  }
  func.func @transform_4(%arg0: i32) -> (i32, i32) {
    %c0_i32 = arith.constant 0 : i32
    %c0_i32_0 = arith.constant 0 : i32
    %c0_i32_1 = arith.constant 0 : i32
    return %c0_i32, %c0_i32_0 : i32, i32
  }
  func.func @transform_5(%arg0: i32) -> (i32, i32) {
    %c0_i32 = arith.constant 0 : i32
    %c0_i32_0 = arith.constant 0 : i32
    %c0_i32_1 = arith.constant 0 : i32
    return %c0_i32, %c0_i32_0 : i32, i32
  }
  func.func @transform_6(%arg0: i32) -> (i32, i32) {
    %c0_i32 = arith.constant 0 : i32
    %c0_i32_0 = arith.constant 0 : i32
    %c0_i32_1 = arith.constant 0 : i32
    return %c0_i32, %c0_i32_0 : i32, i32
  }
  func.func @transform_7(%arg0: i32) -> (i32, i32) {
    %c0_i32 = arith.constant 0 : i32
    %c0_i32_0 = arith.constant 0 : i32
    %c0_i32_1 = arith.constant 0 : i32
    return %c0_i32, %c0_i32_0 : i32, i32
  }
  func.func @transform_8(%arg0: i32) -> (i32, i32) {
    %c0_i32 = arith.constant 0 : i32
    %c0_i32_0 = arith.constant 0 : i32
    %c0_i32_1 = arith.constant 0 : i32
    return %c0_i32, %c0_i32_0 : i32, i32
  }
  func.func @transform_9(%arg0: i32) -> (i32, i32) {
    %c0_i32 = arith.constant 0 : i32
    %c0_i32_0 = arith.constant 0 : i32
    return %arg0, %c0_i32 : i32, i32
  }
}

</mosaic_0001>

<llo_original>
// kernel: tpu_custom_call.1
$region0: #{tpu_custom_call.1}
  #allocation0 [shape = 'u32[]', space=smem, size = 0x4, offset = 0x4, fixed_abs, tag = 'smem constant byte address 0x4 - core index']
  #allocation1 [shape = 'u32[144,128]{1,0:T(1,128)}', space=vmem, size = 0x12000, scoped, tag = 'internal scratch']
  #allocation2 [shape = 'f32[64,128]{1,0:T(8,128)}', space=vmem, size = 0x8000, scoped, tag = 'scratch operand']
  #allocation3 [shape = 'f32[1,1]{1,0:T(1,128)S(1)}', space=vmem, size = 0x200, scoped, tag = 'scoped memory for tpu_custom_call.1']
  %s0 = inlined_call_operand.vmem [shape: f32[64,6], index: 0, kind: input, shape index: {}]
  %s1 = inlined_call_operand.hbm [shape: f32[6,128], index: 1, kind: input, shape index: {}]
  %s2 = inlined_call_operand.vmem [shape: f32[32,128], index: 2, kind: input, shape index: {}]
  %s3 = inlined_call_operand.vmem [shape: f32[1,128], index: 3, kind: input, shape index: {}]
  %s4 = inlined_call_operand.vmem [shape: f32[32,128], index: 4, kind: input, shape index: {}]
  %s5 = inlined_call_operand.vmem [shape: f32[32,128], index: 5, kind: input, shape index: {}]
  %s6 = inlined_call_operand.vmem [shape: f32[1,128], index: 6, kind: input, shape index: {}]
  %s7 = inlined_call_operand.vmem [shape: f32[32,1], index: 7, kind: input, shape index: {}]
  %s8 = inlined_call_operand.<no memory space> [shape: f32[1,1], index: 8, kind: input, shape index: {}]
  %s9 = inlined_call_operand.vmem [shape: f32[8,1], index: 9, kind: output, shape index: {}]
  %s10 = sld [smem:[#allocation0]]
  $region50: #{tpu_custom_call.1} parent=0
    _
  %s12 = ssub.s32 1, %s10
  %s13 = scalar_select 0, %s12, %s10
  %v14 = vstv %s8
  %15 = vst [vmem:[#allocation3] sm:$0x1] %v14
  $region1: #{tpu_custom_call.1} parent=0
    #allocation4 [shape = 'u8[4096]{0}', space=vmem, size = 0x1000, scoped, tag = 'input window, operand 1, single buffered']
    #allocation5 [shape = 's32[1]{0}', space=sflag, size = 0x4, scoped, tag = 'scoped memory for tpu_custom_call.1']
    %16 = vsyncpa [#allocation5], 0
    // Predicated region
    $region2: #{tpu_custom_call.1} parent=1 // pred_check
      _
    $region3: #{tpu_custom_call.1} parent=1 // pred_check_branch
      %18 = sbr.rel (0) target = $region5
    $region4: #{tpu_custom_call.1} parent=1 // pred_region
      _
    $region5: #{tpu_custom_call.1} parent=1 // pred_fallthru
      _
    // Predicated region
    $region6: #{tpu_custom_call.1} parent=1 // pred_check
      _
    $region7: #{tpu_custom_call.1} parent=1 // pred_check_branch
      %20 = sbr.rel (0) target = $region9
    $region8: #{tpu_custom_call.1} parent=1 // pred_region
      %s22 = ssub.s32 128, 128
      %23 = vsyncadd [#allocation5], %s22
      %s25 = sshll.u32 [#allocation4], 4
      %s26 = int_to_ptr.vmem [resolvable:$true] %s25
      %28 = dma.hbm_to_vmem [thread:$0]  %s1, 128, %s26, [#allocation5]
    $region9: #{tpu_custom_call.1} parent=1 // pred_fallthru
      _
    // Predicated region
    $region10: #{tpu_custom_call.1} parent=1 // pred_check
      _
    $region11: #{tpu_custom_call.1} parent=1 // pred_check_branch
      %30 = sbr.rel (0) target = $region13
    $region12: #{tpu_custom_call.1} parent=1 // pred_region
      _
    $region13: #{tpu_custom_call.1} parent=1 // pred_fallthru
      _
    // Predicated region
    $region14: #{tpu_custom_call.1} parent=1 // pred_check
      _
    $region15: #{tpu_custom_call.1} parent=1 // pred_check_branch
      %32 = sbr.rel (0) target = $region17
    $region16: #{tpu_custom_call.1} parent=1 // pred_region
      _
    $region17: #{tpu_custom_call.1} parent=1 // pred_fallthru
      _
    // Predicated region
    $region18: #{tpu_custom_call.1} parent=1 // pred_check
      _
    $region19: #{tpu_custom_call.1} parent=1 // pred_check_branch
      %34 = sbr.rel (0) target = $region21
    $region20: #{tpu_custom_call.1} parent=1 // pred_region
      _
    $region21: #{tpu_custom_call.1} parent=1 // pred_fallthru
      _
    // Predicated region
    $region22: #{tpu_custom_call.1} parent=1 // pred_check
      _
    $region23: #{tpu_custom_call.1} parent=1 // pred_check_branch
      %36 = sbr.rel (0) target = $region25
    $region24: #{tpu_custom_call.1} parent=1 // pred_region
      _
    $region25: #{tpu_custom_call.1} parent=1 // pred_fallthru
      _
    // Predicated region
    $region26: #{tpu_custom_call.1} parent=1 // pred_check
      _
    $region27: #{tpu_custom_call.1} parent=1 // pred_check_branch
      %38 = sbr.rel (0) target = $region29
    $region28: #{tpu_custom_call.1} parent=1 // pred_region
      _
    $region29: #{tpu_custom_call.1} parent=1 // pred_fallthru
      _
    // Predicated region
    $region30: #{tpu_custom_call.1} parent=1 // pred_check
      _
    $region31: #{tpu_custom_call.1} parent=1 // pred_check_branch
      %40 = sbr.rel (0) target = $region33
    $region32: #{tpu_custom_call.1} parent=1 // pred_region
      _
    $region33: #{tpu_custom_call.1} parent=1 // pred_fallthru
      _
    // Predicated region
    $region34: #{tpu_custom_call.1} parent=1 // pred_check
      _
    $region35: #{tpu_custom_call.1} parent=1 // pred_check_branch
      %42 = sbr.rel (0) target = $region37
    $region36: #{tpu_custom_call.1} parent=1 // pred_region
      _
    $region37: #{tpu_custom_call.1} parent=1 // pred_fallthru
      _
    // Predicated region
    $region38: #{tpu_custom_call.1} parent=1 // pred_check
      _
    $region39: #{tpu_custom_call.1} parent=1 // pred_check_branch
      %44 = sbr.rel (0) target = $region41
    $region40: #{tpu_custom_call.1} parent=1 // pred_region
      %45 = dma.done [#allocation5], 128
    $region41: #{tpu_custom_call.1} parent=1 // pred_fallthru
      _
    %v46 = vld [vmem:[%s0] sm:$0xff]
    %v47 = vld [vmem:[%s0 + $0x8] sm:$0xff]
    %v48 = vld [vmem:[%s0 + $0x10] sm:$0xff]
    %v49 = vld [vmem:[%s0 + $0x18] sm:$0xff]
    %v50 = vld [vmem:[%s0 + $0x20] sm:$0xff]
    %v51 = vld [vmem:[%s0 + $0x28] sm:$0xff]
    %v52 = vld [vmem:[%s0 + $0x30] sm:$0xff]
    %v53 = vld [vmem:[%s0 + $0x38] sm:$0xff]
    %v54 = vld [vmem:[#allocation4] sm:$0x3f]
    %v55 = vld [vmem:[%s3] sm:$0x1]
    %v57 = vlaneseq
    %v58 = vshrl.u32 %v57, 7
    %v59 = vsub.s32 0, %v58
    %v60 = vrot.slane %v55, %v59
    %vm62 = vcmask 48128
    %v64 = vsel %vm62, %v46, 0
    %v67 = vsel %vm62, %v47, 0
    %v70 = vsel %vm62, %v48, 0
    %v73 = vsel %vm62, %v49, 0
    %v76 = vsel %vm62, %v50, 0
    %v79 = vsel %vm62, %v51, 0
    %v82 = vsel %vm62, %v52, 0
    %v85 = vsel %vm62, %v53, 0
    %vm87 = vcmask 1045504
    %v89 = vsel %vm87, %v54, 0
    %91 = vmatprep.subr.mxu0 0.0
    %92 = vmatpush1.msra.mxu0 0.0
    %93 = vmatprep.subr.mxu0 0.0
    %94 = vmatpush1.msra.mxu0 0.0
    %95 = vmatprep.subr.mxu0 0.0
    %96 = vmatpush1.msra.mxu0 0.0
    %97 = vmatprep.subr.mxu0 0.0
    %98 = vmatpush1.msra.mxu0 0.0
    %99 = vmatprep.subr.mxu0 0.0
    %100 = vmatpush1.msra.mxu0 0.0
    %101 = vmatprep.subr.mxu0 0.0
    %102 = vmatpush1.msra.mxu0 0.0
    %103 = vmatprep.subr.mxu0 0.0
    %104 = vmatpush1.msra.mxu0 0.0
    %105 = vmatprep.subr.mxu0 0.0
    %106 = vmatpush1.msra.mxu0 0.0
    %107 = vmatprep.subr.mxu0 0.0
    %108 = vmatpush1.msra.mxu0 0.0
    %109 = vmatprep.subr.mxu0 0.0
    %110 = vmatpush1.msra.mxu0 0.0
    %111 = vmatprep.subr.mxu0 0.0
    %112 = vmatpush1.msra.mxu0 0.0
    %113 = vmatprep.subr.mxu0 0.0
    %114 = vmatpush1.msra.mxu0 0.0
    %115 = vmatprep.subr.mxu0 0.0
    %116 = vmatpush1.msra.mxu0 0.0
    %117 = vmatprep.subr.mxu0 0.0
    %118 = vmatpush1.msra.mxu0 0.0
    %119 = vmatprep.subr.mxu0 0.0
    %120 = vmatpush1.msra.mxu0 0.0
    %121 = vmatprep.subr.mxu0 0.0
    %122 = vmatpush1.msra.mxu0 %v89
    %123 = vmatprep.subr.mxu0 0.0
    %124 = vmatpush2.msra.mxu0 0.0
    %125 = vmatprep.subr.mxu0 0.0
    %126 = vmatpush2.msra.mxu0 0.0
    %127 = vmatprep.subr.mxu0 0.0
    %128 = vmatpush2.msra.mxu0 0.0
    %129 = vmatprep.subr.mxu0 0.0
    %130 = vmatpush2.msra.mxu0 0.0
    %131 = vmatprep.subr.mxu0 0.0
    %132 = vmatpush2.msra.mxu0 0.0
    %133 = vmatprep.subr.mxu0 0.0
    %134 = vmatpush2.msra.mxu0 0.0
    %135 = vmatprep.subr.mxu0 0.0
    %136 = vmatpush2.msra.mxu0 0.0
    %137 = vmatprep.subr.mxu0 0.0
    %138 = vmatpush2.msra.mxu0 0.0
    %139 = vmatprep.subr.mxu0 0.0
    %140 = vmatpush2.msra.mxu0 0.0
    %141 = vmatprep.subr.mxu0 0.0
    %142 = vmatpush2.msra.mxu0 0.0
    %143 = vmatprep.subr.mxu0 0.0
    %144 = vmatpush2.msra.mxu0 0.0
    %145 = vmatprep.subr.mxu0 0.0
    %146 = vmatpush2.msra.mxu0 0.0
    %147 = vmatprep.subr.mxu0 0.0
    %148 = vmatpush2.msra.mxu0 0.0
    %149 = vmatprep.subr.mxu0 0.0
    %150 = vmatpush2.msra.mxu0 0.0
    %151 = vmatprep.subr.mxu0 0.0
    %152 = vmatpush2.msra.mxu0 0.0
    %153 = vmatprep.subr.mxu0 0.0
    %154 = vmatpush2.msra.mxu0 0.0
    %155 = vmatprep.mubr.f32.mxu0 0.0
    %156 = vmatmul.mubr.f32.gmra.mxu0 %v64
    %v157 = vpop.f32.mrf.mxu0
    %v158 = vadd.f32 %v60, %v157
    %v159 = vpop.f32.mrf.mxu0
    %160 = vmatprep.mubr.f32.mxu0 0.0
    %161 = vmatmul.mubr.f32.gmra.mxu0 %v67
    %v162 = vpop.f32.mrf.mxu0
    %v163 = vadd.f32 %v60, %v162
    %v164 = vpop.f32.mrf.mxu0
    %165 = vmatprep.mubr.f32.mxu0 0.0
    %166 = vmatmul.mubr.f32.gmra.mxu0 %v70
    %v167 = vpop.f32.mrf.mxu0
    %v168 = vadd.f32 %v60, %v167
    %v169 = vpop.f32.mrf.mxu0
    %170 = vmatprep.mubr.f32.mxu0 0.0
    %171 = vmatmul.mubr.f32.gmra.mxu0 %v73
    %v172 = vpop.f32.mrf.mxu0
    %v173 = vadd.f32 %v60, %v172
    %v174 = vpop.f32.mrf.mxu0
    %175 = vmatprep.mubr.f32.mxu0 0.0
    %176 = vmatmul.mubr.f32.gmra.mxu0 %v76
    %v177 = vpop.f32.mrf.mxu0
    %v178 = vadd.f32 %v60, %v177
    %v179 = vpop.f32.mrf.mxu0
    %180 = vmatprep.mubr.f32.mxu0 0.0
    %181 = vmatmul.mubr.f32.gmra.mxu0 %v79
    %v182 = vpop.f32.mrf.mxu0
    %v183 = vadd.f32 %v60, %v182
    %v184 = vpop.f32.mrf.mxu0
    %185 = vmatprep.mubr.f32.mxu0 0.0
    %186 = vmatmul.mubr.f32.gmra.mxu0 %v82
    %v187 = vpop.f32.mrf.mxu0
    %v188 = vadd.f32 %v60, %v187
    %v189 = vpop.f32.mrf.mxu0
    %190 = vmatprep.mubr.f32.mxu0 0.0
    %191 = vmatmul.mubr.f32.gmra.mxu0 %v85
    %v192 = vpop.f32.mrf.mxu0
    %v193 = vadd.f32 %v60, %v192
    %v194 = vpop.f32.mrf.mxu0
    %195 = vdwg.mxu0
    %196 = vst [vmem:[#allocation2] sm:$0xff] %v158
    %197 = vst [vmem:[#allocation2 + $0x8] sm:$0xff] %v163
    %198 = vst [vmem:[#allocation2 + $0x10] sm:$0xff] %v168
    %199 = vst [vmem:[#allocation2 + $0x18] sm:$0xff] %v173
    %200 = vst [vmem:[#allocation2 + $0x20] sm:$0xff] %v178
    %201 = vst [vmem:[#allocation2 + $0x28] sm:$0xff] %v183
    %202 = vst [vmem:[#allocation2 + $0x30] sm:$0xff] %v188
    %203 = vst [vmem:[#allocation2 + $0x38] sm:$0xff] %v193
    %v204 = vld [vmem:[%s2] sm:$0xff]
    %v205 = vld [vmem:[%s2 + $0x8] sm:$0xff]
    %v206 = vld [vmem:[%s2 + $0x10] sm:$0xff]
    %v207 = vld [vmem:[%s2 + $0x18] sm:$0xff]
    %v208 = vld [vmem:[%s4] sm:$0xff]
    %v209 = vld [vmem:[%s4 + $0x8] sm:$0xff]
    %v210 = vld [vmem:[%s4 + $0x10] sm:$0xff]
    %v211 = vld [vmem:[%s4 + $0x18] sm:$0xff]
    %v212 = vld [vmem:[%s5] sm:$0xff]
    %v213 = vld [vmem:[%s5 + $0x8] sm:$0xff]
    %v214 = vld [vmem:[%s5 + $0x10] sm:$0xff]
    %v215 = vld [vmem:[%s5 + $0x18] sm:$0xff]
    %v216 = vld [vmem:[%s6] sm:$0x1]
    %v218 = vlaneseq
    %v219 = vshrl.u32 %v218, 7
    %v220 = vsub.s32 0, %v219
    %v221 = vrot.slane %v216, %v220
    %v223 = vld [vmem:[#allocation2] sm:$0xff]
    %vm224 = vcmask 261120
    %v226 = vsel %vm224, 0.0, 0
    %228 = vmatprep.subr.mxu0 0.0
    %229 = vmatpush1.msra.mxu0 0.0
    %230 = vmatprep.subr.mxu0 0.0
    %231 = vmatpush1.msra.mxu0 0.0
    %232 = vmatprep.subr.mxu0 0.0
    %233 = vmatpush1.msra.mxu0 0.0
    %234 = vmatprep.subr.mxu0 0.0
    %235 = vmatpush1.msra.mxu0 0.0
    %236 = vmatprep.subr.mxu0 0.0
    %237 = vmatpush1.msra.mxu0 0.0
    %238 = vmatprep.subr.mxu0 0.0
    %239 = vmatpush1.msra.mxu0 0.0
    %240 = vmatprep.subr.mxu0 0.0
    %241 = vmatpush1.msra.mxu0 0.0
    %242 = vmatprep.subr.mxu0 0.0
    %243 = vmatpush1.msra.mxu0 0.0
    %244 = vmatprep.subr.mxu0 0.0
    %245 = vmatpush1.msra.mxu0 0.0
    %246 = vmatprep.subr.mxu0 0.0
    %247 = vmatpush1.msra.mxu0 0.0
    %248 = vmatprep.subr.mxu0 0.0
    %249 = vmatpush1.msra.mxu0 0.0
    %250 = vmatprep.subr.mxu0 0.0
    %251 = vmatpush1.msra.mxu0 0.0
    %252 = vmatprep.subr.mxu0 0.0
    %253 = vmatpush1.msra.mxu0 %v207
    %254 = vmatprep.subr.mxu0 0.0
    %255 = vmatpush1.msra.mxu0 %v206
    %256 = vmatprep.subr.mxu0 0.0
    %257 = vmatpush1.msra.mxu0 %v205
    %258 = vmatprep.subr.mxu0 0.0
    %259 = vmatpush1.msra.mxu0 %v204
    %260 = vmatprep.subr.mxu0 0.0
    %261 = vmatpush2.msra.mxu0 0.0
    %262 = vmatprep.subr.mxu0 0.0
    %263 = vmatpush2.msra.mxu0 0.0
    %264 = vmatprep.subr.mxu0 0.0
    %265 = vmatpush2.msra.mxu0 0.0
    %266 = vmatprep.subr.mxu0 0.0
    %267 = vmatpush2.msra.mxu0 0.0
    %268 = vmatprep.subr.mxu0 0.0
    %269 = vmatpush2.msra.mxu0 0.0
    %270 = vmatprep.subr.mxu0 0.0
    %271 = vmatpush2.msra.mxu0 0.0
    %272 = vmatprep.subr.mxu0 0.0
    %273 = vmatpush2.msra.mxu0 0.0
    %274 = vmatprep.subr.mxu0 0.0
    %275 = vmatpush2.msra.mxu0 0.0
    %276 = vmatprep.subr.mxu0 0.0
    %277 = vmatpush2.msra.mxu0 0.0
    %278 = vmatprep.subr.mxu0 0.0
    %279 = vmatpush2.msra.mxu0 0.0
    %280 = vmatprep.subr.mxu0 0.0
    %281 = vmatpush2.msra.mxu0 0.0
    %282 = vmatprep.subr.mxu0 0.0
    %283 = vmatpush2.msra.mxu0 0.0
    %284 = vmatprep.subr.mxu0 0.0
    %285 = vmatpush2.msra.mxu0 0.0
    %286 = vmatprep.subr.mxu0 0.0
    %287 = vmatpush2.msra.mxu0 0.0
    %288 = vmatprep.subr.mxu0 0.0
    %289 = vmatpush2.msra.mxu0 0.0
    %290 = vmatprep.subr.mxu0 0.0
    %291 = vmatpush2.msra.mxu0 0.0
    %292 = vmatprep.mubr.f32.mxu0 0.0
    %293 = vmatmul.mubr.f32.gmra.mxu0 %v226
    %v294 = vpop.f32.mrf.mxu0
    %v295 = vadd.f32 0.0, %v294
    %v296 = vpop.f32.mrf.mxu0
    %297 = vdwg.mxu0
    %v298 = vadd.f32 %v223, %v295
    %299 = vmatprep.subr.mxu0 0.0
    %300 = vmatpush1.msra.mxu0 0.0
    %301 = vmatprep.subr.mxu0 0.0
    %302 = vmatpush1.msra.mxu0 0.0
    %303 = vmatprep.subr.mxu0 0.0
    %304 = vmatpush1.msra.mxu0 0.0
    %305 = vmatprep.subr.mxu0 0.0
    %306 = vmatpush1.msra.mxu0 0.0
    %307 = vmatprep.subr.mxu0 0.0
    %308 = vmatpush1.msra.mxu0 0.0
    %309 = vmatprep.subr.mxu0 0.0
    %310 = vmatpush1.msra.mxu0 0.0
    %311 = vmatprep.subr.mxu0 0.0
    %312 = vmatpush1.msra.mxu0 0.0
    %313 = vmatprep.subr.mxu0 0.0
    %314 = vmatpush1.msra.mxu0 0.0
    %315 = vmatprep.subr.mxu0 0.0
    %316 = vmatpush1.msra.mxu0 0.0
    %317 = vmatprep.subr.mxu0 0.0
    %318 = vmatpush1.msra.mxu0 0.0
    %319 = vmatprep.subr.mxu0 0.0
    %320 = vmatpush1.msra.mxu0 0.0
    %321 = vmatprep.subr.mxu0 0.0
    %322 = vmatpush1.msra.mxu0 0.0
    %323 = vmatprep.subr.mxu0 0.0
    %324 = vmatpush1.msra.mxu0 %v215
    %325 = vmatprep.subr.mxu0 0.0
    %326 = vmatpush1.msra.mxu0 %v214
    %327 = vmatprep.subr.mxu0 0.0
    %328 = vmatpush1.msra.mxu0 %v213
    %329 = vmatprep.subr.mxu0 0.0
    %330 = vmatpush1.msra.mxu0 %v212
    %331 = vmatprep.subr.mxu0 0.0
    %332 = vmatpush2.msra.mxu0 0.0
    %333 = vmatprep.subr.mxu0 0.0
    %334 = vmatpush2.msra.mxu0 0.0
    %335 = vmatprep.subr.mxu0 0.0
    %336 = vmatpush2.msra.mxu0 0.0
    %337 = vmatprep.subr.mxu0 0.0
    %338 = vmatpush2.msra.mxu0 0.0
    %339 = vmatprep.subr.mxu0 0.0
    %340 = vmatpush2.msra.mxu0 0.0
    %341 = vmatprep.subr.mxu0 0.0
    %342 = vmatpush2.msra.mxu0 0.0
    %343 = vmatprep.subr.mxu0 0.0
    %344 = vmatpush2.msra.mxu0 0.0
    %345 = vmatprep.subr.mxu0 0.0
    %346 = vmatpush2.msra.mxu0 0.0
    %347 = vmatprep.subr.mxu0 0.0
    %348 = vmatpush2.msra.mxu0 0.0
    %349 = vmatprep.subr.mxu0 0.0
    %350 = vmatpush2.msra.mxu0 0.0
    %351 = vmatprep.subr.mxu0 0.0
    %352 = vmatpush2.msra.mxu0 0.0
    %353 = vmatprep.subr.mxu0 0.0
    %354 = vmatpush2.msra.mxu0 0.0
    %355 = vmatprep.subr.mxu0 0.0
    %356 = vmatpush2.msra.mxu0 0.0
    %357 = vmatprep.subr.mxu0 0.0
    %358 = vmatpush2.msra.mxu0 0.0
    %359 = vmatprep.subr.mxu0 0.0
    %360 = vmatpush2.msra.mxu0 0.0
    %361 = vmatprep.subr.mxu0 0.0
    %362 = vmatpush2.msra.mxu0 0.0
    %363 = vmatprep.mubr.f32.mxu0 0.0
    %364 = vmatmul.mubr.f32.gmra.mxu0 %v226
    %v365 = vpop.f32.mrf.mxu0
    %v366 = vadd.f32 %v221, %v365
    %v367 = vpop.f32.mrf.mxu0
    %368 = vdwg.mxu0
    %v369 = vxor.u32 %v298, 2147483648
    %v370 = vmul.f32 %v369, 1.442695
    %v371 = vpow.pop %v370
    %v372 = vadd.f32 %v371, 1.0
    %v373 = vrcp.pop %v372
    %v374 = vmul.f32 1.0, %v373
    %v375 = vtanh.pop %v298
    %v376 = vmul.f32 %v374, 0.0
    %378 = vrot.lane.b32.xlu0 %v375, 64
    %v379 = vpop.permute.xlu0 %378
    %v381 = vmul.f32 %v374, %v379
    %383 = vrot.lane.b32.xlu0 %v381, 32
    %v384 = vpop.permute.xlu0 %383
    %v386 = vadd.f32 %v376, %v384
    %v387 = vtanh.pop %v386
    %389 = vrot.lane.b32.xlu0 %v387, 64
    %v390 = vpop.permute.xlu0 %389
    %v392 = vmul.f32 %v374, %v390
    %394 = vrot.lane.b32.xlu0 %v392, 32
    %v395 = vpop.permute.xlu0 %394
    %v396 = vsel %vm224, %v395, 0
    %398 = vmatprep.subr.mxu0 0.0
    %399 = vmatpush1.msra.mxu0 0.0
    %400 = vmatprep.subr.mxu0 0.0
    %401 = vmatpush1.msra.mxu0 0.0
    %402 = vmatprep.subr.mxu0 0.0
    %403 = vmatpush1.msra.mxu0 0.0
    %404 = vmatprep.subr.mxu0 0.0
    %405 = vmatpush1.msra.mxu0 0.0
    %406 = vmatprep.subr.mxu0 0.0
    %407 = vmatpush1.msra.mxu0 0.0
    %408 = vmatprep.subr.mxu0 0.0
    %409 = vmatpush1.msra.mxu0 0.0
    %410 = vmatprep.subr.mxu0 0.0
    %411 = vmatpush1.msra.mxu0 0.0
    %412 = vmatprep.subr.mxu0 0.0
    %413 = vmatpush1.msra.mxu0 0.0
    %414 = vmatprep.subr.mxu0 0.0
    %415 = vmatpush1.msra.mxu0 0.0
    %416 = vmatprep.subr.mxu0 0.0
    %417 = vmatpush1.msra.mxu0 0.0
    %418 = vmatprep.subr.mxu0 0.0
    %419 = vmatpush1.msra.mxu0 0.0
    %420 = vmatprep.subr.mxu0 0.0
    %421 = vmatpush1.msra.mxu0 0.0
    %422 = vmatprep.subr.mxu0 0.0
    %423 = vmatpush1.msra.mxu0 %v211
    %424 = vmatprep.subr.mxu0 0.0
    %425 = vmatpush1.msra.mxu0 %v210
    %426 = vmatprep.subr.mxu0 0.0
    %427 = vmatpush1.msra.mxu0 %v209
    %428 = vmatprep.subr.mxu0 0.0
    %429 = vmatpush1.msra.mxu0 %v208
    %430 = vmatprep.subr.mxu0 0.0
    %431 = vmatpush2.msra.mxu0 0.0
    %432 = vmatprep.subr.mxu0 0.0
    %433 = vmatpush2.msra.mxu0 0.0
    %434 = vmatprep.subr.mxu0 0.0
    %435 = vmatpush2.msra.mxu0 0.0
    %436 = vmatprep.subr.mxu0 0.0
    %437 = vmatpush2.msra.mxu0 0.0
    %438 = vmatprep.subr.mxu0 0.0
    %439 = vmatpush2.msra.mxu0 0.0
    %440 = vmatprep.subr.mxu0 0.0
    %441 = vmatpush2.msra.mxu0 0.0
    %442 = vmatprep.subr.mxu0 0.0
    %443 = vmatpush2.msra.mxu0 0.0
    %444 = vmatprep.subr.mxu0 0.0
    %445 = vmatpush2.msra.mxu0 0.0
    %446 = vmatprep.subr.mxu0 0.0
    %447 = vmatpush2.msra.mxu0 0.0
    %448 = vmatprep.subr.mxu0 0.0
    %449 = vmatpush2.msra.mxu0 0.0
    %450 = vmatprep.subr.mxu0 0.0
    %451 = vmatpush2.msra.mxu0 0.0
    %452 = vmatprep.subr.mxu0 0.0
    %453 = vmatpush2.msra.mxu0 0.0
    %454 = vmatprep.subr.mxu0 0.0
    %455 = vmatpush2.msra.mxu0 0.0
    %456 = vmatprep.subr.mxu0 0.0
    %457 = vmatpush2.msra.mxu0 0.0
    %458 = vmatprep.subr.mxu0 0.0
    %459 = vmatpush2.msra.mxu0 0.0
    %460 = vmatprep.subr.mxu0 0.0
    %461 = vmatpush2.msra.mxu0 0.0
    %462 = vmatprep.mubr.f32.mxu0 0.0
    %463 = vmatmul.mubr.f32.gmra.mxu0 %v396
    %v464 = vpop.f32.mrf.mxu0
    %v465 = vadd.f32 0.0, %v464
    %v466 = vpop.f32.mrf.mxu0
    %467 = vdwg.mxu0
    %v468 = vadd.f32 %v366, %v465
    %v469 = vxor.u32 %v468, 2147483648
    %v470 = vmul.f32 %v469, 1.442695
    %v471 = vpow.pop %v470
    %v472 = vadd.f32 %v471, 1.0
    %v473 = vrcp.pop %v472
    %v474 = vmul.f32 1.0, %v473
    %v475 = vtanh.pop %v468
    %v476 = vmul.f32 %v474, 0.0
    %478 = vrot.lane.b32.xlu0 %v475, 64
    %v479 = vpop.permute.xlu0 %478
    %v481 = vmul.f32 %v474, %v479
    %483 = vrot.lane.b32.xlu0 %v481, 32
    %v484 = vpop.permute.xlu0 %483
    %v486 = vadd.f32 %v476, %v484
    %v487 = vtanh.pop %v486
    %489 = vrot.lane.b32.xlu0 %v487, 64
    %v490 = vpop.permute.xlu0 %489
    %v492 = vmul.f32 %v474, %v490
    %s493 = scalar_lea.vmem [#allocation2], 8
    %v494 = vld [vmem:[%s493] sm:$0xff]
    %495 = vmatprep.subr.mxu0 0.0
    %496 = vmatpush1.msra.mxu0 0.0
    %497 = vmatprep.subr.mxu0 0.0
    %498 = vmatpush1.msra.mxu0 0.0
    %499 = vmatprep.subr.mxu0 0.0
    %500 = vmatpush1.msra.mxu0 0.0
    %501 = vmatprep.subr.mxu0 0.0
    %502 = vmatpush1.msra.mxu0 0.0
    %503 = vmatprep.subr.mxu0 0.0
    %504 = vmatpush1.msra.mxu0 0.0
    %505 = vmatprep.subr.mxu0 0.0
    %506 = vmatpush1.msra.mxu0 0.0
    %507 = vmatprep.subr.mxu0 0.0
    %508 = vmatpush1.msra.mxu0 0.0
    %509 = vmatprep.subr.mxu0 0.0
    %510 = vmatpush1.msra.mxu0 0.0
    %511 = vmatprep.subr.mxu0 0.0
    %512 = vmatpush1.msra.mxu0 0.0
    %513 = vmatprep.subr.mxu0 0.0
    %514 = vmatpush1.msra.mxu0 0.0
    %515 = vmatprep.subr.mxu0 0.0
    %516 = vmatpush1.msra.mxu0 0.0
    %517 = vmatprep.subr.mxu0 0.0
    %518 = vmatpush1.msra.mxu0 0.0
    %519 = vmatprep.subr.mxu0 0.0
    %520 = vmatpush1.msra.mxu0 %v207
    %521 = vmatprep.subr.mxu0 0.0
    %522 = vmatpush1.msra.mxu0 %v206
    %523 = vmatprep.subr.mxu0 0.0
    %524 = vmatpush1.msra.mxu0 %v205
    %525 = vmatprep.subr.mxu0 0.0
    %526 = vmatpush1.msra.mxu0 %v204
    %527 = vmatprep.subr.mxu0 0.0
    %528 = vmatpush2.msra.mxu0 0.0
    %529 = vmatprep.subr.mxu0 0.0
    %530 = vmatpush2.msra.mxu0 0.0
    %531 = vmatprep.subr.mxu0 0.0
    %532 = vmatpush2.msra.mxu0 0.0
    %533 = vmatprep.subr.mxu0 0.0
    %534 = vmatpush2.msra.mxu0 0.0
    %535 = vmatprep.subr.mxu0 0.0
    %536 = vmatpush2.msra.mxu0 0.0
    %537 = vmatprep.subr.mxu0 0.0
    %538 = vmatpush2.msra.mxu0 0.0
    %539 = vmatprep.subr.mxu0 0.0
    %540 = vmatpush2.msra.mxu0 0.0
    %541 = vmatprep.subr.mxu0 0.0
    %542 = vmatpush2.msra.mxu0 0.0
    %543 = vmatprep.subr.mxu0 0.0
    %544 = vmatpush2.msra.mxu0 0.0
    %545 = vmatprep.subr.mxu0 0.0
    %546 = vmatpush2.msra.mxu0 0.0
    %547 = vmatprep.subr.mxu0 0.0
    %548 = vmatpush2.msra.mxu0 0.0
    %549 = vmatprep.subr.mxu0 0.0
    %550 = vmatpush2.msra.mxu0 0.0
    %551 = vmatprep.subr.mxu0 0.0
    %552 = vmatpush2.msra.mxu0 0.0
    %553 = vmatprep.subr.mxu0 0.0
    %554 = vmatpush2.msra.mxu0 0.0
    %555 = vmatprep.subr.mxu0 0.0
    %556 = vmatpush2.msra.mxu0 0.0
    %557 = vmatprep.subr.mxu0 0.0
    %558 = vmatpush2.msra.mxu0 0.0
    %559 = vmatprep.mubr.f32.mxu0 0.0
    %560 = vmatmul.mubr.f32.gmra.mxu0 %v396
    %v561 = vpop.f32.mrf.mxu0
    %v562 = vadd.f32 0.0, %v561
    %v563 = vpop.f32.mrf.mxu0
    %564 = vdwg.mxu0
    %v565 = vadd.f32 %v494, %v562
    %567 = vrot.lane.b32.xlu0 %v492, 32
    %v568 = vpop.permute.xlu0 %567
    %v569 = vsel %vm224, %v568, 0
    %571 = vmatprep.subr.mxu0 0.0
    %572 = vmatpush1.msra.mxu0 0.0
    %573 = vmatprep.subr.mxu0 0.0
    %574 = vmatpush1.msra.mxu0 0.0
    %575 = vmatprep.subr.mxu0 0.0
    %576 = vmatpush1.msra.mxu0 0.0
    %577 = vmatprep.subr.mxu0 0.0
    %578 = vmatpush1.msra.mxu0 0.0
    %579 = vmatprep.subr.mxu0 0.0
    %580 = vmatpush1.msra.mxu0 0.0
    %581 = vmatprep.subr.mxu0 0.0
    %582 = vmatpush1.msra.mxu0 0.0
    %583 = vmatprep.subr.mxu0 0.0
    %584 = vmatpush1.msra.mxu0 0.0
    %585 = vmatprep.subr.mxu0 0.0
    %586 = vmatpush1.msra.mxu0 0.0
    %587 = vmatprep.subr.mxu0 0.0
    %588 = vmatpush1.msra.mxu0 0.0
    %589 = vmatprep.subr.mxu0 0.0
    %590 = vmatpush1.msra.mxu0 0.0
    %591 = vmatprep.subr.mxu0 0.0
    %592 = vmatpush1.msra.mxu0 0.0
    %593 = vmatprep.subr.mxu0 0.0
    %594 = vmatpush1.msra.mxu0 0.0
    %595 = vmatprep.subr.mxu0 0.0
    %596 = vmatpush1.msra.mxu0 %v215
    %597 = vmatprep.subr.mxu0 0.0
    %598 = vmatpush1.msra.mxu0 %v214
    %599 = vmatprep.subr.mxu0 0.0
    %600 = vmatpush1.msra.mxu0 %v213
    %601 = vmatprep.subr.mxu0 0.0
    %602 = vmatpush1.msra.mxu0 %v212
    %603 = vmatprep.subr.mxu0 0.0
    %604 = vmatpush2.msra.mxu0 0.0
    %605 = vmatprep.subr.mxu0 0.0
    %606 = vmatpush2.msra.mxu0 0.0
    %607 = vmatprep.subr.mxu0 0.0
    %608 = vmatpush2.msra.mxu0 0.0
    %609 = vmatprep.subr.mxu0 0.0
    %610 = vmatpush2.msra.mxu0 0.0
    %611 = vmatprep.subr.mxu0 0.0
    %612 = vmatpush2.msra.mxu0 0.0
    %613 = vmatprep.subr.mxu0 0.0
    %614 = vmatpush2.msra.mxu0 0.0
    %615 = vmatprep.subr.mxu0 0.0
    %616 = vmatpush2.msra.mxu0 0.0
    %617 = vmatprep.subr.mxu0 0.0
    %618 = vmatpush2.msra.mxu0 0.0
    %619 = vmatprep.subr.mxu0 0.0
    %620 = vmatpush2.msra.mxu0 0.0
    %621 = vmatprep.subr.mxu0 0.0
    %622 = vmatpush2.msra.mxu0 0.0
    %623 = vmatprep.subr.mxu0 0.0
    %624 = vmatpush2.msra.mxu0 0.0
    %625 = vmatprep.subr.mxu0 0.0
    %626 = vmatpush2.msra.mxu0 0.0
    %627 = vmatprep.subr.mxu0 0.0
    %628 = vmatpush2.msra.mxu0 0.0
    %629 = vmatprep.subr.mxu0 0.0
    %630 = vmatpush2.msra.mxu0 0.0
    %631 = vmatprep.subr.mxu0 0.0
    %632 = vmatpush2.msra.mxu0 0.0
    %633 = vmatprep.subr.mxu0 0.0
    %634 = vmatpush2.msra.mxu0 0.0
    %635 = vmatprep.mubr.f32.mxu0 0.0
    %636 = vmatmul.mubr.f32.gmra.mxu0 %v569
    %v637 = vpop.f32.mrf.mxu0
    %v638 = vadd.f32 %v221, %v637
    %v639 = vpop.f32.mrf.mxu0
    %640 = vdwg.mxu0
    %v641 = vxor.u32 %v565, 2147483648
    %v642 = vmul.f32 %v641, 1.442695
    %v643 = vpow.pop %v642
    %v644 = vadd.f32 %v643, 1.0
    %v645 = vrcp.pop %v644
    %v646 = vmul.f32 1.0, %v645
    %v647 = vtanh.pop %v565
    %v648 = vmul.f32 %v646, %v386
    %650 = vrot.lane.b32.xlu0 %v647, 64
    %v651 = vpop.permute.xlu0 %650
    %v653 = vmul.f32 %v646, %v651
    %655 = vrot.lane.b32.xlu0 %v653, 32
    %v656 = vpop.permute.xlu0 %655
    %v658 = vadd.f32 %v648, %v656
    %v659 = vtanh.pop %v658
    %661 = vrot.lane.b32.xlu0 %v659, 64
    %v662 = vpop.permute.xlu0 %661
    %v664 = vmul.f32 %v646, %v662
    %666 = vrot.lane.b32.xlu0 %v664, 32
    %v667 = vpop.permute.xlu0 %666
    %v668 = vsel %vm224, %v667, 0
    %670 = vmatprep.subr.mxu0 0.0
    %671 = vmatpush1.msra.mxu0 0.0
    %672 = vmatprep.subr.mxu0 0.0
    %673 = vmatpush1.msra.mxu0 0.0
    %674 = vmatprep.subr.mxu0 0.0
    %675 = vmatpush1.msra.mxu0 0.0
    %676 = vmatprep.subr.mxu0 0.0
    %677 = vmatpush1.msra.mxu0 0.0
    %678 = vmatprep.subr.mxu0 0.0
    %679 = vmatpush1.msra.mxu0 0.0
    %680 = vmatprep.subr.mxu0 0.0
    %681 = vmatpush1.msra.mxu0 0.0
    %682 = vmatprep.subr.mxu0 0.0
    %683 = vmatpush1.msra.mxu0 0.0
    %684 = vmatprep.subr.mxu0 0.0
    %685 = vmatpush1.msra.mxu0 0.0
    %686 = vmatprep.subr.mxu0 0.0
    %687 = vmatpush1.msra.mxu0 0.0
    %688 = vmatprep.subr.mxu0 0.0
    %689 = vmatpush1.msra.mxu0 0.0
    %690 = vmatprep.subr.mxu0 0.0
    %691 = vmatpush1.msra.mxu0 0.0
    %692 = vmatprep.subr.mxu0 0.0
    %693 = vmatpush1.msra.mxu0 0.0
    %694 = vmatprep.subr.mxu0 0.0
    %695 = vmatpush1.msra.mxu0 %v211
    %696 = vmatprep.subr.mxu0 0.0
    %697 = vmatpush1.msra.mxu0 %v210
    %698 = vmatprep.subr.mxu0 0.0
    %699 = vmatpush1.msra.mxu0 %v209
    %700 = vmatprep.subr.mxu0 0.0
    %701 = vmatpush1.msra.mxu0 %v208
    %702 = vmatprep.subr.mxu0 0.0
    %703 = vmatpush2.msra.mxu0 0.0
    %704 = vmatprep.subr.mxu0 0.0
    %705 = vmatpush2.msra.mxu0 0.0
    %706 = vmatprep.subr.mxu0 0.0
    %707 = vmatpush2.msra.mxu0 0.0
    %708 = vmatprep.subr.mxu0 0.0
    %709 = vmatpush2.msra.mxu0 0.0
    %710 = vmatprep.subr.mxu0 0.0
    %711 = vmatpush2.msra.mxu0 0.0
    %712 = vmatprep.subr.mxu0 0.0
    %713 = vmatpush2.msra.mxu0 0.0
    %714 = vmatprep.subr.mxu0 0.0
    %715 = vmatpush2.msra.mxu0 0.0
    %716 = vmatprep.subr.mxu0 0.0
    %717 = vmatpush2.msra.mxu0 0.0
    %718 = vmatprep.subr.mxu0 0.0
    %719 = vmatpush2.msra.mxu0 0.0
    %720 = vmatprep.subr.mxu0 0.0
    %721 = vmatpush2.msra.mxu0 0.0
    %722 = vmatprep.subr.mxu0 0.0
    %723 = vmatpush2.msra.mxu0 0.0
    %724 = vmatprep.subr.mxu0 0.0
    %725 = vmatpush2.msra.mxu0 0.0
    %726 = vmatprep.subr.mxu0 0.0
    %727 = vmatpush2.msra.mxu0 0.0
    %728 = vmatprep.subr.mxu0 0.0
    %729 = vmatpush2.msra.mxu0 0.0
    %730 = vmatprep.subr.mxu0 0.0
    %731 = vmatpush2.msra.mxu0 0.0
    %732 = vmatprep.subr.mxu0 0.0
    %733 = vmatpush2.msra.mxu0 0.0
    %734 = vmatprep.mubr.f32.mxu0 0.0
    %735 = vmatmul.mubr.f32.gmra.mxu0 %v668
    %v736 = vpop.f32.mrf.mxu0
    %v737 = vadd.f32 0.0, %v736
    %v738 = vpop.f32.mrf.mxu0
    %739 = vdwg.mxu0
    %v740 = vadd.f32 %v638, %v737
    %v741 = vxor.u32 %v740, 2147483648
    %v742 = vmul.f32 %v741, 1.442695
    %v743 = vpow.pop %v742
    %v744 = vadd.f32 %v743, 1.0
    %v745 = vrcp.pop %v744
    %v746 = vmul.f32 1.0, %v745
    %v747 = vtanh.pop %v740
    %v748 = vmul.f32 %v746, %v486
    %750 = vrot.lane.b32.xlu0 %v747, 64
    %v751 = vpop.permute.xlu0 %750
    %v753 = vmul.f32 %v746, %v751
    %755 = vrot.lane.b32.xlu0 %v753, 32
    %v756 = vpop.permute.xlu0 %755
    %v758 = vadd.f32 %v748, %v756
    %v759 = vtanh.pop %v758
    %761 = vrot.lane.b32.xlu0 %v759, 64
    %v762 = vpop.permute.xlu0 %761
    %v764 = vmul.f32 %v746, %v762
    %s765 = scalar_lea.vmem [#allocation2], 16
    %v766 = vld [vmem:[%s765] sm:$0xff]
    %767 = vmatprep.subr.mxu0 0.0
    %768 = vmatpush1.msra.mxu0 0.0
    %769 = vmatprep.subr.mxu0 0.0
    %770 = vmatpush1.msra.mxu0 0.0
    %771 = vmatprep.subr.mxu0 0.0
    %772 = vmatpush1.msra.mxu0 0.0
    %773 = vmatprep.subr.mxu0 0.0
    %774 = vmatpush1.msra.mxu0 0.0
    %775 = vmatprep.subr.mxu0 0.0
    %776 = vmatpush1.msra.mxu0 0.0
    %777 = vmatprep.subr.mxu0 0.0
    %778 = vmatpush1.msra.mxu0 0.0
    %779 = vmatprep.subr.mxu0 0.0
    %780 = vmatpush1.msra.mxu0 0.0
    %781 = vmatprep.subr.mxu0 0.0
    %782 = vmatpush1.msra.mxu0 0.0
    %783 = vmatprep.subr.mxu0 0.0
    %784 = vmatpush1.msra.mxu0 0.0
    %785 = vmatprep.subr.mxu0 0.0
    %786 = vmatpush1.msra.mxu0 0.0
    %787 = vmatprep.subr.mxu0 0.0
    %788 = vmatpush1.msra.mxu0 0.0
    %789 = vmatprep.subr.mxu0 0.0
    %790 = vmatpush1.msra.mxu0 0.0
    %791 = vmatprep.subr.mxu0 0.0
    %792 = vmatpush1.msra.mxu0 %v207
    %793 = vmatprep.subr.mxu0 0.0
    %794 = vmatpush1.msra.mxu0 %v206
    %795 = vmatprep.subr.mxu0 0.0
    %796 = vmatpush1.msra.mxu0 %v205
    %797 = vmatprep.subr.mxu0 0.0
    %798 = vmatpush1.msra.mxu0 %v204
    %799 = vmatprep.subr.mxu0 0.0
    %800 = vmatpush2.msra.mxu0 0.0
    %801 = vmatprep.subr.mxu0 0.0
    %802 = vmatpush2.msra.mxu0 0.0
    %803 = vmatprep.subr.mxu0 0.0
    %804 = vmatpush2.msra.mxu0 0.0
    %805 = vmatprep.subr.mxu0 0.0
    %806 = vmatpush2.msra.mxu0 0.0
    %807 = vmatprep.subr.mxu0 0.0
    %808 = vmatpush2.msra.mxu0 0.0
    %809 = vmatprep.subr.mxu0 0.0
    %810 = vmatpush2.msra.mxu0 0.0
    %811 = vmatprep.subr.mxu0 0.0
    %812 = vmatpush2.msra.mxu0 0.0
    %813 = vmatprep.subr.mxu0 0.0
    %814 = vmatpush2.msra.mxu0 0.0
    %815 = vmatprep.subr.mxu0 0.0
    %816 = vmatpush2.msra.mxu0 0.0
    %817 = vmatprep.subr.mxu0 0.0
    %818 = vmatpush2.msra.mxu0 0.0
    %819 = vmatprep.subr.mxu0 0.0
    %820 = vmatpush2.msra.mxu0 0.0
    %821 = vmatprep.subr.mxu0 0.0
    %822 = vmatpush2.msra.mxu0 0.0
    %823 = vmatprep.subr.mxu0 0.0
    %824 = vmatpush2.msra.mxu0 0.0
    %825 = vmatprep.subr.mxu0 0.0
    %826 = vmatpush2.msra.mxu0 0.0
    %827 = vmatprep.subr.mxu0 0.0
    %828 = vmatpush2.msra.mxu0 0.0
    %829 = vmatprep.subr.mxu0 0.0
    %830 = vmatpush2.msra.mxu0 0.0
    %831 = vmatprep.mubr.f32.mxu0 0.0
    %832 = vmatmul.mubr.f32.gmra.mxu0 %v668
    %v833 = vpop.f32.mrf.mxu0
    %v834 = vadd.f32 0.0, %v833
    %v835 = vpop.f32.mrf.mxu0
    %836 = vdwg.mxu0
    %v837 = vadd.f32 %v766, %v834
    %839 = vrot.lane.b32.xlu0 %v764, 32
    %v840 = vpop.permute.xlu0 %839
    %v841 = vsel %vm224, %v840, 0
    %843 = vmatprep.subr.mxu0 0.0
    %844 = vmatpush1.msra.mxu0 0.0
    %845 = vmatprep.subr.mxu0 0.0
    %846 = vmatpush1.msra.mxu0 0.0
    %847 = vmatprep.subr.mxu0 0.0
    %848 = vmatpush1.msra.mxu0 0.0
    %849 = vmatprep.subr.mxu0 0.0
    %850 = vmatpush1.msra.mxu0 0.0
    %851 = vmatprep.subr.mxu0 0.0
    %852 = vmatpush1.msra.mxu0 0.0
    %853 = vmatprep.subr.mxu0 0.0
    %854 = vmatpush1.msra.mxu0 0.0
    %855 = vmatprep.subr.mxu0 0.0
    %856 = vmatpush1.msra.mxu0 0.0
    %857 = vmatprep.subr.mxu0 0.0
    %858 = vmatpush1.msra.mxu0 0.0
    %859 = vmatprep.subr.mxu0 0.0
    %860 = vmatpush1.msra.mxu0 0.0
    %861 = vmatprep.subr.mxu0 0.0
    %862 = vmatpush1.msra.mxu0 0.0
    %863 = vmatprep.subr.mxu0 0.0
    %864 = vmatpush1.msra.mxu0 0.0
    %865 = vmatprep.subr.mxu0 0.0
    %866 = vmatpush1.msra.mxu0 0.0
    %867 = vmatprep.subr.mxu0 0.0
    %868 = vmatpush1.msra.mxu0 %v215
    %869 = vmatprep.subr.mxu0 0.0
    %870 = vmatpush1.msra.mxu0 %v214
    %871 = vmatprep.subr.mxu0 0.0
    %872 = vmatpush1.msra.mxu0 %v213
    %873 = vmatprep.subr.mxu0 0.0
    %874 = vmatpush1.msra.mxu0 %v212
    %875 = vmatprep.subr.mxu0 0.0
    %876 = vmatpush2.msra.mxu0 0.0
    %877 = vmatprep.subr.mxu0 0.0
    %878 = vmatpush2.msra.mxu0 0.0
    %879 = vmatprep.subr.mxu0 0.0
    %880 = vmatpush2.msra.mxu0 0.0
    %881 = vmatprep.subr.mxu0 0.0
    %882 = vmatpush2.msra.mxu0 0.0
    %883 = vmatprep.subr.mxu0 0.0
    %884 = vmatpush2.msra.mxu0 0.0
    %885 = vmatprep.subr.mxu0 0.0
    %886 = vmatpush2.msra.mxu0 0.0
    %887 = vmatprep.subr.mxu0 0.0
    %888 = vmatpush2.msra.mxu0 0.0
    %889 = vmatprep.subr.mxu0 0.0
    %890 = vmatpush2.msra.mxu0 0.0
    %891 = vmatprep.subr.mxu0 0.0
    %892 = vmatpush2.msra.mxu0 0.0
    %893 = vmatprep.subr.mxu0 0.0
    %894 = vmatpush2.msra.mxu0 0.0
    %895 = vmatprep.subr.mxu0 0.0
    %896 = vmatpush2.msra.mxu0 0.0
    %897 = vmatprep.subr.mxu0 0.0
    %898 = vmatpush2.msra.mxu0 0.0
    %899 = vmatprep.subr.mxu0 0.0
    %900 = vmatpush2.msra.mxu0 0.0
    %901 = vmatprep.subr.mxu0 0.0
    %902 = vmatpush2.msra.mxu0 0.0
    %903 = vmatprep.subr.mxu0 0.0
    %904 = vmatpush2.msra.mxu0 0.0
    %905 = vmatprep.subr.mxu0 0.0
    %906 = vmatpush2.msra.mxu0 0.0
    %907 = vmatprep.mubr.f32.mxu0 0.0
    %908 = vmatmul.mubr.f32.gmra.mxu0 %v841
    %v909 = vpop.f32.mrf.mxu0
    %v910 = vadd.f32 %v221, %v909
    %v911 = vpop.f32.mrf.mxu0
    %912 = vdwg.mxu0
    %v913 = vxor.u32 %v837, 2147483648
    %v914 = vmul.f32 %v913, 1.442695
    %v915 = vpow.pop %v914
    %v916 = vadd.f32 %v915, 1.0
    %v917 = vrcp.pop %v916
    %v918 = vmul.f32 1.0, %v917
    %v919 = vtanh.pop %v837
    %v920 = vmul.f32 %v918, %v658
    %922 = vrot.lane.b32.xlu0 %v919, 64
    %v923 = vpop.permute.xlu0 %922
    %v925 = vmul.f32 %v918, %v923
    %927 = vrot.lane.b32.xlu0 %v925, 32
    %v928 = vpop.permute.xlu0 %927
    %v930 = vadd.f32 %v920, %v928
    %v931 = vtanh.pop %v930
    %933 = vrot.lane.b32.xlu0 %v931, 64
    %v934 = vpop.permute.xlu0 %933
    %v936 = vmul.f32 %v918, %v934
    %938 = vrot.lane.b32.xlu0 %v936, 32
    %v939 = vpop.permute.xlu0 %938
    %v940 = vsel %vm224, %v939, 0
    %942 = vmatprep.subr.mxu0 0.0
    %943 = vmatpush1.msra.mxu0 0.0
    %944 = vmatprep.subr.mxu0 0.0
    %945 = vmatpush1.msra.mxu0 0.0
    %946 = vmatprep.subr.mxu0 0.0
    %947 = vmatpush1.msra.mxu0 0.0
    %948 = vmatprep.subr.mxu0 0.0
    %949 = vmatpush1.msra.mxu0 0.0
    %950 = vmatprep.subr.mxu0 0.0
    %951 = vmatpush1.msra.mxu0 0.0
    %952 = vmatprep.subr.mxu0 0.0
    %953 = vmatpush1.msra.mxu0 0.0
    %954 = vmatprep.subr.mxu0 0.0
    %955 = vmatpush1.msra.mxu0 0.0
    %956 = vmatprep.subr.mxu0 0.0
    %957 = vmatpush1.msra.mxu0 0.0
    %958 = vmatprep.subr.mxu0 0.0
    %959 = vmatpush1.msra.mxu0 0.0
    %960 = vmatprep.subr.mxu0 0.0
    %961 = vmatpush1.msra.mxu0 0.0
    %962 = vmatprep.subr.mxu0 0.0
    %963 = vmatpush1.msra.mxu0 0.0
    %964 = vmatprep.subr.mxu0 0.0
    %965 = vmatpush1.msra.mxu0 0.0
    %966 = vmatprep.subr.mxu0 0.0
    %967 = vmatpush1.msra.mxu0 %v211
    %968 = vmatprep.subr.mxu0 0.0
    %969 = vmatpush1.msra.mxu0 %v210
    %970 = vmatprep.subr.mxu0 0.0
    %971 = vmatpush1.msra.mxu0 %v209
    %972 = vmatprep.subr.mxu0 0.0
    %973 = vmatpush1.msra.mxu0 %v208
    %974 = vmatprep.subr.mxu0 0.0
    %975 = vmatpush2.msra.mxu0 0.0
    %976 = vmatprep.subr.mxu0 0.0
    %977 = vmatpush2.msra.mxu0 0.0
    %978 = vmatprep.subr.mxu0 0.0
    %979 = vmatpush2.msra.mxu0 0.0
    %980 = vmatprep.subr.mxu0 0.0
    %981 = vmatpush2.msra.mxu0 0.0
    %982 = vmatprep.subr.mxu0 0.0
    %983 = vmatpush2.msra.mxu0 0.0
    %984 = vmatprep.subr.mxu0 0.0
    %985 = vmatpush2.msra.mxu0 0.0
    %986 = vmatprep.subr.mxu0 0.0
    %987 = vmatpush2.msra.mxu0 0.0
    %988 = vmatprep.subr.mxu0 0.0
    %989 = vmatpush2.msra.mxu0 0.0
    %990 = vmatprep.subr.mxu0 0.0
    %991 = vmatpush2.msra.mxu0 0.0
    %992 = vmatprep.subr.mxu0 0.0
    %993 = vmatpush2.msra.mxu0 0.0
    %994 = vmatprep.subr.mxu0 0.0
    %995 = vmatpush2.msra.mxu0 0.0
    %996 = vmatprep.subr.mxu0 0.0
    %997 = vmatpush2.msra.mxu0 0.0
    %998 = vmatprep.subr.mxu0 0.0
    %999 = vmatpush2.msra.mxu0 0.0
    %1000 = vmatprep.subr.mxu0 0.0
    %1001 = vmatpush2.msra.mxu0 0.0
    %1002 = vmatprep.subr.mxu0 0.0
    %1003 = vmatpush2.msra.mxu0 0.0
    %1004 = vmatprep.subr.mxu0 0.0
    %1005 = vmatpush2.msra.mxu0 0.0
    %1006 = vmatprep.mubr.f32.mxu0 0.0
    %1007 = vmatmul.mubr.f32.gmra.mxu0 %v940
    %v1008 = vpop.f32.mrf.mxu0
    %v1009 = vadd.f32 0.0, %v1008
    %v1010 = vpop.f32.mrf.mxu0
    %1011 = vdwg.mxu0
    %v1012 = vadd.f32 %v910, %v1009
    %v1013 = vxor.u32 %v1012, 2147483648
    %v1014 = vmul.f32 %v1013, 1.442695
    %v1015 = vpow.pop %v1014
    %v1016 = vadd.f32 %v1015, 1.0
    %v1017 = vrcp.pop %v1016
    %v1018 = vmul.f32 1.0, %v1017
    %v1019 = vtanh.pop %v1012
    %v1020 = vmul.f32 %v1018, %v758
    %1022 = vrot.lane.b32.xlu0 %v1019, 64
    %v1023 = vpop.permute.xlu0 %1022
    %v1025 = vmul.f32 %v1018, %v1023
    %1027 = vrot.lane.b32.xlu0 %v1025, 32
    %v1028 = vpop.permute.xlu0 %1027
    %v1030 = vadd.f32 %v1020, %v1028
    %v1031 = vtanh.pop %v1030
    %1033 = vrot.lane.b32.xlu0 %v1031, 64
    %v1034 = vpop.permute.xlu0 %1033
    %v1036 = vmul.f32 %v1018, %v1034
    %s1037 = scalar_lea.vmem [#allocation2], 24
    %v1038 = vld [vmem:[%s1037] sm:$0xff]
    %1039 = vmatprep.subr.mxu0 0.0
    %1040 = vmatpush1.msra.mxu0 0.0
    %1041 = vmatprep.subr.mxu0 0.0
    %1042 = vmatpush1.msra.mxu0 0.0
    %1043 = vmatprep.subr.mxu0 0.0
    %1044 = vmatpush1.msra.mxu0 0.0
    %1045 = vmatprep.subr.mxu0 0.0
    %1046 = vmatpush1.msra.mxu0 0.0
    %1047 = vmatprep.subr.mxu0 0.0
    %1048 = vmatpush1.msra.mxu0 0.0
    %1049 = vmatprep.subr.mxu0 0.0
    %1050 = vmatpush1.msra.mxu0 0.0
    %1051 = vmatprep.subr.mxu0 0.0
    %1052 = vmatpush1.msra.mxu0 0.0
    %1053 = vmatprep.subr.mxu0 0.0
    %1054 = vmatpush1.msra.mxu0 0.0
    %1055 = vmatprep.subr.mxu0 0.0
    %1056 = vmatpush1.msra.mxu0 0.0
    %1057 = vmatprep.subr.mxu0 0.0
    %1058 = vmatpush1.msra.mxu0 0.0
    %1059 = vmatprep.subr.mxu0 0.0
    %1060 = vmatpush1.msra.mxu0 0.0
    %1061 = vmatprep.subr.mxu0 0.0
    %1062 = vmatpush1.msra.mxu0 0.0
    %1063 = vmatprep.subr.mxu0 0.0
    %1064 = vmatpush1.msra.mxu0 %v207
    %1065 = vmatprep.subr.mxu0 0.0
    %1066 = vmatpush1.msra.mxu0 %v206
    %1067 = vmatprep.subr.mxu0 0.0
    %1068 = vmatpush1.msra.mxu0 %v205
    %1069 = vmatprep.subr.mxu0 0.0
    %1070 = vmatpush1.msra.mxu0 %v204
    %1071 = vmatprep.subr.mxu0 0.0
    %1072 = vmatpush2.msra.mxu0 0.0
    %1073 = vmatprep.subr.mxu0 0.0
    %1074 = vmatpush2.msra.mxu0 0.0
    %1075 = vmatprep.subr.mxu0 0.0
    %1076 = vmatpush2.msra.mxu0 0.0
    %1077 = vmatprep.subr.mxu0 0.0
    %1078 = vmatpush2.msra.mxu0 0.0
    %1079 = vmatprep.subr.mxu0 0.0
    %1080 = vmatpush2.msra.mxu0 0.0
    %1081 = vmatprep.subr.mxu0 0.0
    %1082 = vmatpush2.msra.mxu0 0.0
    %1083 = vmatprep.subr.mxu0 0.0
    %1084 = vmatpush2.msra.mxu0 0.0
    %1085 = vmatprep.subr.mxu0 0.0
    %1086 = vmatpush2.msra.mxu0 0.0
    %1087 = vmatprep.subr.mxu0 0.0
    %1088 = vmatpush2.msra.mxu0 0.0
    %1089 = vmatprep.subr.mxu0 0.0
    %1090 = vmatpush2.msra.mxu0 0.0
    %1091 = vmatprep.subr.mxu0 0.0
    %1092 = vmatpush2.msra.mxu0 0.0
    %1093 = vmatprep.subr.mxu0 0.0
    %1094 = vmatpush2.msra.mxu0 0.0
    %1095 = vmatprep.subr.mxu0 0.0
    %1096 = vmatpush2.msra.mxu0 0.0
    %1097 = vmatprep.subr.mxu0 0.0
    %1098 = vmatpush2.msra.mxu0 0.0
    %1099 = vmatprep.subr.mxu0 0.0
    %1100 = vmatpush2.msra.mxu0 0.0
    %1101 = vmatprep.subr.mxu0 0.0
    %1102 = vmatpush2.msra.mxu0 0.0
    %1103 = vmatprep.mubr.f32.mxu0 0.0
    %1104 = vmatmul.mubr.f32.gmra.mxu0 %v940
    %v1105 = vpop.f32.mrf.mxu0
    %v1106 = vadd.f32 0.0, %v1105
    %v1107 = vpop.f32.mrf.mxu0
    %1108 = vdwg.mxu0
    %v1109 = vadd.f32 %v1038, %v1106
    %1111 = vrot.lane.b32.xlu0 %v1036, 32
    %v1112 = vpop.permute.xlu0 %1111
    %v1113 = vsel %vm224, %v1112, 0
    %1115 = vmatprep.subr.mxu0 0.0
    %1116 = vmatpush1.msra.mxu0 0.0
    %1117 = vmatprep.subr.mxu0 0.0
    %1118 = vmatpush1.msra.mxu0 0.0
    %1119 = vmatprep.subr.mxu0 0.0
    %1120 = vmatpush1.msra.mxu0 0.0
    %1121 = vmatprep.subr.mxu0 0.0
    %1122 = vmatpush1.msra.mxu0 0.0
    %1123 = vmatprep.subr.mxu0 0.0
    %1124 = vmatpush1.msra.mxu0 0.0
    %1125 = vmatprep.subr.mxu0 0.0
    %1126 = vmatpush1.msra.mxu0 0.0
    %1127 = vmatprep.subr.mxu0 0.0
    %1128 = vmatpush1.msra.mxu0 0.0
    %1129 = vmatprep.subr.mxu0 0.0
    %1130 = vmatpush1.msra.mxu0 0.0
    %1131 = vmatprep.subr.mxu0 0.0
    %1132 = vmatpush1.msra.mxu0 0.0
    %1133 = vmatprep.subr.mxu0 0.0
    %1134 = vmatpush1.msra.mxu0 0.0
    %1135 = vmatprep.subr.mxu0 0.0
    %1136 = vmatpush1.msra.mxu0 0.0
    %1137 = vmatprep.subr.mxu0 0.0
    %1138 = vmatpush1.msra.mxu0 0.0
    %1139 = vmatprep.subr.mxu0 0.0
    %1140 = vmatpush1.msra.mxu0 %v215
    %1141 = vmatprep.subr.mxu0 0.0
    %1142 = vmatpush1.msra.mxu0 %v214
    %1143 = vmatprep.subr.mxu0 0.0
    %1144 = vmatpush1.msra.mxu0 %v213
    %1145 = vmatprep.subr.mxu0 0.0
    %1146 = vmatpush1.msra.mxu0 %v212
    %1147 = vmatprep.subr.mxu0 0.0
    %1148 = vmatpush2.msra.mxu0 0.0
    %1149 = vmatprep.subr.mxu0 0.0
    %1150 = vmatpush2.msra.mxu0 0.0
    %1151 = vmatprep.subr.mxu0 0.0
    %1152 = vmatpush2.msra.mxu0 0.0
    %1153 = vmatprep.subr.mxu0 0.0
    %1154 = vmatpush2.msra.mxu0 0.0
    %1155 = vmatprep.subr.mxu0 0.0
    %1156 = vmatpush2.msra.mxu0 0.0
    %1157 = vmatprep.subr.mxu0 0.0
    %1158 = vmatpush2.msra.mxu0 0.0
    %1159 = vmatprep.subr.mxu0 0.0
    %1160 = vmatpush2.msra.mxu0 0.0
    %1161 = vmatprep.subr.mxu0 0.0
    %1162 = vmatpush2.msra.mxu0 0.0
    %1163 = vmatprep.subr.mxu0 0.0
    %1164 = vmatpush2.msra.mxu0 0.0
    %1165 = vmatprep.subr.mxu0 0.0
    %1166 = vmatpush2.msra.mxu0 0.0
    %1167 = vmatprep.subr.mxu0 0.0
    %1168 = vmatpush2.msra.mxu0 0.0
    %1169 = vmatprep.subr.mxu0 0.0
    %1170 = vmatpush2.msra.mxu0 0.0
    %1171 = vmatprep.subr.mxu0 0.0
    %1172 = vmatpush2.msra.mxu0 0.0
    %1173 = vmatprep.subr.mxu0 0.0
    %1174 = vmatpush2.msra.mxu0 0.0
    %1175 = vmatprep.subr.mxu0 0.0
    %1176 = vmatpush2.msra.mxu0 0.0
    %1177 = vmatprep.subr.mxu0 0.0
    %1178 = vmatpush2.msra.mxu0 0.0
    %1179 = vmatprep.mubr.f32.mxu0 0.0
    %1180 = vmatmul.mubr.f32.gmra.mxu0 %v1113
    %v1181 = vpop.f32.mrf.mxu0
    %v1182 = vadd.f32 %v221, %v1181
    %v1183 = vpop.f32.mrf.mxu0
    %1184 = vdwg.mxu0
    %v1185 = vxor.u32 %v1109, 2147483648
    %v1186 = vmul.f32 %v1185, 1.442695
    %v1187 = vpow.pop %v1186
    %v1188 = vadd.f32 %v1187, 1.0
    %v1189 = vrcp.pop %v1188
    %v1190 = vmul.f32 1.0, %v1189
    %v1191 = vtanh.pop %v1109
    %v1192 = vmul.f32 %v1190, %v930
    %1194 = vrot.lane.b32.xlu0 %v1191, 64
    %v1195 = vpop.permute.xlu0 %1194
    %v1197 = vmul.f32 %v1190, %v1195
    %1199 = vrot.lane.b32.xlu0 %v1197, 32
    %v1200 = vpop.permute.xlu0 %1199
    %v1202 = vadd.f32 %v1192, %v1200
    %v1203 = vtanh.pop %v1202
    %1205 = vrot.lane.b32.xlu0 %v1203, 64
    %v1206 = vpop.permute.xlu0 %1205
    %v1208 = vmul.f32 %v1190, %v1206
    %1210 = vrot.lane.b32.xlu0 %v1208, 32
    %v1211 = vpop.permute.xlu0 %1210
    %v1212 = vsel %vm224, %v1211, 0
    %1214 = vmatprep.subr.mxu0 0.0
    %1215 = vmatpush1.msra.mxu0 0.0
    %1216 = vmatprep.subr.mxu0 0.0
    %1217 = vmatpush1.msra.mxu0 0.0
    %1218 = vmatprep.subr.mxu0 0.0
    %1219 = vmatpush1.msra.mxu0 0.0
    %1220 = vmatprep.subr.mxu0 0.0
    %1221 = vmatpush1.msra.mxu0 0.0
    %1222 = vmatprep.subr.mxu0 0.0
    %1223 = vmatpush1.msra.mxu0 0.0
    %1224 = vmatprep.subr.mxu0 0.0
    %1225 = vmatpush1.msra.mxu0 0.0
    %1226 = vmatprep.subr.mxu0 0.0
    %1227 = vmatpush1.msra.mxu0 0.0
    %1228 = vmatprep.subr.mxu0 0.0
    %1229 = vmatpush1.msra.mxu0 0.0
    %1230 = vmatprep.subr.mxu0 0.0
    %1231 = vmatpush1.msra.mxu0 0.0
    %1232 = vmatprep.subr.mxu0 0.0
    %1233 = vmatpush1.msra.mxu0 0.0
    %1234 = vmatprep.subr.mxu0 0.0
    %1235 = vmatpush1.msra.mxu0 0.0
    %1236 = vmatprep.subr.mxu0 0.0
    %1237 = vmatpush1.msra.mxu0 0.0
    %1238 = vmatprep.subr.mxu0 0.0
    %1239 = vmatpush1.msra.mxu0 %v211
    %1240 = vmatprep.subr.mxu0 0.0
    %1241 = vmatpush1.msra.mxu0 %v210
    %1242 = vmatprep.subr.mxu0 0.0
    %1243 = vmatpush1.msra.mxu0 %v209
    %1244 = vmatprep.subr.mxu0 0.0
    %1245 = vmatpush1.msra.mxu0 %v208
    %1246 = vmatprep.subr.mxu0 0.0
    %1247 = vmatpush2.msra.mxu0 0.0
    %1248 = vmatprep.subr.mxu0 0.0
    %1249 = vmatpush2.msra.mxu0 0.0
    %1250 = vmatprep.subr.mxu0 0.0
    %1251 = vmatpush2.msra.mxu0 0.0
    %1252 = vmatprep.subr.mxu0 0.0
    %1253 = vmatpush2.msra.mxu0 0.0
    %1254 = vmatprep.subr.mxu0 0.0
    %1255 = vmatpush2.msra.mxu0 0.0
    %1256 = vmatprep.subr.mxu0 0.0
    %1257 = vmatpush2.msra.mxu0 0.0
    %1258 = vmatprep.subr.mxu0 0.0
    %1259 = vmatpush2.msra.mxu0 0.0
    %1260 = vmatprep.subr.mxu0 0.0
    %1261 = vmatpush2.msra.mxu0 0.0
    %1262 = vmatprep.subr.mxu0 0.0
    %1263 = vmatpush2.msra.mxu0 0.0
    %1264 = vmatprep.subr.mxu0 0.0
    %1265 = vmatpush2.msra.mxu0 0.0
    %1266 = vmatprep.subr.mxu0 0.0
    %1267 = vmatpush2.msra.mxu0 0.0
    %1268 = vmatprep.subr.mxu0 0.0
    %1269 = vmatpush2.msra.mxu0 0.0
    %1270 = vmatprep.subr.mxu0 0.0
    %1271 = vmatpush2.msra.mxu0 0.0
    %1272 = vmatprep.subr.mxu0 0.0
    %1273 = vmatpush2.msra.mxu0 0.0
    %1274 = vmatprep.subr.mxu0 0.0
    %1275 = vmatpush2.msra.mxu0 0.0
    %1276 = vmatprep.subr.mxu0 0.0
    %1277 = vmatpush2.msra.mxu0 0.0
    %1278 = vmatprep.mubr.f32.mxu0 0.0
    %1279 = vmatmul.mubr.f32.gmra.mxu0 %v1212
    %v1280 = vpop.f32.mrf.mxu0
    %v1281 = vadd.f32 0.0, %v1280
    %v1282 = vpop.f32.mrf.mxu0
    %1283 = vdwg.mxu0
    %v1284 = vadd.f32 %v1182, %v1281
    %v1285 = vxor.u32 %v1284, 2147483648
    %v1286 = vmul.f32 %v1285, 1.442695
    %v1287 = vpow.pop %v1286
    %v1288 = vadd.f32 %v1287, 1.0
    %v1289 = vrcp.pop %v1288
    %v1290 = vmul.f32 1.0, %v1289
    %v1291 = vtanh.pop %v1284
    %v1292 = vmul.f32 %v1290, %v1030
    %1294 = vrot.lane.b32.xlu0 %v1291, 64
    %v1295 = vpop.permute.xlu0 %1294
    %v1297 = vmul.f32 %v1290, %v1295
    %1299 = vrot.lane.b32.xlu0 %v1297, 32
    %v1300 = vpop.permute.xlu0 %1299
    %v1302 = vadd.f32 %v1292, %v1300
    %v1303 = vtanh.pop %v1302
    %1305 = vrot.lane.b32.xlu0 %v1303, 64
    %v1306 = vpop.permute.xlu0 %1305
    %v1308 = vmul.f32 %v1290, %v1306
    %s1309 = scalar_lea.vmem [#allocation2], 32
    %v1310 = vld [vmem:[%s1309] sm:$0xff]
    %1311 = vmatprep.subr.mxu0 0.0
    %1312 = vmatpush1.msra.mxu0 0.0
    %1313 = vmatprep.subr.mxu0 0.0
    %1314 = vmatpush1.msra.mxu0 0.0
    %1315 = vmatprep.subr.mxu0 0.0
    %1316 = vmatpush1.msra.mxu0 0.0
    %1317 = vmatprep.subr.mxu0 0.0
    %1318 = vmatpush1.msra.mxu0 0.0
    %1319 = vmatprep.subr.mxu0 0.0
    %1320 = vmatpush1.msra.mxu0 0.0
    %1321 = vmatprep.subr.mxu0 0.0
    %1322 = vmatpush1.msra.mxu0 0.0
    %1323 = vmatprep.subr.mxu0 0.0
    %1324 = vmatpush1.msra.mxu0 0.0
    %1325 = vmatprep.subr.mxu0 0.0
    %1326 = vmatpush1.msra.mxu0 0.0
    %1327 = vmatprep.subr.mxu0 0.0
    %1328 = vmatpush1.msra.mxu0 0.0
    %1329 = vmatprep.subr.mxu0 0.0
    %1330 = vmatpush1.msra.mxu0 0.0
    %1331 = vmatprep.subr.mxu0 0.0
    %1332 = vmatpush1.msra.mxu0 0.0
    %1333 = vmatprep.subr.mxu0 0.0
    %1334 = vmatpush1.msra.mxu0 0.0
    %1335 = vmatprep.subr.mxu0 0.0
    %1336 = vmatpush1.msra.mxu0 %v207
    %1337 = vmatprep.subr.mxu0 0.0
    %1338 = vmatpush1.msra.mxu0 %v206
    %1339 = vmatprep.subr.mxu0 0.0
    %1340 = vmatpush1.msra.mxu0 %v205
    %1341 = vmatprep.subr.mxu0 0.0
    %1342 = vmatpush1.msra.mxu0 %v204
    %1343 = vmatprep.subr.mxu0 0.0
    %1344 = vmatpush2.msra.mxu0 0.0
    %1345 = vmatprep.subr.mxu0 0.0
    %1346 = vmatpush2.msra.mxu0 0.0
    %1347 = vmatprep.subr.mxu0 0.0
    %1348 = vmatpush2.msra.mxu0 0.0
    %1349 = vmatprep.subr.mxu0 0.0
    %1350 = vmatpush2.msra.mxu0 0.0
    %1351 = vmatprep.subr.mxu0 0.0
    %1352 = vmatpush2.msra.mxu0 0.0
    %1353 = vmatprep.subr.mxu0 0.0
    %1354 = vmatpush2.msra.mxu0 0.0
    %1355 = vmatprep.subr.mxu0 0.0
    %1356 = vmatpush2.msra.mxu0 0.0
    %1357 = vmatprep.subr.mxu0 0.0
    %1358 = vmatpush2.msra.mxu0 0.0
    %1359 = vmatprep.subr.mxu0 0.0
    %1360 = vmatpush2.msra.mxu0 0.0
    %1361 = vmatprep.subr.mxu0 0.0
    %1362 = vmatpush2.msra.mxu0 0.0
    %1363 = vmatprep.subr.mxu0 0.0
    %1364 = vmatpush2.msra.mxu0 0.0
    %1365 = vmatprep.subr.mxu0 0.0
    %1366 = vmatpush2.msra.mxu0 0.0
    %1367 = vmatprep.subr.mxu0 0.0
    %1368 = vmatpush2.msra.mxu0 0.0
    %1369 = vmatprep.subr.mxu0 0.0
    %1370 = vmatpush2.msra.mxu0 0.0
    %1371 = vmatprep.subr.mxu0 0.0
    %1372 = vmatpush2.msra.mxu0 0.0
    %1373 = vmatprep.subr.mxu0 0.0
    %1374 = vmatpush2.msra.mxu0 0.0
    %1375 = vmatprep.mubr.f32.mxu0 0.0
    %1376 = vmatmul.mubr.f32.gmra.mxu0 %v1212
    %v1377 = vpop.f32.mrf.mxu0
    %v1378 = vadd.f32 0.0, %v1377
    %v1379 = vpop.f32.mrf.mxu0
    %1380 = vdwg.mxu0
    %v1381 = vadd.f32 %v1310, %v1378
    %1383 = vrot.lane.b32.xlu0 %v1308, 32
    %v1384 = vpop.permute.xlu0 %1383
    %v1385 = vsel %vm224, %v1384, 0
    %1387 = vmatprep.subr.mxu0 0.0
    %1388 = vmatpush1.msra.mxu0 0.0
    %1389 = vmatprep.subr.mxu0 0.0
    %1390 = vmatpush1.msra.mxu0 0.0
    %1391 = vmatprep.subr.mxu0 0.0
    %1392 = vmatpush1.msra.mxu0 0.0
    %1393 = vmatprep.subr.mxu0 0.0
    %1394 = vmatpush1.msra.mxu0 0.0
    %1395 = vmatprep.subr.mxu0 0.0
    %1396 = vmatpush1.msra.mxu0 0.0
    %1397 = vmatprep.subr.mxu0 0.0
    %1398 = vmatpush1.msra.mxu0 0.0
    %1399 = vmatprep.subr.mxu0 0.0
    %1400 = vmatpush1.msra.mxu0 0.0
    %1401 = vmatprep.subr.mxu0 0.0
    %1402 = vmatpush1.msra.mxu0 0.0
    %1403 = vmatprep.subr.mxu0 0.0
    %1404 = vmatpush1.msra.mxu0 0.0
    %1405 = vmatprep.subr.mxu0 0.0
    %1406 = vmatpush1.msra.mxu0 0.0
    %1407 = vmatprep.subr.mxu0 0.0
    %1408 = vmatpush1.msra.mxu0 0.0
    %1409 = vmatprep.subr.mxu0 0.0
    %1410 = vmatpush1.msra.mxu0 0.0
    %1411 = vmatprep.subr.mxu0 0.0
    %1412 = vmatpush1.msra.mxu0 %v215
    %1413 = vmatprep.subr.mxu0 0.0
    %1414 = vmatpush1.msra.mxu0 %v214
    %1415 = vmatprep.subr.mxu0 0.0
    %1416 = vmatpush1.msra.mxu0 %v213
    %1417 = vmatprep.subr.mxu0 0.0
    %1418 = vmatpush1.msra.mxu0 %v212
    %1419 = vmatprep.subr.mxu0 0.0
    %1420 = vmatpush2.msra.mxu0 0.0
    %1421 = vmatprep.subr.mxu0 0.0
    %1422 = vmatpush2.msra.mxu0 0.0
    %1423 = vmatprep.subr.mxu0 0.0
    %1424 = vmatpush2.msra.mxu0 0.0
    %1425 = vmatprep.subr.mxu0 0.0
    %1426 = vmatpush2.msra.mxu0 0.0
    %1427 = vmatprep.subr.mxu0 0.0
    %1428 = vmatpush2.msra.mxu0 0.0
    %1429 = vmatprep.subr.mxu0 0.0
    %1430 = vmatpush2.msra.mxu0 0.0
    %1431 = vmatprep.subr.mxu0 0.0
    %1432 = vmatpush2.msra.mxu0 0.0
    %1433 = vmatprep.subr.mxu0 0.0
    %1434 = vmatpush2.msra.mxu0 0.0
    %1435 = vmatprep.subr.mxu0 0.0
    %1436 = vmatpush2.msra.mxu0 0.0
    %1437 = vmatprep.subr.mxu0 0.0
    %1438 = vmatpush2.msra.mxu0 0.0
    %1439 = vmatprep.subr.mxu0 0.0
    %1440 = vmatpush2.msra.mxu0 0.0
    %1441 = vmatprep.subr.mxu0 0.0
    %1442 = vmatpush2.msra.mxu0 0.0
    %1443 = vmatprep.subr.mxu0 0.0
    %1444 = vmatpush2.msra.mxu0 0.0
    %1445 = vmatprep.subr.mxu0 0.0
    %1446 = vmatpush2.msra.mxu0 0.0
    %1447 = vmatprep.subr.mxu0 0.0
    %1448 = vmatpush2.msra.mxu0 0.0
    %1449 = vmatprep.subr.mxu0 0.0
    %1450 = vmatpush2.msra.mxu0 0.0
    %1451 = vmatprep.mubr.f32.mxu0 0.0
    %1452 = vmatmul.mubr.f32.gmra.mxu0 %v1385
    %v1453 = vpop.f32.mrf.mxu0
    %v1454 = vadd.f32 %v221, %v1453
    %v1455 = vpop.f32.mrf.mxu0
    %1456 = vdwg.mxu0
    %v1457 = vxor.u32 %v1381, 2147483648
    %v1458 = vmul.f32 %v1457, 1.442695
    %v1459 = vpow.pop %v1458
    %v1460 = vadd.f32 %v1459, 1.0
    %v1461 = vrcp.pop %v1460
    %v1462 = vmul.f32 1.0, %v1461
    %v1463 = vtanh.pop %v1381
    %v1464 = vmul.f32 %v1462, %v1202
    %1466 = vrot.lane.b32.xlu0 %v1463, 64
    %v1467 = vpop.permute.xlu0 %1466
    %v1469 = vmul.f32 %v1462, %v1467
    %1471 = vrot.lane.b32.xlu0 %v1469, 32
    %v1472 = vpop.permute.xlu0 %1471
    %v1474 = vadd.f32 %v1464, %v1472
    %v1475 = vtanh.pop %v1474
    %1477 = vrot.lane.b32.xlu0 %v1475, 64
    %v1478 = vpop.permute.xlu0 %1477
    %v1480 = vmul.f32 %v1462, %v1478
    %1482 = vrot.lane.b32.xlu0 %v1480, 32
    %v1483 = vpop.permute.xlu0 %1482
    %v1484 = vsel %vm224, %v1483, 0
    %1486 = vmatprep.subr.mxu0 0.0
    %1487 = vmatpush1.msra.mxu0 0.0
    %1488 = vmatprep.subr.mxu0 0.0
    %1489 = vmatpush1.msra.mxu0 0.0
    %1490 = vmatprep.subr.mxu0 0.0
    %1491 = vmatpush1.msra.mxu0 0.0
    %1492 = vmatprep.subr.mxu0 0.0
    %1493 = vmatpush1.msra.mxu0 0.0
    %1494 = vmatprep.subr.mxu0 0.0
    %1495 = vmatpush1.msra.mxu0 0.0
    %1496 = vmatprep.subr.mxu0 0.0
    %1497 = vmatpush1.msra.mxu0 0.0
    %1498 = vmatprep.subr.mxu0 0.0
    %1499 = vmatpush1.msra.mxu0 0.0
    %1500 = vmatprep.subr.mxu0 0.0
    %1501 = vmatpush1.msra.mxu0 0.0
    %1502 = vmatprep.subr.mxu0 0.0
    %1503 = vmatpush1.msra.mxu0 0.0
    %1504 = vmatprep.subr.mxu0 0.0
    %1505 = vmatpush1.msra.mxu0 0.0
    %1506 = vmatprep.subr.mxu0 0.0
    %1507 = vmatpush1.msra.mxu0 0.0
    %1508 = vmatprep.subr.mxu0 0.0
    %1509 = vmatpush1.msra.mxu0 0.0
    %1510 = vmatprep.subr.mxu0 0.0
    %1511 = vmatpush1.msra.mxu0 %v211
    %1512 = vmatprep.subr.mxu0 0.0
    %1513 = vmatpush1.msra.mxu0 %v210
    %1514 = vmatprep.subr.mxu0 0.0
    %1515 = vmatpush1.msra.mxu0 %v209
    %1516 = vmatprep.subr.mxu0 0.0
    %1517 = vmatpush1.msra.mxu0 %v208
    %1518 = vmatprep.subr.mxu0 0.0
    %1519 = vmatpush2.msra.mxu0 0.0
    %1520 = vmatprep.subr.mxu0 0.0
    %1521 = vmatpush2.msra.mxu0 0.0
    %1522 = vmatprep.subr.mxu0 0.0
    %1523 = vmatpush2.msra.mxu0 0.0
    %1524 = vmatprep.subr.mxu0 0.0
    %1525 = vmatpush2.msra.mxu0 0.0
    %1526 = vmatprep.subr.mxu0 0.0
    %1527 = vmatpush2.msra.mxu0 0.0
    %1528 = vmatprep.subr.mxu0 0.0
    %1529 = vmatpush2.msra.mxu0 0.0
    %1530 = vmatprep.subr.mxu0 0.0
    %1531 = vmatpush2.msra.mxu0 0.0
    %1532 = vmatprep.subr.mxu0 0.0
    %1533 = vmatpush2.msra.mxu0 0.0
    %1534 = vmatprep.subr.mxu0 0.0
    %1535 = vmatpush2.msra.mxu0 0.0
    %1536 = vmatprep.subr.mxu0 0.0
    %1537 = vmatpush2.msra.mxu0 0.0
    %1538 = vmatprep.subr.mxu0 0.0
    %1539 = vmatpush2.msra.mxu0 0.0
    %1540 = vmatprep.subr.mxu0 0.0
    %1541 = vmatpush2.msra.mxu0 0.0
    %1542 = vmatprep.subr.mxu0 0.0
    %1543 = vmatpush2.msra.mxu0 0.0
    %1544 = vmatprep.subr.mxu0 0.0
    %1545 = vmatpush2.msra.mxu0 0.0
    %1546 = vmatprep.subr.mxu0 0.0
    %1547 = vmatpush2.msra.mxu0 0.0
    %1548 = vmatprep.subr.mxu0 0.0
    %1549 = vmatpush2.msra.mxu0 0.0
    %1550 = vmatprep.mubr.f32.mxu0 0.0
    %1551 = vmatmul.mubr.f32.gmra.mxu0 %v1484
    %v1552 = vpop.f32.mrf.mxu0
    %v1553 = vadd.f32 0.0, %v1552
    %v1554 = vpop.f32.mrf.mxu0
    %1555 = vdwg.mxu0
    %v1556 = vadd.f32 %v1454, %v1553
    %v1557 = vxor.u32 %v1556, 2147483648
    %v1558 = vmul.f32 %v1557, 1.442695
    %v1559 = vpow.pop %v1558
    %v1560 = vadd.f32 %v1559, 1.0
    %v1561 = vrcp.pop %v1560
    %v1562 = vmul.f32 1.0, %v1561
    %v1563 = vtanh.pop %v1556
    %v1564 = vmul.f32 %v1562, %v1302
    %1566 = vrot.lane.b32.xlu0 %v1563, 64
    %v1567 = vpop.permute.xlu0 %1566
    %v1569 = vmul.f32 %v1562, %v1567
    %1571 = vrot.lane.b32.xlu0 %v1569, 32
    %v1572 = vpop.permute.xlu0 %1571
    %v1574 = vadd.f32 %v1564, %v1572
    %v1575 = vtanh.pop %v1574
    %1577 = vrot.lane.b32.xlu0 %v1575, 64
    %v1578 = vpop.permute.xlu0 %1577
    %v1580 = vmul.f32 %v1562, %v1578
    %s1581 = scalar_lea.vmem [#allocation2], 40
    %v1582 = vld [vmem:[%s1581] sm:$0xff]
    %1583 = vmatprep.subr.mxu0 0.0
    %1584 = vmatpush1.msra.mxu0 0.0
    %1585 = vmatprep.subr.mxu0 0.0
    %1586 = vmatpush1.msra.mxu0 0.0
    %1587 = vmatprep.subr.mxu0 0.0
    %1588 = vmatpush1.msra.mxu0 0.0
    %1589 = vmatprep.subr.mxu0 0.0
    %1590 = vmatpush1.msra.mxu0 0.0
    %1591 = vmatprep.subr.mxu0 0.0
    %1592 = vmatpush1.msra.mxu0 0.0
    %1593 = vmatprep.subr.mxu0 0.0
    %1594 = vmatpush1.msra.mxu0 0.0
    %1595 = vmatprep.subr.mxu0 0.0
    %1596 = vmatpush1.msra.mxu0 0.0
    %1597 = vmatprep.subr.mxu0 0.0
    %1598 = vmatpush1.msra.mxu0 0.0
    %1599 = vmatprep.subr.mxu0 0.0
    %1600 = vmatpush1.msra.mxu0 0.0
    %1601 = vmatprep.subr.mxu0 0.0
    %1602 = vmatpush1.msra.mxu0 0.0
    %1603 = vmatprep.subr.mxu0 0.0
    %1604 = vmatpush1.msra.mxu0 0.0
    %1605 = vmatprep.subr.mxu0 0.0
    %1606 = vmatpush1.msra.mxu0 0.0
    %1607 = vmatprep.subr.mxu0 0.0
    %1608 = vmatpush1.msra.mxu0 %v207
    %1609 = vmatprep.subr.mxu0 0.0
    %1610 = vmatpush1.msra.mxu0 %v206
    %1611 = vmatprep.subr.mxu0 0.0
    %1612 = vmatpush1.msra.mxu0 %v205
    %1613 = vmatprep.subr.mxu0 0.0
    %1614 = vmatpush1.msra.mxu0 %v204
    %1615 = vmatprep.subr.mxu0 0.0
    %1616 = vmatpush2.msra.mxu0 0.0
    %1617 = vmatprep.subr.mxu0 0.0
    %1618 = vmatpush2.msra.mxu0 0.0
    %1619 = vmatprep.subr.mxu0 0.0
    %1620 = vmatpush2.msra.mxu0 0.0
    %1621 = vmatprep.subr.mxu0 0.0
    %1622 = vmatpush2.msra.mxu0 0.0
    %1623 = vmatprep.subr.mxu0 0.0
    %1624 = vmatpush2.msra.mxu0 0.0
    %1625 = vmatprep.subr.mxu0 0.0
    %1626 = vmatpush2.msra.mxu0 0.0
    %1627 = vmatprep.subr.mxu0 0.0
    %1628 = vmatpush2.msra.mxu0 0.0
    %1629 = vmatprep.subr.mxu0 0.0
    %1630 = vmatpush2.msra.mxu0 0.0
    %1631 = vmatprep.subr.mxu0 0.0
    %1632 = vmatpush2.msra.mxu0 0.0
    %1633 = vmatprep.subr.mxu0 0.0
    %1634 = vmatpush2.msra.mxu0 0.0
    %1635 = vmatprep.subr.mxu0 0.0
    %1636 = vmatpush2.msra.mxu0 0.0
    %1637 = vmatprep.subr.mxu0 0.0
    %1638 = vmatpush2.msra.mxu0 0.0
    %1639 = vmatprep.subr.mxu0 0.0
    %1640 = vmatpush2.msra.mxu0 0.0
    %1641 = vmatprep.subr.mxu0 0.0
    %1642 = vmatpush2.msra.mxu0 0.0
    %1643 = vmatprep.subr.mxu0 0.0
    %1644 = vmatpush2.msra.mxu0 0.0
    %1645 = vmatprep.subr.mxu0 0.0
    %1646 = vmatpush2.msra.mxu0 0.0
    %1647 = vmatprep.mubr.f32.mxu0 0.0
    %1648 = vmatmul.mubr.f32.gmra.mxu0 %v1484
    %v1649 = vpop.f32.mrf.mxu0
    %v1650 = vadd.f32 0.0, %v1649
    %v1651 = vpop.f32.mrf.mxu0
    %1652 = vdwg.mxu0
    %v1653 = vadd.f32 %v1582, %v1650
    %1655 = vrot.lane.b32.xlu0 %v1580, 32
    %v1656 = vpop.permute.xlu0 %1655
    %v1657 = vsel %vm224, %v1656, 0
    %1659 = vmatprep.subr.mxu0 0.0
    %1660 = vmatpush1.msra.mxu0 0.0
    %1661 = vmatprep.subr.mxu0 0.0
    %1662 = vmatpush1.msra.mxu0 0.0
    %1663 = vmatprep.subr.mxu0 0.0
    %1664 = vmatpush1.msra.mxu0 0.0
    %1665 = vmatprep.subr.mxu0 0.0
    %1666 = vmatpush1.msra.mxu0 0.0
    %1667 = vmatprep.subr.mxu0 0.0
    %1668 = vmatpush1.msra.mxu0 0.0
    %1669 = vmatprep.subr.mxu0 0.0
    %1670 = vmatpush1.msra.mxu0 0.0
    %1671 = vmatprep.subr.mxu0 0.0
    %1672 = vmatpush1.msra.mxu0 0.0
    %1673 = vmatprep.subr.mxu0 0.0
    %1674 = vmatpush1.msra.mxu0 0.0
    %1675 = vmatprep.subr.mxu0 0.0
    %1676 = vmatpush1.msra.mxu0 0.0
    %1677 = vmatprep.subr.mxu0 0.0
    %1678 = vmatpush1.msra.mxu0 0.0
    %1679 = vmatprep.subr.mxu0 0.0
    %1680 = vmatpush1.msra.mxu0 0.0
    %1681 = vmatprep.subr.mxu0 0.0
    %1682 = vmatpush1.msra.mxu0 0.0
    %1683 = vmatprep.subr.mxu0 0.0
    %1684 = vmatpush1.msra.mxu0 %v215
    %1685 = vmatprep.subr.mxu0 0.0
    %1686 = vmatpush1.msra.mxu0 %v214
    %1687 = vmatprep.subr.mxu0 0.0
    %1688 = vmatpush1.msra.mxu0 %v213
    %1689 = vmatprep.subr.mxu0 0.0
    %1690 = vmatpush1.msra.mxu0 %v212
    %1691 = vmatprep.subr.mxu0 0.0
    %1692 = vmatpush2.msra.mxu0 0.0
    %1693 = vmatprep.subr.mxu0 0.0
    %1694 = vmatpush2.msra.mxu0 0.0
    %1695 = vmatprep.subr.mxu0 0.0
    %1696 = vmatpush2.msra.mxu0 0.0
    %1697 = vmatprep.subr.mxu0 0.0
    %1698 = vmatpush2.msra.mxu0 0.0
    %1699 = vmatprep.subr.mxu0 0.0
    %1700 = vmatpush2.msra.mxu0 0.0
    %1701 = vmatprep.subr.mxu0 0.0
    %1702 = vmatpush2.msra.mxu0 0.0
    %1703 = vmatprep.subr.mxu0 0.0
    %1704 = vmatpush2.msra.mxu0 0.0
    %1705 = vmatprep.subr.mxu0 0.0
    %1706 = vmatpush2.msra.mxu0 0.0
    %1707 = vmatprep.subr.mxu0 0.0
    %1708 = vmatpush2.msra.mxu0 0.0
    %1709 = vmatprep.subr.mxu0 0.0
    %1710 = vmatpush2.msra.mxu0 0.0
    %1711 = vmatprep.subr.mxu0 0.0
    %1712 = vmatpush2.msra.mxu0 0.0
    %1713 = vmatprep.subr.mxu0 0.0
    %1714 = vmatpush2.msra.mxu0 0.0
    %1715 = vmatprep.subr.mxu0 0.0
    %1716 = vmatpush2.msra.mxu0 0.0
    %1717 = vmatprep.subr.mxu0 0.0
    %1718 = vmatpush2.msra.mxu0 0.0
    %1719 = vmatprep.subr.mxu0 0.0
    %1720 = vmatpush2.msra.mxu0 0.0
    %1721 = vmatprep.subr.mxu0 0.0
    %1722 = vmatpush2.msra.mxu0 0.0
    %1723 = vmatprep.mubr.f32.mxu0 0.0
    %1724 = vmatmul.mubr.f32.gmra.mxu0 %v1657
    %v1725 = vpop.f32.mrf.mxu0
    %v1726 = vadd.f32 %v221, %v1725
    %v1727 = vpop.f32.mrf.mxu0
    %1728 = vdwg.mxu0
    %v1729 = vxor.u32 %v1653, 2147483648
    %v1730 = vmul.f32 %v1729, 1.442695
    %v1731 = vpow.pop %v1730
    %v1732 = vadd.f32 %v1731, 1.0
    %v1733 = vrcp.pop %v1732
    %v1734 = vmul.f32 1.0, %v1733
    %v1735 = vtanh.pop %v1653
    %v1736 = vmul.f32 %v1734, %v1474
    %1738 = vrot.lane.b32.xlu0 %v1735, 64
    %v1739 = vpop.permute.xlu0 %1738
    %v1741 = vmul.f32 %v1734, %v1739
    %1743 = vrot.lane.b32.xlu0 %v1741, 32
    %v1744 = vpop.permute.xlu0 %1743
    %v1746 = vadd.f32 %v1736, %v1744
    %v1747 = vtanh.pop %v1746
    %1749 = vrot.lane.b32.xlu0 %v1747, 64
    %v1750 = vpop.permute.xlu0 %1749
    %v1752 = vmul.f32 %v1734, %v1750
    %1754 = vrot.lane.b32.xlu0 %v1752, 32
    %v1755 = vpop.permute.xlu0 %1754
    %v1756 = vsel %vm224, %v1755, 0
    %1758 = vmatprep.subr.mxu0 0.0
    %1759 = vmatpush1.msra.mxu0 0.0
    %1760 = vmatprep.subr.mxu0 0.0
    %1761 = vmatpush1.msra.mxu0 0.0
    %1762 = vmatprep.subr.mxu0 0.0
    %1763 = vmatpush1.msra.mxu0 0.0
    %1764 = vmatprep.subr.mxu0 0.0
    %1765 = vmatpush1.msra.mxu0 0.0
    %1766 = vmatprep.subr.mxu0 0.0
    %1767 = vmatpush1.msra.mxu0 0.0
    %1768 = vmatprep.subr.mxu0 0.0
    %1769 = vmatpush1.msra.mxu0 0.0
    %1770 = vmatprep.subr.mxu0 0.0
    %1771 = vmatpush1.msra.mxu0 0.0
    %1772 = vmatprep.subr.mxu0 0.0
    %1773 = vmatpush1.msra.mxu0 0.0
    %1774 = vmatprep.subr.mxu0 0.0
    %1775 = vmatpush1.msra.mxu0 0.0
    %1776 = vmatprep.subr.mxu0 0.0
    %1777 = vmatpush1.msra.mxu0 0.0
    %1778 = vmatprep.subr.mxu0 0.0
    %1779 = vmatpush1.msra.mxu0 0.0
    %1780 = vmatprep.subr.mxu0 0.0
    %1781 = vmatpush1.msra.mxu0 0.0
    %1782 = vmatprep.subr.mxu0 0.0
    %1783 = vmatpush1.msra.mxu0 %v211
    %1784 = vmatprep.subr.mxu0 0.0
    %1785 = vmatpush1.msra.mxu0 %v210
    %1786 = vmatprep.subr.mxu0 0.0
    %1787 = vmatpush1.msra.mxu0 %v209
    %1788 = vmatprep.subr.mxu0 0.0
    %1789 = vmatpush1.msra.mxu0 %v208
    %1790 = vmatprep.subr.mxu0 0.0
    %1791 = vmatpush2.msra.mxu0 0.0
    %1792 = vmatprep.subr.mxu0 0.0
    %1793 = vmatpush2.msra.mxu0 0.0
    %1794 = vmatprep.subr.mxu0 0.0
    %1795 = vmatpush2.msra.mxu0 0.0
    %1796 = vmatprep.subr.mxu0 0.0
    %1797 = vmatpush2.msra.mxu0 0.0
    %1798 = vmatprep.subr.mxu0 0.0
    %1799 = vmatpush2.msra.mxu0 0.0
    %1800 = vmatprep.subr.mxu0 0.0
    %1801 = vmatpush2.msra.mxu0 0.0
    %1802 = vmatprep.subr.mxu0 0.0
    %1803 = vmatpush2.msra.mxu0 0.0
    %1804 = vmatprep.subr.mxu0 0.0
    %1805 = vmatpush2.msra.mxu0 0.0
    %1806 = vmatprep.subr.mxu0 0.0
    %1807 = vmatpush2.msra.mxu0 0.0
    %1808 = vmatprep.subr.mxu0 0.0
    %1809 = vmatpush2.msra.mxu0 0.0
    %1810 = vmatprep.subr.mxu0 0.0
    %1811 = vmatpush2.msra.mxu0 0.0
    %1812 = vmatprep.subr.mxu0 0.0
    %1813 = vmatpush2.msra.mxu0 0.0
    %1814 = vmatprep.subr.mxu0 0.0
    %1815 = vmatpush2.msra.mxu0 0.0
    %1816 = vmatprep.subr.mxu0 0.0
    %1817 = vmatpush2.msra.mxu0 0.0
    %1818 = vmatprep.subr.mxu0 0.0
    %1819 = vmatpush2.msra.mxu0 0.0
    %1820 = vmatprep.subr.mxu0 0.0
    %1821 = vmatpush2.msra.mxu0 0.0
    %1822 = vmatprep.mubr.f32.mxu0 0.0
    %1823 = vmatmul.mubr.f32.gmra.mxu0 %v1756
    %v1824 = vpop.f32.mrf.mxu0
    %v1825 = vadd.f32 0.0, %v1824
    %v1826 = vpop.f32.mrf.mxu0
    %1827 = vdwg.mxu0
    %v1828 = vadd.f32 %v1726, %v1825
    %v1829 = vxor.u32 %v1828, 2147483648
    %v1830 = vmul.f32 %v1829, 1.442695
    %v1831 = vpow.pop %v1830
    %v1832 = vadd.f32 %v1831, 1.0
    %v1833 = vrcp.pop %v1832
    %v1834 = vmul.f32 1.0, %v1833
    %v1835 = vtanh.pop %v1828
    %v1836 = vmul.f32 %v1834, %v1574
    %1838 = vrot.lane.b32.xlu0 %v1835, 64
    %v1839 = vpop.permute.xlu0 %1838
    %v1841 = vmul.f32 %v1834, %v1839
    %1843 = vrot.lane.b32.xlu0 %v1841, 32
    %v1844 = vpop.permute.xlu0 %1843
    %v1846 = vadd.f32 %v1836, %v1844
    %v1847 = vtanh.pop %v1846
    %1849 = vrot.lane.b32.xlu0 %v1847, 64
    %v1850 = vpop.permute.xlu0 %1849
    %v1852 = vmul.f32 %v1834, %v1850
    %s1853 = scalar_lea.vmem [#allocation2], 48
    %v1854 = vld [vmem:[%s1853] sm:$0xff]
    %1855 = vmatprep.subr.mxu0 0.0
    %1856 = vmatpush1.msra.mxu0 0.0
    %1857 = vmatprep.subr.mxu0 0.0
    %1858 = vmatpush1.msra.mxu0 0.0
    %1859 = vmatprep.subr.mxu0 0.0
    %1860 = vmatpush1.msra.mxu0 0.0
    %1861 = vmatprep.subr.mxu0 0.0
    %1862 = vmatpush1.msra.mxu0 0.0
    %1863 = vmatprep.subr.mxu0 0.0
    %1864 = vmatpush1.msra.mxu0 0.0
    %1865 = vmatprep.subr.mxu0 0.0
    %1866 = vmatpush1.msra.mxu0 0.0
    %1867 = vmatprep.subr.mxu0 0.0
    %1868 = vmatpush1.msra.mxu0 0.0
    %1869 = vmatprep.subr.mxu0 0.0
    %1870 = vmatpush1.msra.mxu0 0.0
    %1871 = vmatprep.subr.mxu0 0.0
    %1872 = vmatpush1.msra.mxu0 0.0
    %1873 = vmatprep.subr.mxu0 0.0
    %1874 = vmatpush1.msra.mxu0 0.0
    %1875 = vmatprep.subr.mxu0 0.0
    %1876 = vmatpush1.msra.mxu0 0.0
    %1877 = vmatprep.subr.mxu0 0.0
    %1878 = vmatpush1.msra.mxu0 0.0
    %1879 = vmatprep.subr.mxu0 0.0
    %1880 = vmatpush1.msra.mxu0 %v207
    %1881 = vmatprep.subr.mxu0 0.0
    %1882 = vmatpush1.msra.mxu0 %v206
    %1883 = vmatprep.subr.mxu0 0.0
    %1884 = vmatpush1.msra.mxu0 %v205
    %1885 = vmatprep.subr.mxu0 0.0
    %1886 = vmatpush1.msra.mxu0 %v204
    %1887 = vmatprep.subr.mxu0 0.0
    %1888 = vmatpush2.msra.mxu0 0.0
    %1889 = vmatprep.subr.mxu0 0.0
    %1890 = vmatpush2.msra.mxu0 0.0
    %1891 = vmatprep.subr.mxu0 0.0
    %1892 = vmatpush2.msra.mxu0 0.0
    %1893 = vmatprep.subr.mxu0 0.0
    %1894 = vmatpush2.msra.mxu0 0.0
    %1895 = vmatprep.subr.mxu0 0.0
    %1896 = vmatpush2.msra.mxu0 0.0
    %1897 = vmatprep.subr.mxu0 0.0
    %1898 = vmatpush2.msra.mxu0 0.0
    %1899 = vmatprep.subr.mxu0 0.0
    %1900 = vmatpush2.msra.mxu0 0.0
    %1901 = vmatprep.subr.mxu0 0.0
    %1902 = vmatpush2.msra.mxu0 0.0
    %1903 = vmatprep.subr.mxu0 0.0
    %1904 = vmatpush2.msra.mxu0 0.0
    %1905 = vmatprep.subr.mxu0 0.0
    %1906 = vmatpush2.msra.mxu0 0.0
    %1907 = vmatprep.subr.mxu0 0.0
    %1908 = vmatpush2.msra.mxu0 0.0
    %1909 = vmatprep.subr.mxu0 0.0
    %1910 = vmatpush2.msra.mxu0 0.0
    %1911 = vmatprep.subr.mxu0 0.0
    %1912 = vmatpush2.msra.mxu0 0.0
    %1913 = vmatprep.subr.mxu0 0.0
    %1914 = vmatpush2.msra.mxu0 0.0
    %1915 = vmatprep.subr.mxu0 0.0
    %1916 = vmatpush2.msra.mxu0 0.0
    %1917 = vmatprep.subr.mxu0 0.0
    %1918 = vmatpush2.msra.mxu0 0.0
    %1919 = vmatprep.mubr.f32.mxu0 0.0
    %1920 = vmatmul.mubr.f32.gmra.mxu0 %v1756
    %v1921 = vpop.f32.mrf.mxu0
    %v1922 = vadd.f32 0.0, %v1921
    %v1923 = vpop.f32.mrf.mxu0
    %1924 = vdwg.mxu0
    %v1925 = vadd.f32 %v1854, %v1922
    %1927 = vrot.lane.b32.xlu0 %v1852, 32
    %v1928 = vpop.permute.xlu0 %1927
    %v1929 = vsel %vm224, %v1928, 0
    %1931 = vmatprep.subr.mxu0 0.0
    %1932 = vmatpush1.msra.mxu0 0.0
    %1933 = vmatprep.subr.mxu0 0.0
    %1934 = vmatpush1.msra.mxu0 0.0
    %1935 = vmatprep.subr.mxu0 0.0
    %1936 = vmatpush1.msra.mxu0 0.0
    %1937 = vmatprep.subr.mxu0 0.0
    %1938 = vmatpush1.msra.mxu0 0.0
    %1939 = vmatprep.subr.mxu0 0.0
    %1940 = vmatpush1.msra.mxu0 0.0
    %1941 = vmatprep.subr.mxu0 0.0
    %1942 = vmatpush1.msra.mxu0 0.0
    %1943 = vmatprep.subr.mxu0 0.0
    %1944 = vmatpush1.msra.mxu0 0.0
    %1945 = vmatprep.subr.mxu0 0.0
    %1946 = vmatpush1.msra.mxu0 0.0
    %1947 = vmatprep.subr.mxu0 0.0
    %1948 = vmatpush1.msra.mxu0 0.0
    %1949 = vmatprep.subr.mxu0 0.0
    %1950 = vmatpush1.msra.mxu0 0.0
    %1951 = vmatprep.subr.mxu0 0.0
    %1952 = vmatpush1.msra.mxu0 0.0
    %1953 = vmatprep.subr.mxu0 0.0
    %1954 = vmatpush1.msra.mxu0 0.0
    %1955 = vmatprep.subr.mxu0 0.0
    %1956 = vmatpush1.msra.mxu0 %v215
    %1957 = vmatprep.subr.mxu0 0.0
    %1958 = vmatpush1.msra.mxu0 %v214
    %1959 = vmatprep.subr.mxu0 0.0
    %1960 = vmatpush1.msra.mxu0 %v213
    %1961 = vmatprep.subr.mxu0 0.0
    %1962 = vmatpush1.msra.mxu0 %v212
    %1963 = vmatprep.subr.mxu0 0.0
    %1964 = vmatpush2.msra.mxu0 0.0
    %1965 = vmatprep.subr.mxu0 0.0
    %1966 = vmatpush2.msra.mxu0 0.0
    %1967 = vmatprep.subr.mxu0 0.0
    %1968 = vmatpush2.msra.mxu0 0.0
    %1969 = vmatprep.subr.mxu0 0.0
    %1970 = vmatpush2.msra.mxu0 0.0
    %1971 = vmatprep.subr.mxu0 0.0
    %1972 = vmatpush2.msra.mxu0 0.0
    %1973 = vmatprep.subr.mxu0 0.0
    %1974 = vmatpush2.msra.mxu0 0.0
    %1975 = vmatprep.subr.mxu0 0.0
    %1976 = vmatpush2.msra.mxu0 0.0
    %1977 = vmatprep.subr.mxu0 0.0
    %1978 = vmatpush2.msra.mxu0 0.0
    %1979 = vmatprep.subr.mxu0 0.0
    %1980 = vmatpush2.msra.mxu0 0.0
    %1981 = vmatprep.subr.mxu0 0.0
    %1982 = vmatpush2.msra.mxu0 0.0
    %1983 = vmatprep.subr.mxu0 0.0
    %1984 = vmatpush2.msra.mxu0 0.0
    %1985 = vmatprep.subr.mxu0 0.0
    %1986 = vmatpush2.msra.mxu0 0.0
    %1987 = vmatprep.subr.mxu0 0.0
    %1988 = vmatpush2.msra.mxu0 0.0
    %1989 = vmatprep.subr.mxu0 0.0
    %1990 = vmatpush2.msra.mxu0 0.0
    %1991 = vmatprep.subr.mxu0 0.0
    %1992 = vmatpush2.msra.mxu0 0.0
    %1993 = vmatprep.subr.mxu0 0.0
    %1994 = vmatpush2.msra.mxu0 0.0
    %1995 = vmatprep.mubr.f32.mxu0 0.0
    %1996 = vmatmul.mubr.f32.gmra.mxu0 %v1929
    %v1997 = vpop.f32.mrf.mxu0
    %v1998 = vadd.f32 %v221, %v1997
    %v1999 = vpop.f32.mrf.mxu0
    %2000 = vdwg.mxu0
    %v2001 = vxor.u32 %v1925, 2147483648
    %v2002 = vmul.f32 %v2001, 1.442695
    %v2003 = vpow.pop %v2002
    %v2004 = vadd.f32 %v2003, 1.0
    %v2005 = vrcp.pop %v2004
    %v2006 = vmul.f32 1.0, %v2005
    %v2007 = vtanh.pop %v1925
    %v2008 = vmul.f32 %v2006, %v1746
    %2010 = vrot.lane.b32.xlu0 %v2007, 64
    %v2011 = vpop.permute.xlu0 %2010
    %v2013 = vmul.f32 %v2006, %v2011
    %2015 = vrot.lane.b32.xlu0 %v2013, 32
    %v2016 = vpop.permute.xlu0 %2015
    %v2018 = vadd.f32 %v2008, %v2016
    %v2019 = vtanh.pop %v2018
    %2021 = vrot.lane.b32.xlu0 %v2019, 64
    %v2022 = vpop.permute.xlu0 %2021
    %v2024 = vmul.f32 %v2006, %v2022
    %2026 = vrot.lane.b32.xlu0 %v2024, 32
    %v2027 = vpop.permute.xlu0 %2026
    %v2028 = vsel %vm224, %v2027, 0
    %2030 = vmatprep.subr.mxu0 0.0
    %2031 = vmatpush1.msra.mxu0 0.0
    %2032 = vmatprep.subr.mxu0 0.0
    %2033 = vmatpush1.msra.mxu0 0.0
    %2034 = vmatprep.subr.mxu0 0.0
    %2035 = vmatpush1.msra.mxu0 0.0
    %2036 = vmatprep.subr.mxu0 0.0
    %2037 = vmatpush1.msra.mxu0 0.0
    %2038 = vmatprep.subr.mxu0 0.0
    %2039 = vmatpush1.msra.mxu0 0.0
    %2040 = vmatprep.subr.mxu0 0.0
    %2041 = vmatpush1.msra.mxu0 0.0
    %2042 = vmatprep.subr.mxu0 0.0
    %2043 = vmatpush1.msra.mxu0 0.0
    %2044 = vmatprep.subr.mxu0 0.0
    %2045 = vmatpush1.msra.mxu0 0.0
    %2046 = vmatprep.subr.mxu0 0.0
    %2047 = vmatpush1.msra.mxu0 0.0
    %2048 = vmatprep.subr.mxu0 0.0
    %2049 = vmatpush1.msra.mxu0 0.0
    %2050 = vmatprep.subr.mxu0 0.0
    %2051 = vmatpush1.msra.mxu0 0.0
    %2052 = vmatprep.subr.mxu0 0.0
    %2053 = vmatpush1.msra.mxu0 0.0
    %2054 = vmatprep.subr.mxu0 0.0
    %2055 = vmatpush1.msra.mxu0 %v211
    %2056 = vmatprep.subr.mxu0 0.0
    %2057 = vmatpush1.msra.mxu0 %v210
    %2058 = vmatprep.subr.mxu0 0.0
    %2059 = vmatpush1.msra.mxu0 %v209
    %2060 = vmatprep.subr.mxu0 0.0
    %2061 = vmatpush1.msra.mxu0 %v208
    %2062 = vmatprep.subr.mxu0 0.0
    %2063 = vmatpush2.msra.mxu0 0.0
    %2064 = vmatprep.subr.mxu0 0.0
    %2065 = vmatpush2.msra.mxu0 0.0
    %2066 = vmatprep.subr.mxu0 0.0
    %2067 = vmatpush2.msra.mxu0 0.0
    %2068 = vmatprep.subr.mxu0 0.0
    %2069 = vmatpush2.msra.mxu0 0.0
    %2070 = vmatprep.subr.mxu0 0.0
    %2071 = vmatpush2.msra.mxu0 0.0
    %2072 = vmatprep.subr.mxu0 0.0
    %2073 = vmatpush2.msra.mxu0 0.0
    %2074 = vmatprep.subr.mxu0 0.0
    %2075 = vmatpush2.msra.mxu0 0.0
    %2076 = vmatprep.subr.mxu0 0.0
    %2077 = vmatpush2.msra.mxu0 0.0
    %2078 = vmatprep.subr.mxu0 0.0
    %2079 = vmatpush2.msra.mxu0 0.0
    %2080 = vmatprep.subr.mxu0 0.0
    %2081 = vmatpush2.msra.mxu0 0.0
    %2082 = vmatprep.subr.mxu0 0.0
    %2083 = vmatpush2.msra.mxu0 0.0
    %2084 = vmatprep.subr.mxu0 0.0
    %2085 = vmatpush2.msra.mxu0 0.0
    %2086 = vmatprep.subr.mxu0 0.0
    %2087 = vmatpush2.msra.mxu0 0.0
    %2088 = vmatprep.subr.mxu0 0.0
    %2089 = vmatpush2.msra.mxu0 0.0
    %2090 = vmatprep.subr.mxu0 0.0
    %2091 = vmatpush2.msra.mxu0 0.0
    %2092 = vmatprep.subr.mxu0 0.0
    %2093 = vmatpush2.msra.mxu0 0.0
    %2094 = vmatprep.mubr.f32.mxu0 0.0
    %2095 = vmatmul.mubr.f32.gmra.mxu0 %v2028
    %v2096 = vpop.f32.mrf.mxu0
    %v2097 = vadd.f32 0.0, %v2096
    %v2098 = vpop.f32.mrf.mxu0
    %2099 = vdwg.mxu0
    %v2100 = vadd.f32 %v1998, %v2097
    %v2101 = vxor.u32 %v2100, 2147483648
    %v2102 = vmul.f32 %v2101, 1.442695
    %v2103 = vpow.pop %v2102
    %v2104 = vadd.f32 %v2103, 1.0
    %v2105 = vrcp.pop %v2104
    %v2106 = vmul.f32 1.0, %v2105
    %v2107 = vtanh.pop %v2100
    %v2108 = vmul.f32 %v2106, %v1846
    %2110 = vrot.lane.b32.xlu0 %v2107, 64
    %v2111 = vpop.permute.xlu0 %2110
    %v2113 = vmul.f32 %v2106, %v2111
    %2115 = vrot.lane.b32.xlu0 %v2113, 32
    %v2116 = vpop.permute.xlu0 %2115
    %v2118 = vadd.f32 %v2108, %v2116
    %v2119 = vtanh.pop %v2118
    %2121 = vrot.lane.b32.xlu0 %v2119, 64
    %v2122 = vpop.permute.xlu0 %2121
    %v2124 = vmul.f32 %v2106, %v2122
    %s2125 = scalar_lea.vmem [#allocation2], 56
    %v2126 = vld [vmem:[%s2125] sm:$0xff]
    %2127 = vmatprep.subr.mxu0 0.0
    %2128 = vmatpush1.msra.mxu0 0.0
    %2129 = vmatprep.subr.mxu0 0.0
    %2130 = vmatpush1.msra.mxu0 0.0
    %2131 = vmatprep.subr.mxu0 0.0
    %2132 = vmatpush1.msra.mxu0 0.0
    %2133 = vmatprep.subr.mxu0 0.0
    %2134 = vmatpush1.msra.mxu0 0.0
    %2135 = vmatprep.subr.mxu0 0.0
    %2136 = vmatpush1.msra.mxu0 0.0
    %2137 = vmatprep.subr.mxu0 0.0
    %2138 = vmatpush1.msra.mxu0 0.0
    %2139 = vmatprep.subr.mxu0 0.0
    %2140 = vmatpush1.msra.mxu0 0.0
    %2141 = vmatprep.subr.mxu0 0.0
    %2142 = vmatpush1.msra.mxu0 0.0
    %2143 = vmatprep.subr.mxu0 0.0
    %2144 = vmatpush1.msra.mxu0 0.0
    %2145 = vmatprep.subr.mxu0 0.0
    %2146 = vmatpush1.msra.mxu0 0.0
    %2147 = vmatprep.subr.mxu0 0.0
    %2148 = vmatpush1.msra.mxu0 0.0
    %2149 = vmatprep.subr.mxu0 0.0
    %2150 = vmatpush1.msra.mxu0 0.0
    %2151 = vmatprep.subr.mxu0 0.0
    %2152 = vmatpush1.msra.mxu0 %v207
    %2153 = vmatprep.subr.mxu0 0.0
    %2154 = vmatpush1.msra.mxu0 %v206
    %2155 = vmatprep.subr.mxu0 0.0
    %2156 = vmatpush1.msra.mxu0 %v205
    %2157 = vmatprep.subr.mxu0 0.0
    %2158 = vmatpush1.msra.mxu0 %v204
    %2159 = vmatprep.subr.mxu0 0.0
    %2160 = vmatpush2.msra.mxu0 0.0
    %2161 = vmatprep.subr.mxu0 0.0
    %2162 = vmatpush2.msra.mxu0 0.0
    %2163 = vmatprep.subr.mxu0 0.0
    %2164 = vmatpush2.msra.mxu0 0.0
    %2165 = vmatprep.subr.mxu0 0.0
    %2166 = vmatpush2.msra.mxu0 0.0
    %2167 = vmatprep.subr.mxu0 0.0
    %2168 = vmatpush2.msra.mxu0 0.0
    %2169 = vmatprep.subr.mxu0 0.0
    %2170 = vmatpush2.msra.mxu0 0.0
    %2171 = vmatprep.subr.mxu0 0.0
    %2172 = vmatpush2.msra.mxu0 0.0
    %2173 = vmatprep.subr.mxu0 0.0
    %2174 = vmatpush2.msra.mxu0 0.0
    %2175 = vmatprep.subr.mxu0 0.0
    %2176 = vmatpush2.msra.mxu0 0.0
    %2177 = vmatprep.subr.mxu0 0.0
    %2178 = vmatpush2.msra.mxu0 0.0
    %2179 = vmatprep.subr.mxu0 0.0
    %2180 = vmatpush2.msra.mxu0 0.0
    %2181 = vmatprep.subr.mxu0 0.0
    %2182 = vmatpush2.msra.mxu0 0.0
    %2183 = vmatprep.subr.mxu0 0.0
    %2184 = vmatpush2.msra.mxu0 0.0
    %2185 = vmatprep.subr.mxu0 0.0
    %2186 = vmatpush2.msra.mxu0 0.0
    %2187 = vmatprep.subr.mxu0 0.0
    %2188 = vmatpush2.msra.mxu0 0.0
    %2189 = vmatprep.subr.mxu0 0.0
    %2190 = vmatpush2.msra.mxu0 0.0
    %2191 = vmatprep.mubr.f32.mxu0 0.0
    %2192 = vmatmul.mubr.f32.gmra.mxu0 %v2028
    %v2193 = vpop.f32.mrf.mxu0
    %v2194 = vadd.f32 0.0, %v2193
    %v2195 = vpop.f32.mrf.mxu0
    %2196 = vdwg.mxu0
    %v2197 = vadd.f32 %v2126, %v2194
    %2199 = vrot.lane.b32.xlu0 %v2124, 32
    %v2200 = vpop.permute.xlu0 %2199
    %v2201 = vsel %vm224, %v2200, 0
    %2203 = vmatprep.subr.mxu0 0.0
    %2204 = vmatpush1.msra.mxu0 0.0
    %2205 = vmatprep.subr.mxu0 0.0
    %2206 = vmatpush1.msra.mxu0 0.0
    %2207 = vmatprep.subr.mxu0 0.0
    %2208 = vmatpush1.msra.mxu0 0.0
    %2209 = vmatprep.subr.mxu0 0.0
    %2210 = vmatpush1.msra.mxu0 0.0
    %2211 = vmatprep.subr.mxu0 0.0
    %2212 = vmatpush1.msra.mxu0 0.0
    %2213 = vmatprep.subr.mxu0 0.0
    %2214 = vmatpush1.msra.mxu0 0.0
    %2215 = vmatprep.subr.mxu0 0.0
    %2216 = vmatpush1.msra.mxu0 0.0
    %2217 = vmatprep.subr.mxu0 0.0
    %2218 = vmatpush1.msra.mxu0 0.0
    %2219 = vmatprep.subr.mxu0 0.0
    %2220 = vmatpush1.msra.mxu0 0.0
    %2221 = vmatprep.subr.mxu0 0.0
    %2222 = vmatpush1.msra.mxu0 0.0
    %2223 = vmatprep.subr.mxu0 0.0
    %2224 = vmatpush1.msra.mxu0 0.0
    %2225 = vmatprep.subr.mxu0 0.0
    %2226 = vmatpush1.msra.mxu0 0.0
    %2227 = vmatprep.subr.mxu0 0.0
    %2228 = vmatpush1.msra.mxu0 %v215
    %2229 = vmatprep.subr.mxu0 0.0
    %2230 = vmatpush1.msra.mxu0 %v214
    %2231 = vmatprep.subr.mxu0 0.0
    %2232 = vmatpush1.msra.mxu0 %v213
    %2233 = vmatprep.subr.mxu0 0.0
    %2234 = vmatpush1.msra.mxu0 %v212
    %2235 = vmatprep.subr.mxu0 0.0
    %2236 = vmatpush2.msra.mxu0 0.0
    %2237 = vmatprep.subr.mxu0 0.0
    %2238 = vmatpush2.msra.mxu0 0.0
    %2239 = vmatprep.subr.mxu0 0.0
    %2240 = vmatpush2.msra.mxu0 0.0
    %2241 = vmatprep.subr.mxu0 0.0
    %2242 = vmatpush2.msra.mxu0 0.0
    %2243 = vmatprep.subr.mxu0 0.0
    %2244 = vmatpush2.msra.mxu0 0.0
    %2245 = vmatprep.subr.mxu0 0.0
    %2246 = vmatpush2.msra.mxu0 0.0
    %2247 = vmatprep.subr.mxu0 0.0
    %2248 = vmatpush2.msra.mxu0 0.0
    %2249 = vmatprep.subr.mxu0 0.0
    %2250 = vmatpush2.msra.mxu0 0.0
    %2251 = vmatprep.subr.mxu0 0.0
    %2252 = vmatpush2.msra.mxu0 0.0
    %2253 = vmatprep.subr.mxu0 0.0
    %2254 = vmatpush2.msra.mxu0 0.0
    %2255 = vmatprep.subr.mxu0 0.0
    %2256 = vmatpush2.msra.mxu0 0.0
    %2257 = vmatprep.subr.mxu0 0.0
    %2258 = vmatpush2.msra.mxu0 0.0
    %2259 = vmatprep.subr.mxu0 0.0
    %2260 = vmatpush2.msra.mxu0 0.0
    %2261 = vmatprep.subr.mxu0 0.0
    %2262 = vmatpush2.msra.mxu0 0.0
    %2263 = vmatprep.subr.mxu0 0.0
    %2264 = vmatpush2.msra.mxu0 0.0
    %2265 = vmatprep.subr.mxu0 0.0
    %2266 = vmatpush2.msra.mxu0 0.0
    %2267 = vmatprep.mubr.f32.mxu0 0.0
    %2268 = vmatmul.mubr.f32.gmra.mxu0 %v2201
    %v2269 = vpop.f32.mrf.mxu0
    %v2270 = vadd.f32 %v221, %v2269
    %v2271 = vpop.f32.mrf.mxu0
    %2272 = vdwg.mxu0
    %v2273 = vxor.u32 %v2197, 2147483648
    %v2274 = vmul.f32 %v2273, 1.442695
    %v2275 = vpow.pop %v2274
    %v2276 = vadd.f32 %v2275, 1.0
    %v2277 = vrcp.pop %v2276
    %v2278 = vmul.f32 1.0, %v2277
    %v2279 = vtanh.pop %v2197
    %v2280 = vmul.f32 %v2278, %v2018
    %2282 = vrot.lane.b32.xlu0 %v2279, 64
    %v2283 = vpop.permute.xlu0 %2282
    %v2285 = vmul.f32 %v2278, %v2283
    %2287 = vrot.lane.b32.xlu0 %v2285, 32
    %v2288 = vpop.permute.xlu0 %2287
    %v2290 = vadd.f32 %v2280, %v2288
    %v2291 = vtanh.pop %v2290
    %2293 = vrot.lane.b32.xlu0 %v2291, 64
    %v2294 = vpop.permute.xlu0 %2293
    %v2296 = vmul.f32 %v2278, %v2294
    %2298 = vrot.lane.b32.xlu0 %v2296, 32
    %v2299 = vpop.permute.xlu0 %2298
    %v2300 = vsel %vm224, %v2299, 0
    %2302 = vmatprep.subr.mxu0 0.0
    %2303 = vmatpush1.msra.mxu0 0.0
    %2304 = vmatprep.subr.mxu0 0.0
    %2305 = vmatpush1.msra.mxu0 0.0
    %2306 = vmatprep.subr.mxu0 0.0
    %2307 = vmatpush1.msra.mxu0 0.0
    %2308 = vmatprep.subr.mxu0 0.0
    %2309 = vmatpush1.msra.mxu0 0.0
    %2310 = vmatprep.subr.mxu0 0.0
    %2311 = vmatpush1.msra.mxu0 0.0
    %2312 = vmatprep.subr.mxu0 0.0
    %2313 = vmatpush1.msra.mxu0 0.0
    %2314 = vmatprep.subr.mxu0 0.0
    %2315 = vmatpush1.msra.mxu0 0.0
    %2316 = vmatprep.subr.mxu0 0.0
    %2317 = vmatpush1.msra.mxu0 0.0
    %2318 = vmatprep.subr.mxu0 0.0
    %2319 = vmatpush1.msra.mxu0 0.0
    %2320 = vmatprep.subr.mxu0 0.0
    %2321 = vmatpush1.msra.mxu0 0.0
    %2322 = vmatprep.subr.mxu0 0.0
    %2323 = vmatpush1.msra.mxu0 0.0
    %2324 = vmatprep.subr.mxu0 0.0
    %2325 = vmatpush1.msra.mxu0 0.0
    %2326 = vmatprep.subr.mxu0 0.0
    %2327 = vmatpush1.msra.mxu0 %v211
    %2328 = vmatprep.subr.mxu0 0.0
    %2329 = vmatpush1.msra.mxu0 %v210
    %2330 = vmatprep.subr.mxu0 0.0
    %2331 = vmatpush1.msra.mxu0 %v209
    %2332 = vmatprep.subr.mxu0 0.0
    %2333 = vmatpush1.msra.mxu0 %v208
    %2334 = vmatprep.subr.mxu0 0.0
    %2335 = vmatpush2.msra.mxu0 0.0
    %2336 = vmatprep.subr.mxu0 0.0
    %2337 = vmatpush2.msra.mxu0 0.0
    %2338 = vmatprep.subr.mxu0 0.0
    %2339 = vmatpush2.msra.mxu0 0.0
    %2340 = vmatprep.subr.mxu0 0.0
    %2341 = vmatpush2.msra.mxu0 0.0
    %2342 = vmatprep.subr.mxu0 0.0
    %2343 = vmatpush2.msra.mxu0 0.0
    %2344 = vmatprep.subr.mxu0 0.0
    %2345 = vmatpush2.msra.mxu0 0.0
    %2346 = vmatprep.subr.mxu0 0.0
    %2347 = vmatpush2.msra.mxu0 0.0
    %2348 = vmatprep.subr.mxu0 0.0
    %2349 = vmatpush2.msra.mxu0 0.0
    %2350 = vmatprep.subr.mxu0 0.0
    %2351 = vmatpush2.msra.mxu0 0.0
    %2352 = vmatprep.subr.mxu0 0.0
    %2353 = vmatpush2.msra.mxu0 0.0
    %2354 = vmatprep.subr.mxu0 0.0
    %2355 = vmatpush2.msra.mxu0 0.0
    %2356 = vmatprep.subr.mxu0 0.0
    %2357 = vmatpush2.msra.mxu0 0.0
    %2358 = vmatprep.subr.mxu0 0.0
    %2359 = vmatpush2.msra.mxu0 0.0
    %2360 = vmatprep.subr.mxu0 0.0
    %2361 = vmatpush2.msra.mxu0 0.0
    %2362 = vmatprep.subr.mxu0 0.0
    %2363 = vmatpush2.msra.mxu0 0.0
    %2364 = vmatprep.subr.mxu0 0.0
    %2365 = vmatpush2.msra.mxu0 0.0
    %2366 = vmatprep.mubr.f32.mxu0 0.0
    %2367 = vmatmul.mubr.f32.gmra.mxu0 %v2300
    %v2368 = vpop.f32.mrf.mxu0
    %v2369 = vadd.f32 0.0, %v2368
    %v2370 = vpop.f32.mrf.mxu0
    %2371 = vdwg.mxu0
    %v2372 = vadd.f32 %v2270, %v2369
    %v2373 = vxor.u32 %v2372, 2147483648
    %v2374 = vmul.f32 %v2373, 1.442695
    %v2375 = vpow.pop %v2374
    %v2376 = vadd.f32 %v2375, 1.0
    %v2377 = vrcp.pop %v2376
    %v2378 = vmul.f32 1.0, %v2377
    %v2379 = vtanh.pop %v2372
    %v2380 = vmul.f32 %v2378, %v2118
    %2382 = vrot.lane.b32.xlu0 %v2379, 64
    %v2383 = vpop.permute.xlu0 %2382
    %v2385 = vmul.f32 %v2378, %v2383
    %2387 = vrot.lane.b32.xlu0 %v2385, 32
    %v2388 = vpop.permute.xlu0 %2387
    %v2390 = vadd.f32 %v2380, %v2388
    %v2391 = vtanh.pop %v2390
    %2393 = vrot.lane.b32.xlu0 %v2391, 64
    %v2394 = vpop.permute.xlu0 %2393
    %v2396 = vmul.f32 %v2378, %v2394
    %v2397 = vld [vmem:[%s7] sm:$0xff]
    %v2398 = vld [vmem:[%s7 + $0x8] sm:$0xff]
    %v2399 = vld [vmem:[%s7 + $0x10] sm:$0xff]
    %v2400 = vld [vmem:[%s7 + $0x18] sm:$0xff]
    %v2401 = vld [vmem:[#allocation3] sm:$0x1]
    %v2403 = vlaneseq
    %v2404 = vshrl.u32 %v2403, 7
    %v2405 = vsub.s32 0, %v2404
    %v2406 = vrot.slane %v2401, %v2405
    %2409 = vrot.lane.b32.xlu0 %v2396, 32
    %v2410 = vpop.permute.xlu0 %2409
    %v2411 = vsel %vm224, %v2410, 0
    %2413 = vmatprep.subr.mxu0 0.0
    %2414 = vmatpush1.msra.mxu0 0.0
    %2415 = vmatprep.subr.mxu0 0.0
    %2416 = vmatpush1.msra.mxu0 0.0
    %2417 = vmatprep.subr.mxu0 0.0
    %2418 = vmatpush1.msra.mxu0 0.0
    %2419 = vmatprep.subr.mxu0 0.0
    %2420 = vmatpush1.msra.mxu0 0.0
    %2421 = vmatprep.subr.mxu0 0.0
    %2422 = vmatpush1.msra.mxu0 0.0
    %2423 = vmatprep.subr.mxu0 0.0
    %2424 = vmatpush1.msra.mxu0 0.0
    %2425 = vmatprep.subr.mxu0 0.0
    %2426 = vmatpush1.msra.mxu0 0.0
    %2427 = vmatprep.subr.mxu0 0.0
    %2428 = vmatpush1.msra.mxu0 0.0
    %2429 = vmatprep.subr.mxu0 0.0
    %2430 = vmatpush1.msra.mxu0 0.0
    %2431 = vmatprep.subr.mxu0 0.0
    %2432 = vmatpush1.msra.mxu0 0.0
    %2433 = vmatprep.subr.mxu0 0.0
    %2434 = vmatpush1.msra.mxu0 0.0
    %2435 = vmatprep.subr.mxu0 0.0
    %2436 = vmatpush1.msra.mxu0 0.0
    %2437 = vmatprep.subr.mxu0 0.0
    %2438 = vmatpush1.msra.mxu0 %v2400
    %2439 = vmatprep.subr.mxu0 0.0
    %2440 = vmatpush1.msra.mxu0 %v2399
    %2441 = vmatprep.subr.mxu0 0.0
    %2442 = vmatpush1.msra.mxu0 %v2398
    %2443 = vmatprep.subr.mxu0 0.0
    %2444 = vmatpush1.msra.mxu0 %v2397
    %2445 = vmatprep.subr.mxu0 0.0
    %2446 = vmatpush2.msra.mxu0 0.0
    %2447 = vmatprep.subr.mxu0 0.0
    %2448 = vmatpush2.msra.mxu0 0.0
    %2449 = vmatprep.subr.mxu0 0.0
    %2450 = vmatpush2.msra.mxu0 0.0
    %2451 = vmatprep.subr.mxu0 0.0
    %2452 = vmatpush2.msra.mxu0 0.0
    %2453 = vmatprep.subr.mxu0 0.0
    %2454 = vmatpush2.msra.mxu0 0.0
    %2455 = vmatprep.subr.mxu0 0.0
    %2456 = vmatpush2.msra.mxu0 0.0
    %2457 = vmatprep.subr.mxu0 0.0
    %2458 = vmatpush2.msra.mxu0 0.0
    %2459 = vmatprep.subr.mxu0 0.0
    %2460 = vmatpush2.msra.mxu0 0.0
    %2461 = vmatprep.subr.mxu0 0.0
    %2462 = vmatpush2.msra.mxu0 0.0
    %2463 = vmatprep.subr.mxu0 0.0
    %2464 = vmatpush2.msra.mxu0 0.0
    %2465 = vmatprep.subr.mxu0 0.0
    %2466 = vmatpush2.msra.mxu0 0.0
    %2467 = vmatprep.subr.mxu0 0.0
    %2468 = vmatpush2.msra.mxu0 0.0
    %2469 = vmatprep.subr.mxu0 0.0
    %2470 = vmatpush2.msra.mxu0 0.0
    %2471 = vmatprep.subr.mxu0 0.0
    %2472 = vmatpush2.msra.mxu0 0.0
    %2473 = vmatprep.subr.mxu0 0.0
    %2474 = vmatpush2.msra.mxu0 0.0
    %2475 = vmatprep.subr.mxu0 0.0
    %2476 = vmatpush2.msra.mxu0 0.0
    %2477 = vmatprep.mubr.f32.mxu0 0.0
    %2478 = vmatmul.mubr.f32.gmra.mxu0 %v2411
    %v2479 = vpop.f32.mrf.mxu0
    %v2480 = vadd.f32 %v2406, %v2479
    %v2481 = vpop.f32.mrf.mxu0
    %2482 = vdwg.mxu0
    %vm2483 = vcmask 7168
    %2484 = vst.msk [vmem:[%s9] sm:$0xff] %vm2483, %v2480
    // Predicated region
    $region42: #{tpu_custom_call.1} parent=1 // pred_check
      _
    $region43: #{tpu_custom_call.1} parent=1 // pred_check_branch
      %2486 = sbr.rel (0) target = $region45
    $region44: #{tpu_custom_call.1} parent=1 // pred_region
      _
    $region45: #{tpu_custom_call.1} parent=1 // pred_fallthru
      _
    // Predicated region
    $region46: #{tpu_custom_call.1} parent=1 // pred_check
      _
    $region47: #{tpu_custom_call.1} parent=1 // pred_check_branch
      %2488 = sbr.rel (0) target = $region49
    $region48: #{tpu_custom_call.1} parent=1 // pred_region
      _
    $region49: #{tpu_custom_call.1} parent=1 // pred_fallthru
      _
    %2489 = vsyncpa [#allocation5], 1

</llo_original>
